<compile_context>
chip_gen: v5e
topology: v5e:2x2
jax: 0.10.0
libtpu: 0.0.40
codegen_flags: <defaults>
</compile_context>

<pallas_src>
import functools

import jax
import jax.numpy as jnp
from jax import lax
from jax.experimental import pallas as pl
from jax.experimental.pallas import tpu as pltpu

BETA = 0.1
TAU = 0.5
EPS = 1e-6
_NEG = -1e30          # finite "minus infinity" for masked classes (avoids 0*inf NaNs)

_TILE = 512           # row / contraction tile of the N^2 propagation matmul
_LANE = 128           # class-axis padding target (lane width)


def _round_up(v, m):
    return ((v + m - 1) // m) * m


@functools.lru_cache(maxsize=None)
def _vmem_budget_bytes():
    """Generation-aware scoped-VMEM budget (~75% of per-core VMEM, clamped)."""
    cap = 64 * 1024 * 1024                    # conservative fallback (v7x per-TC VMEM)
    try:
        cap = int(pltpu.get_tpu_info().vmem_capacity_bytes)
    except Exception:
        pass
    budget = (cap * 3) // 4
    return max(32 * 1024 * 1024, min(budget, 96 * 1024 * 1024))


# ---------------------------------------------------------------------------
# Kernel 1: synthetic model.get_embed(x, edge_index)
#   h  = row_normalize(A_bin) @ x      (K-tiled, f32 accumulator, in-kernel degrees)
#   z1 = h @ w1   (bf16 output),   sum(z^2) per row with z = h @ wz
# ---------------------------------------------------------------------------
def _make_embed_kernel(x_resident, tk):
    def kernel(a_ref, x_ref, w1_ref, wz_ref, z1_ref, zsq_ref, acc_ref, deg_ref):
        k = pl.program_id(1)

        @pl.when(k == 0)
        def _():
            acc_ref[...] = jnp.zeros_like(acc_ref)
            deg_ref[...] = jnp.zeros_like(deg_ref)

        a = a_ref[...].astype(jnp.bfloat16)            # binary 0/1 adjacency tile
        # Row-degree accumulation (f32 accumulate -> exact integer counts).
        deg_ref[...] += jnp.sum(a, axis=-1, keepdims=True, dtype=jnp.float32)

        if x_resident:
            start = pl.multiple_of(k * tk, tk)
            xk = x_ref[pl.ds(start, tk), :]            # slice rows of the resident x
        else:
            xk = x_ref[...]                            # streamed (tk, F) tile
        acc_ref[...] += jnp.dot(a, xk, preferred_element_type=jnp.float32)

        @pl.when(k == pl.num_programs(1) - 1)
        def _():
            deg = deg_ref[...]
            # Padded rows have degree 0 -> scale 0 -> h, z1, z all exactly zero.
            rdeg = jnp.where(deg > 0.0, 1.0 / jnp.maximum(deg, 1.0), 0.0)
            h = (acc_ref[...] * rdeg).astype(jnp.bfloat16)     # row-normalized propagation
            z1 = jnp.dot(h, w1_ref[...], preferred_element_type=jnp.float32)
            zz = jnp.dot(h, wz_ref[...], preferred_element_type=jnp.float32)
            z1_ref[...] = z1.astype(jnp.bfloat16)
            zsq_ref[...] = jnp.sum(zz * zz, axis=-1, keepdims=True)

    return kernel


def get_embed(x_bf16, adj_i8, w1_bf16, wz_bf16):
    n_pad, f = x_bf16.shape
    d = w1_bf16.shape[1]
    tm = tk = _TILE
    assert n_pad % tm == 0 and n_pad % tk == 0
    grid = (n_pad // tm, n_pad // tk)

    budget = _vmem_budget_bytes()
    # Keep x fully VMEM-resident when small enough (avoids re-streaming x once per
    # row-tile of A); falls back to streaming on v7x-sized VMEM / large graphs.
    x_resident = (2 * n_pad * f * 2) <= (budget // 4)
    if x_resident:
        x_spec = pl.BlockSpec((n_pad, f), lambda i, k: (0, 0))
    else:
        x_spec = pl.BlockSpec((tk, f), lambda i, k: (k, 0))

    cost = pl.CostEstimate(
        flops=2 * n_pad * n_pad * f + 4 * n_pad * f * d,
        transcendentals=0,
        bytes_accessed=n_pad * n_pad                     # int8 adjacency
        + n_pad * f * 2 + 2 * f * d * 2                  # x + weights (bf16)
        + n_pad * d * 2 + n_pad * 4,                     # z1 (bf16) + per-row sum(z^2)
    )
    return pl.pallas_call(
        _make_embed_kernel(x_resident, tk),
        out_shape=(
            jax.ShapeDtypeStruct((n_pad, d), jnp.bfloat16),  # z1
            jax.ShapeDtypeStruct((n_pad, 1), jnp.float32),   # per-row sum(z^2)
        ),
        grid_spec=pltpu.PrefetchScalarGridSpec(
            num_scalar_prefetch=0,
            grid=grid,
            in_specs=[
                pl.BlockSpec((tm, tk), lambda i, k: (i, k)),   # adjacency tile (int8)
                x_spec,
                pl.BlockSpec((f, d), lambda i, k: (0, 0)),     # w1, resident
                pl.BlockSpec((f, d), lambda i, k: (0, 0)),     # wz, resident
            ],
            out_specs=(
                pl.BlockSpec((tm, d), lambda i, k: (i, 0)),
                pl.BlockSpec((tm, 1), lambda i, k: (i, 0)),
            ),
            scratch_shapes=[
                pltpu.VMEM((tm, f), jnp.float32),   # A @ x accumulator
                pltpu.VMEM((tm, 1), jnp.float32),   # row-degree accumulator
            ],
        ),
        compiler_params=pltpu.CompilerParams(
            dimension_semantics=("parallel", "arbitrary"),   # rows split across TCs
            vmem_limit_bytes=budget,
        ),
        cost_estimate=cost,
    )(adj_i8, x_bf16, w1_bf16, wz_bf16)


# ---------------------------------------------------------------------------
# Kernel 2: Adaptor.forward_and_adapt forward math + classifier prediction.
# [N, C_pad] orientation (softmax/entropy reductions along lanes), classes padded to a
# multiple of 128 and masked so sim/logits/pred are lane-dense.
# ---------------------------------------------------------------------------
def _make_adaptor_kernel(n, d, c, c_pad):
    inv_tau = 1.0 / TAU

    def kernel(z1_ref, mw_ref, prop_ref, bc_ref, zsq_ref,
               pred_ref, prop_out_ref, loss_ref):
        z1 = z1_ref[...]                       # [N, D] bf16
        mw = mw_ref[...]                       # [2*C_pad, D] bf16 (rows: [mu_s ; Wc])
        prop = prop_ref[...]                   # [1, C_pad] f32 (zero-padded classes)

        # One wide MXU pass; slice at the lane-aligned C_pad boundary.
        big = lax.dot_general(z1, mw, (((1,), (1,)), ((), ())),
                              preferred_element_type=jnp.float32)   # [N, 2*C_pad]
        sim = big[:, :c_pad] * inv_tau          # sim_mat^T / tau
        pre = big[:, c_pad:]                    # z1 @ Wc^T

        col = lax.broadcasted_iota(jnp.int32, (1, c_pad), 1)
        valid = col < c                         # mask for real classes

        # --- old logits (detached in torch; same forward value), class softmax,
        #     prop EMA update (exact division: this feeds persistent state) ---
        old_logits = sim + jnp.log(prop + EPS)
        old_m = jnp.where(valid, old_logits, _NEG)
        m0 = jnp.max(old_m, axis=-1, keepdims=True)
        e0 = jnp.exp(old_m - m0)
        p0 = e0 / jnp.sum(e0, axis=-1, keepdims=True)       # padded classes -> exactly 0
        prop_est = jnp.mean(p0, axis=0, keepdims=True)       # mean over samples -> [1, C_pad]
        prop_new = (1.0 - BETA) * prop + BETA * prop_est
        prop_out_ref[...] = prop_new

        # --- new logits with updated prior ---
        new_logits = sim + jnp.log(prop_new + EPS)
        new_m = jnp.where(valid, new_logits, _NEG)

        # term1: mean over samples of entropy(softmax over classes)
        m1 = jnp.max(new_m, axis=-1, keepdims=True)
        e1 = jnp.exp(new_m - m1)
        s1 = jnp.sum(e1, axis=-1, keepdims=True)
        p1 = e1 / s1
        logp1 = (new_m - m1) - jnp.log(s1)
        term1 = jnp.mean(-jnp.sum(p1 * logp1, axis=-1, keepdims=True))

        # term2: entropy of softmax over samples of the per-sample class-mean logits
        mean_logits = jnp.sum(jnp.where(valid, new_logits, 0.0),
                              axis=-1, keepdims=True) * (1.0 / c)   # mean over REAL classes
        m2 = jnp.max(mean_logits, axis=0, keepdims=True)
        e2 = jnp.exp(mean_logits - m2)
        s2 = jnp.sum(e2, axis=0, keepdims=True)
        p2 = e2 / s2
        logp2 = (mean_logits - m2) - jnp.log(s2)
        term2 = -jnp.sum(p2 * logp2)

        # diff_loss = MSE(z, 0) = sum(z^2) / (N*D); sum(z^2) was reduced in kernel 1.
        diff_loss = zsq_ref[...] * (1.0 / (n * d))            # (1, 1)
        loss_ref[...] = jnp.reshape(term1 - term2, (1, 1)) + diff_loss

        # pred = classifier(z1) = z1 @ Wc^T + bc  (padded class columns stay 0)
        pred_ref[...] = pre + bc_ref[...]

    return kernel


def adaptor_step(z1_bf16, mw_bf16, prop_pad, bc_pad, zsq_sum, *, n, d, c):
    c_pad = mw_bf16.shape[0] // 2
    vmem = pl.BlockSpec(memory_space=pltpu.MemorySpace.VMEM)
    cost = pl.CostEstimate(
        flops=4 * n * d * c_pad + 32 * n * c_pad,
        transcendentals=3 * n * c_pad + 2 * n,
        bytes_accessed=n * d * 2 + 2 * c_pad * d * 2 + 2 * n * c_pad * 4,
    )
    # NOTE: whole-batch resident because prop_new depends on a full-batch mean; fine for
    # N up to a few tens of thousands. TODO(synk): for larger N (and to use both v7x
    # TensorCores) split into an N-tiled two-pass grid (pass 1: sim/prop_est/pred,
    # pass 2: entropy terms with prop_new).
    return pl.pallas_call(
        _make_adaptor_kernel(n, d, c, c_pad),
        out_shape=(
            jax.ShapeDtypeStruct((n, c_pad), jnp.float32),   # pred (padded classes)
            jax.ShapeDtypeStruct((1, c_pad), jnp.float32),   # updated prop (stateful)
            jax.ShapeDtypeStruct((1, 1), jnp.float32),       # loss value
        ),
        in_specs=[vmem] * 5,
        out_specs=(vmem, vmem, vmem),
        input_output_aliases={2: 1},                          # prop buffer reused in place
        compiler_params=pltpu.CompilerParams(vmem_limit_bytes=_vmem_budget_bytes()),
        cost_estimate=cost,
    )(z1_bf16, mw_bf16, prop_pad, bc_pad, zsq_sum)


# ---------------------------------------------------------------------------
# Wrapper = Adaptor.forward with steps=1, episodic=False
# ---------------------------------------------------------------------------
@jax.jit
def adaptor_forward(x, edge_index, params, prop):
    n, f = x.shape
    d = params["w1"].shape[1]
    c = params["mu_s"].shape[0]
    n_pad = _round_up(n, _TILE)
    c_pad = _round_up(c, _LANE)

    src, dst = edge_index[0], edge_index[1]

    # Glue: binary adjacency with self-loops, scattered straight into int8 at the padded
    # size (single N^2 byte pass). Row normalization happens inside the embed kernel.
    # Diagonal is *set* (not added) so explicit self-loops are not double-counted.
    # TODO(synk): replace the dense N^2 adjacency with an edge-list gather/segment-sum
    # kernel (scalar-prefetched edge_index) for sparse graphs.
    adj = jnp.zeros((n_pad, n_pad), jnp.int8).at[src, dst].set(jnp.int8(1))
    diag = jnp.arange(n)
    adj = adj.at[diag, diag].set(jnp.int8(1))

    x_pad = jnp.pad(x.astype(jnp.bfloat16), ((0, n_pad - n), (0, 0)))

    # z2 / w2 are produced by model.get_embed in torch but never consumed by
    # forward_and_adapt, so they are dropped; z is only needed as sum(z^2).
    z1_pad, zsq_rows = get_embed(
        x_pad, adj,
        params["w1"].astype(jnp.bfloat16),
        params["wz"].astype(jnp.bfloat16),
    )
    z1 = z1_pad[:n, :]                                   # padded rows are exact zeros
    zsq_sum = jnp.sum(zsq_rows, dtype=jnp.float32).reshape(1, 1)

    # Class axis padded to a lane-dense multiple of 128; mu_s and Wc fused into one
    # [2*C_pad, D] operand so kernel 2 issues a single wide MXU pass.
    mu_p = jnp.pad(params["mu_s"].astype(jnp.bfloat16), ((0, c_pad - c), (0, 0)))
    wc_p = jnp.pad(params["wc"].astype(jnp.bfloat16), ((0, c_pad - c), (0, 0)))
    mw = jnp.concatenate([mu_p, wc_p], axis=0)
    bc_p = jnp.pad(params["bc"].astype(jnp.float32), ((0, 0), (0, c_pad - c)))
    prop_p = jnp.pad(jnp.reshape(prop, (1, c)).astype(jnp.float32),
                     ((0, 0), (0, c_pad - c)))

    pred_p, prop_new_p, loss = adaptor_step(z1, mw, prop_p, bc_p, zsq_sum, n=n, d=d, c=c)

    pred = pred_p[:, :c]
    prop_new = jnp.reshape(prop_new_p[0, :c], (c, 1))
    # TODO(synk): loss.backward() + optimizer.step()/zero_grad() (the actual parameter
    # adaptation) has no forward-only Pallas equivalent; gradients/optimizer are omitted.
    return pred, prop_new, loss


if __name__ == "__main__":
    N, F, D, C, E = 16, 32, 32, 8, 32   # nodes, in-features, embed dim, classes, edges

    key = jax.random.PRNGKey(0)
    k_x, k_e1, k_e2, k_w1, k_w2, k_wz, k_wc, k_bc = jax.random.split(key, 8)

    x = jax.random.normal(k_x, (N, F), dtype=jnp.float32)
    edge_index = jnp.stack(
        [
            jax.random.randint(k_e1, (E,), 0, N, dtype=jnp.int32),
            jax.random.randint(k_e2, (E,), 0, N, dtype=jnp.int32),
        ],
        axis=0,
    )

    # Deterministic synthetic parameters (module.__init__ semantics):
    wc = jax.random.normal(k_wc, (C, D), dtype=jnp.float32) * 0.1   # classifier.weight [C, D]
    params = {
        "w1": jax.random.normal(k_w1, (F, D), dtype=jnp.float32) * 0.1,
        "w2": jax.random.normal(k_w2, (F, D), dtype=jnp.float32) * 0.1,  # unused (z2 dropped)
        "wz": jax.random.normal(k_wz, (F, D), dtype=jnp.float32) * 0.1,
        "wc": wc,
        "bc": (jax.random.normal(k_bc, (1, C), dtype=jnp.float32) * 0.1),
        "mu_s": wc,                                    # mu_s = deepcopy(classifier.weight)
    }
    prop = jnp.full((C, 1), 1.0 / C, dtype=jnp.float32)  # uniform class prior

    pred, prop_new, loss = adaptor_forward(x, edge_index, params, prop)
    jax.block_until_ready((pred, prop_new, loss))

    assert pred.shape == (N, C) and prop_new.shape == (C, 1) and loss.shape == (1, 1)
    assert bool(jnp.all(jnp.isfinite(pred))) and bool(jnp.isfinite(loss[0, 0]))
    assert bool(jnp.all(jnp.isfinite(prop_new)))
    print("KERNEL_OK")
</pallas_src>

<mosaic_0001>
module attributes {stable_mosaic.version = 11 : i64} {
  func.func @kernel(%arg0: i32, %arg1: i32, %arg2: memref<512x512xi8, #tpu.memory_space<vmem>>, %arg3: memref<512x32xbf16, #tpu.memory_space<vmem>>, %arg4: memref<32x32xbf16, #tpu.memory_space<vmem>>, %arg5: memref<32x32xbf16, #tpu.memory_space<vmem>>, %arg6: memref<512x32xbf16, #tpu.memory_space<vmem>>, %arg7: memref<512x1xf32, #tpu.memory_space<vmem>>, %arg8: memref<512x32xf32, #tpu.memory_space<vmem>>, %arg9: memref<512x1xf32, #tpu.memory_space<vmem>>) attributes {dimension_semantics = [#tpu.dimension_semantics<parallel>, #tpu.dimension_semantics<arbitrary>], iteration_bounds = array<i64: 1, 1>, scalar_prefetch = 0 : i64, scratch_operands = 2 : i64, tpu.core_type = #tpu.core_type<tc>, window_params = [{transform_indices = @transform_0, window_bounds = array<i64: 512, 512>}, {pipeline_mode = #tpu.pipeline_mode<synchronous>, transform_indices = @transform_1, window_bounds = array<i64: 512, 32>}, {pipeline_mode = #tpu.pipeline_mode<synchronous>, transform_indices = @transform_2, window_bounds = array<i64: 32, 32>}, {pipeline_mode = #tpu.pipeline_mode<synchronous>, transform_indices = @transform_3, window_bounds = array<i64: 32, 32>}, {transform_indices = @transform_4, window_bounds = array<i64: 512, 32>}, {transform_indices = @transform_5, window_bounds = array<i64: 512, 1>}]} {
    %c0_i32 = arith.constant 0 : i32
    %0 = arith.cmpi eq, %arg1, %c0_i32 : i32
    %1 = arith.extui %0 : i1 to i32
    %c0_i32_0 = arith.constant 0 : i32
    %2 = arith.cmpi ne, %1, %c0_i32_0 : i32
    scf.if %2 {
      %cst_14 = arith.constant 0.000000e+00 : f32
      %22 = vector.broadcast %cst_14 : f32 to vector<512x32xf32>
      %c0_15 = arith.constant 0 : index
      %c0_16 = arith.constant 0 : index
      %23 = vector.load %arg8[%c0_15, %c0_16] : memref<512x32xf32, #tpu.memory_space<vmem>>, vector<512x32xf32>
      tpu.vector_store %arg8[%c0_15, %c0_16], %22 {strides = array<i32>} : memref<512x32xf32, #tpu.memory_space<vmem>>, vector<512x32xf32>,
      %cst_17 = arith.constant 0.000000e+00 : f32
      %24 = vector.broadcast %cst_17 : f32 to vector<512x1xf32>
      %c0_18 = arith.constant 0 : index
      %c0_19 = arith.constant 0 : index
      %25 = vector.load %arg9[%c0_18, %c0_19] : memref<512x1xf32, #tpu.memory_space<vmem>>, vector<512x1xf32>
      tpu.vector_store %arg9[%c0_18, %c0_19], %24 {strides = array<i32>} : memref<512x1xf32, #tpu.memory_space<vmem>>, vector<512x1xf32>,
    } else {
    }
    %c0 = arith.constant 0 : index
    %c0_1 = arith.constant 0 : index
    %3 = vector.load %arg2[%c0, %c0_1] : memref<512x512xi8, #tpu.memory_space<vmem>>, vector<512x512xi8>
    %4 = arith.sitofp %3 : vector<512x512xi8> to vector<512x512xbf16>
    %c0_2 = arith.constant 0 : index
    %c0_3 = arith.constant 0 : index
    %5 = vector.load %arg9[%c0_2, %c0_3] : memref<512x1xf32, #tpu.memory_space<vmem>>, vector<512x1xf32>
    %6 = arith.extf %4 : vector<512x512xbf16> to vector<512x512xf32>
    %cst = arith.constant dense<0.000000e+00> : vector<512xf32>
    %7 = vector.multi_reduction <add>, %6, %cst [1] : vector<512x512xf32> to vector<512xf32>
    %8 = vector.shape_cast %7 : vector<512xf32> to vector<512x1xf32>
    %9 = arith.addf %5, %8 : vector<512x1xf32>
    %c0_4 = arith.constant 0 : index
    %c0_5 = arith.constant 0 : index
    %10 = vector.load %arg9[%c0_4, %c0_5] : memref<512x1xf32, #tpu.memory_space<vmem>>, vector<512x1xf32>
    tpu.vector_store %arg9[%c0_4, %c0_5], %9 {strides = array<i32>} : memref<512x1xf32, #tpu.memory_space<vmem>>, vector<512x1xf32>,
    %c512_i32 = arith.constant 512 : i32
    %11 = arith.muli %arg1, %c512_i32 : i32
    %12 = tpu.assume_multiple %11, 512 : i32
    %13 = arith.index_cast %12 : i32 to index
    %c0_6 = arith.constant 0 : index
    %14 = vector.load %arg3[%13, %c0_6] : memref<512x32xbf16, #tpu.memory_space<vmem>>, vector<512x32xbf16>
    %c0_7 = arith.constant 0 : index
    %c0_8 = arith.constant 0 : index
    %15 = vector.load %arg8[%c0_7, %c0_8] : memref<512x32xf32, #tpu.memory_space<vmem>>, vector<512x32xf32>
    %cst_9 = arith.constant dense<0.000000e+00> : vector<512x32xf32>
    %16 = tpu.matmul %4, %14, %cst_9 {dimension_numbers = #tpu.dot_dimension_numbers<[1], [0], [0], [1], [0, 0, 1, 1], [], []>} : vector<512x512xbf16>, vector<512x32xbf16>, vector<512x32xf32> -> vector<512x32xf32>
    %17 = arith.addf %15, %16 : vector<512x32xf32>
    %c0_10 = arith.constant 0 : index
    %c0_11 = arith.constant 0 : index
    %18 = vector.load %arg8[%c0_10, %c0_11] : memref<512x32xf32, #tpu.memory_space<vmem>>, vector<512x32xf32>
    tpu.vector_store %arg8[%c0_10, %c0_11], %17 {strides = array<i32>} : memref<512x32xf32, #tpu.memory_space<vmem>>, vector<512x32xf32>,
    %c0_i32_12 = arith.constant 0 : i32
    %19 = arith.cmpi eq, %arg1, %c0_i32_12 : i32
    %20 = arith.extui %19 : i1 to i32
    %c0_i32_13 = arith.constant 0 : i32
    %21 = arith.cmpi ne, %20, %c0_i32_13 : i32
    scf.if %21 {
      %c0_14 = arith.constant 0 : index
      %c0_15 = arith.constant 0 : index
      %22 = vector.load %arg9[%c0_14, %c0_15] : memref<512x1xf32, #tpu.memory_space<vmem>>, vector<512x1xf32>
      %cst_16 = arith.constant 0.000000e+00 : f32
      %23 = vector.broadcast %cst_16 : f32 to vector<512x1xf32>
      %24 = arith.cmpf ogt, %22, %23 : vector<512x1xf32>
      %cst_17 = arith.constant 1.000000e+00 : f32
      %25 = vector.broadcast %cst_17 : f32 to vector<512x1xf32>
      %26 = arith.maximumf %22, %25 : vector<512x1xf32>
      %cst_18 = arith.constant 1.000000e+00 : f32
      %27 = vector.broadcast %cst_18 : f32 to vector<512x1xf32>
      %28 = arith.divf %27, %26 : vector<512x1xf32>
      %cst_19 = arith.constant 0.000000e+00 : f32
      %29 = vector.broadcast %cst_19 : f32 to vector<512x1xf32>
      %30 = arith.select %24, %28, %29 : vector<512x1xi1>, vector<512x1xf32>
      %c0_20 = arith.constant 0 : index
      %c0_21 = arith.constant 0 : index
      %31 = vector.load %arg8[%c0_20, %c0_21] : memref<512x32xf32, #tpu.memory_space<vmem>>, vector<512x32xf32>
      %32 = vector.broadcast %30 : vector<512x1xf32> to vector<512x32xf32>
      %33 = arith.mulf %31, %32 : vector<512x32xf32>
      %34 = arith.truncf %33 : vector<512x32xf32> to vector<512x32xbf16>
      %c0_22 = arith.constant 0 : index
      %c0_23 = arith.constant 0 : index
      %35 = vector.load %arg4[%c0_22, %c0_23] : memref<32x32xbf16, #tpu.memory_space<vmem>>, vector<32x32xbf16>
      %cst_24 = arith.constant dense<0.000000e+00> : vector<512x32xf32>
      %36 = tpu.matmul %34, %35, %cst_24 {dimension_numbers = #tpu.dot_dimension_numbers<[1], [0], [0], [1], [0, 0, 1, 1], [], []>} : vector<512x32xbf16>, vector<32x32xbf16>, vector<512x32xf32> -> vector<512x32xf32>
      %c0_25 = arith.constant 0 : index
      %c0_26 = arith.constant 0 : index
      %37 = vector.load %arg5[%c0_25, %c0_26] : memref<32x32xbf16, #tpu.memory_space<vmem>>, vector<32x32xbf16>
      %cst_27 = arith.constant dense<0.000000e+00> : vector<512x32xf32>
      %38 = tpu.matmul %34, %37, %cst_27 {dimension_numbers = #tpu.dot_dimension_numbers<[1], [0], [0], [1], [0, 0, 1, 1], [], []>} : vector<512x32xbf16>, vector<32x32xbf16>, vector<512x32xf32> -> vector<512x32xf32>
      %39 = arith.truncf %36 : vector<512x32xf32> to vector<512x32xbf16>
      %c0_28 = arith.constant 0 : index
      %c0_29 = arith.constant 0 : index
      %40 = vector.load %arg6[%c0_28, %c0_29] : memref<512x32xbf16, #tpu.memory_space<vmem>>, vector<512x32xbf16>
      tpu.vector_store %arg6[%c0_28, %c0_29], %39 {strides = array<i32>} : memref<512x32xbf16, #tpu.memory_space<vmem>>, vector<512x32xbf16>,
      %41 = arith.mulf %38, %38 : vector<512x32xf32>
      %cst_30 = arith.constant dense<0.000000e+00> : vector<512xf32>
      %42 = vector.multi_reduction <add>, %41, %cst_30 [1] : vector<512x32xf32> to vector<512xf32>
      %43 = vector.shape_cast %42 : vector<512xf32> to vector<512x1xf32>
      %c0_31 = arith.constant 0 : index
      %c0_32 = arith.constant 0 : index
      %44 = vector.load %arg7[%c0_31, %c0_32] : memref<512x1xf32, #tpu.memory_space<vmem>>, vector<512x1xf32>
      tpu.vector_store %arg7[%c0_31, %c0_32], %43 {strides = array<i32>} : memref<512x1xf32, #tpu.memory_space<vmem>>, vector<512x1xf32>,
    } else {
    }
    return
  }
  func.func @transform_0(%arg0: i32, %arg1: i32) -> (i32, i32) {
    %c0_i32 = arith.constant 0 : i32
    return %arg0, %arg1 : i32, i32
  }
  func.func @transform_1(%arg0: i32, %arg1: i32) -> (i32, i32) {
    %c0_i32 = arith.constant 0 : i32
    %c0_i32_0 = arith.constant 0 : i32
    %c0_i32_1 = arith.constant 0 : i32
    return %c0_i32, %c0_i32_0 : i32, i32
  }
  func.func @transform_2(%arg0: i32, %arg1: i32) -> (i32, i32) {
    %c0_i32 = arith.constant 0 : i32
    %c0_i32_0 = arith.constant 0 : i32
    %c0_i32_1 = arith.constant 0 : i32
    return %c0_i32, %c0_i32_0 : i32, i32
  }
  func.func @transform_3(%arg0: i32, %arg1: i32) -> (i32, i32) {
    %c0_i32 = arith.constant 0 : i32
    %c0_i32_0 = arith.constant 0 : i32
    %c0_i32_1 = arith.constant 0 : i32
    return %c0_i32, %c0_i32_0 : i32, i32
  }
  func.func @transform_4(%arg0: i32, %arg1: i32) -> (i32, i32) {
    %c0_i32 = arith.constant 0 : i32
    %c0_i32_0 = arith.constant 0 : i32
    return %arg0, %c0_i32 : i32, i32
  }
  func.func @transform_5(%arg0: i32, %arg1: i32) -> (i32, i32) {
    %c0_i32 = arith.constant 0 : i32
    %c0_i32_0 = arith.constant 0 : i32
    return %arg0, %c0_i32 : i32, i32
  }
}

module attributes {stable_mosaic.version = 11 : i64} {
  func.func @kernel(%arg0: memref<16x32xbf16, #tpu.memory_space<vmem>>, %arg1: memref<256x32xbf16, #tpu.memory_space<vmem>>, %arg2: memref<1x128xf32, #tpu.memory_space<vmem>>, %arg3: memref<1x128xf32, #tpu.memory_space<vmem>>, %arg4: memref<1x1xf32, #tpu.memory_space<vmem>>, %arg5: memref<16x128xf32, #tpu.memory_space<vmem>>, %arg6: memref<1x128xf32, #tpu.memory_space<vmem>>, %arg7: memref<1x1xf32, #tpu.memory_space<vmem>>) attributes {dimension_semantics = [], scalar_prefetch = 0 : i64, scratch_operands = 0 : i64, tpu.core_type = #tpu.core_type<tc>} {
    %c0 = arith.constant 0 : index
    %c0_0 = arith.constant 0 : index
    %0 = vector.load %arg0[%c0, %c0_0] : memref<16x32xbf16, #tpu.memory_space<vmem>>, vector<16x32xbf16>
    %c0_1 = arith.constant 0 : index
    %c0_2 = arith.constant 0 : index
    %1 = vector.load %arg1[%c0_1, %c0_2] : memref<256x32xbf16, #tpu.memory_space<vmem>>, vector<256x32xbf16>
    %c0_3 = arith.constant 0 : index
    %c0_4 = arith.constant 0 : index
    %2 = vector.load %arg2[%c0_3, %c0_4] : memref<1x128xf32, #tpu.memory_space<vmem>>, vector<1x128xf32>
    %cst = arith.constant dense<0.000000e+00> : vector<16x256xf32>
    %3 = tpu.matmul %0, %1, %cst {dimension_numbers = #tpu.dot_dimension_numbers<[1], [1], [0], [0], [0, 0, 1, 0], [], []>} : vector<16x32xbf16>, vector<256x32xbf16>, vector<16x256xf32> -> vector<16x256xf32>
    %4 = vector.extract_strided_slice %3 {offsets = [0, 0], sizes = [16, 128], strides = [1, 1]} : vector<16x256xf32> to vector<16x128xf32>
    %cst_5 = arith.constant 2.000000e+00 : f32
    %5 = vector.broadcast %cst_5 : f32 to vector<16x128xf32>
    %6 = arith.mulf %4, %5 : vector<16x128xf32>
    %7 = vector.extract_strided_slice %3 {offsets = [0, 128], sizes = [16, 128], strides = [1, 1]} : vector<16x256xf32> to vector<16x128xf32>
    %8 = tpu.iota {dimensions = array<i32: 1>} : vector<1x128xi32>
    %c8_i32 = arith.constant 8 : i32
    %9 = vector.broadcast %c8_i32 : i32 to vector<1x128xi32>
    %10 = arith.cmpi slt, %8, %9 : vector<1x128xi32>
    %cst_6 = arith.constant 9.99999997E-7 : f32
    %11 = vector.broadcast %cst_6 : f32 to vector<1x128xf32>
    %12 = arith.addf %2, %11 : vector<1x128xf32>
    %13 = math.log %12 : vector<1x128xf32>
    %14 = vector.broadcast %13 : vector<1x128xf32> to vector<16x128xf32>
    %15 = arith.addf %6, %14 : vector<16x128xf32>
    %cst_7 = arith.constant -1.000000e+30 : f32
    %16 = vector.shape_cast %10 : vector<1x128xi1> to vector<1x128xi1>
    %17 = vector.broadcast %16 : vector<1x128xi1> to vector<16x128xi1>
    %18 = vector.broadcast %cst_7 : f32 to vector<16x128xf32>
    %19 = arith.select %17, %15, %18 : vector<16x128xi1>, vector<16x128xf32>
    %cst_8 = arith.constant dense<0xFF800000> : vector<16xf32>
    %20 = vector.multi_reduction <maximumf>, %19, %cst_8 [1] : vector<16x128xf32> to vector<16xf32>
    %21 = vector.shape_cast %20 : vector<16xf32> to vector<16x1xf32>
    %22 = vector.broadcast %21 : vector<16x1xf32> to vector<16x128xf32>
    %23 = arith.subf %19, %22 : vector<16x128xf32>
    %24 = math.exp %23 : vector<16x128xf32>
    %cst_9 = arith.constant dense<0.000000e+00> : vector<16xf32>
    %25 = vector.multi_reduction <add>, %24, %cst_9 [1] : vector<16x128xf32> to vector<16xf32>
    %26 = vector.shape_cast %25 : vector<16xf32> to vector<16x1xf32>
    %27 = vector.broadcast %26 : vector<16x1xf32> to vector<16x128xf32>
    %28 = arith.divf %24, %27 : vector<16x128xf32>
    %cst_10 = arith.constant dense<0.000000e+00> : vector<128xf32>
    %29 = vector.multi_reduction <add>, %28, %cst_10 [0] : vector<16x128xf32> to vector<128xf32>
    %30 = vector.shape_cast %29 : vector<128xf32> to vector<1x128xf32>
    %cst_11 = arith.constant 1.600000e+01 : f32
    %31 = vector.broadcast %cst_11 : f32 to vector<1x128xf32>
    %32 = arith.divf %30, %31 : vector<1x128xf32>
    %cst_12 = arith.constant 0.899999976 : f32
    %33 = vector.broadcast %cst_12 : f32 to vector<1x128xf32>
    %34 = arith.mulf %33, %2 : vector<1x128xf32>
    %cst_13 = arith.constant 1.000000e-01 : f32
    %35 = vector.broadcast %cst_13 : f32 to vector<1x128xf32>
    %36 = arith.mulf %35, %32 : vector<1x128xf32>
    %37 = arith.addf %34, %36 : vector<1x128xf32>
    %c0_14 = arith.constant 0 : index
    %c0_15 = arith.constant 0 : index
    %38 = vector.load %arg6[%c0_14, %c0_15] : memref<1x128xf32, #tpu.memory_space<vmem>>, vector<1x128xf32>
    tpu.vector_store %arg6[%c0_14, %c0_15], %37 {strides = array<i32>} : memref<1x128xf32, #tpu.memory_space<vmem>>, vector<1x128xf32>,
    %cst_16 = arith.constant 9.99999997E-7 : f32
    %39 = vector.broadcast %cst_16 : f32 to vector<1x128xf32>
    %40 = arith.addf %37, %39 : vector<1x128xf32>
    %41 = math.log %40 : vector<1x128xf32>
    %42 = vector.broadcast %41 : vector<1x128xf32> to vector<16x128xf32>
    %43 = arith.addf %6, %42 : vector<16x128xf32>
    %cst_17 = arith.constant -1.000000e+30 : f32
    %44 = vector.shape_cast %10 : vector<1x128xi1> to vector<1x128xi1>
    %45 = vector.broadcast %44 : vector<1x128xi1> to vector<16x128xi1>
    %46 = vector.broadcast %cst_17 : f32 to vector<16x128xf32>
    %47 = arith.select %45, %43, %46 : vector<16x128xi1>, vector<16x128xf32>
    %cst_18 = arith.constant dense<0xFF800000> : vector<16xf32>
    %48 = vector.multi_reduction <maximumf>, %47, %cst_18 [1] : vector<16x128xf32> to vector<16xf32>
    %49 = vector.shape_cast %48 : vector<16xf32> to vector<16x1xf32>
    %50 = vector.broadcast %49 : vector<16x1xf32> to vector<16x128xf32>
    %51 = arith.subf %47, %50 : vector<16x128xf32>
    %52 = math.exp %51 : vector<16x128xf32>
    %cst_19 = arith.constant dense<0.000000e+00> : vector<16xf32>
    %53 = vector.multi_reduction <add>, %52, %cst_19 [1] : vector<16x128xf32> to vector<16xf32>
    %54 = vector.shape_cast %53 : vector<16xf32> to vector<16x1xf32>
    %55 = vector.broadcast %54 : vector<16x1xf32> to vector<16x128xf32>
    %56 = arith.divf %52, %55 : vector<16x128xf32>
    %57 = vector.broadcast %49 : vector<16x1xf32> to vector<16x128xf32>
    %58 = arith.subf %47, %57 : vector<16x128xf32>
    %59 = math.log %54 : vector<16x1xf32>
    %60 = vector.broadcast %59 : vector<16x1xf32> to vector<16x128xf32>
    %61 = arith.subf %58, %60 : vector<16x128xf32>
    %62 = arith.mulf %56, %61 : vector<16x128xf32>
    %cst_20 = arith.constant dense<0.000000e+00> : vector<16xf32>
    %63 = vector.multi_reduction <add>, %62, %cst_20 [1] : vector<16x128xf32> to vector<16xf32>
    %64 = vector.shape_cast %63 : vector<16xf32> to vector<16x1xf32>
    %cst_21 = arith.constant 0.000000e+00 : f32
    %65 = vector.broadcast %cst_21 : f32 to vector<16x1xf32>
    %66 = arith.subf %65, %64 : vector<16x1xf32>
    %67 = vector.shape_cast %66 : vector<16x1xf32> to vector<1x16x1xf32>
    %cst_22 = arith.constant dense<0.000000e+00> : vector<1xf32>
    %68 = vector.multi_reduction <add>, %67, %cst_22 [1, 2] : vector<1x16x1xf32> to vector<1xf32>
    %69 = vector.shape_cast %68 : vector<1xf32> to vector<1x1x1xf32>
    %70 = vector.extract %69[0, 0, 0] : f32 from vector<1x1x1xf32>
    %cst_23 = arith.constant 1.600000e+01 : f32
    %71 = arith.divf %70, %cst_23 : f32
    %cst_24 = arith.constant 0.000000e+00 : f32
    %72 = vector.shape_cast %10 : vector<1x128xi1> to vector<1x128xi1>
    %73 = vector.broadcast %72 : vector<1x128xi1> to vector<16x128xi1>
    %74 = vector.broadcast %cst_24 : f32 to vector<16x128xf32>
    %75 = arith.select %73, %43, %74 : vector<16x128xi1>, vector<16x128xf32>
    %cst_25 = arith.constant dense<0.000000e+00> : vector<16xf32>
    %76 = vector.multi_reduction <add>, %75, %cst_25 [1] : vector<16x128xf32> to vector<16xf32>
    %77 = vector.shape_cast %76 : vector<16xf32> to vector<16x1xf32>
    %cst_26 = arith.constant 1.250000e-01 : f32
    %78 = vector.broadcast %cst_26 : f32 to vector<16x1xf32>
    %79 = arith.mulf %77, %78 : vector<16x1xf32>
    %cst_27 = arith.constant dense<0xFF800000> : vector<1xf32>
    %80 = vector.multi_reduction <maximumf>, %79, %cst_27 [0] : vector<16x1xf32> to vector<1xf32>
    %81 = vector.shape_cast %80 : vector<1xf32> to vector<1x1xf32>
    %82 = vector.broadcast %81 : vector<1x1xf32> to vector<16x1xf32>
    %83 = arith.subf %79, %82 : vector<16x1xf32>
    %84 = math.exp %83 : vector<16x1xf32>
    %cst_28 = arith.constant dense<0.000000e+00> : vector<1xf32>
    %85 = vector.multi_reduction <add>, %84, %cst_28 [0] : vector<16x1xf32> to vector<1xf32>
    %86 = vector.shape_cast %85 : vector<1xf32> to vector<1x1xf32>
    %87 = vector.broadcast %86 : vector<1x1xf32> to vector<16x1xf32>
    %88 = arith.divf %84, %87 : vector<16x1xf32>
    %89 = vector.broadcast %81 : vector<1x1xf32> to vector<16x1xf32>
    %90 = arith.subf %79, %89 : vector<16x1xf32>
    %91 = math.log %86 : vector<1x1xf32>
    %92 = vector.broadcast %91 : vector<1x1xf32> to vector<16x1xf32>
    %93 = arith.subf %90, %92 : vector<16x1xf32>
    %94 = arith.mulf %88, %93 : vector<16x1xf32>
    %95 = vector.shape_cast %94 : vector<16x1xf32> to vector<1x16x1xf32>
    %cst_29 = arith.constant dense<0.000000e+00> : vector<1xf32>
    %96 = vector.multi_reduction <add>, %95, %cst_29 [1, 2] : vector<1x16x1xf32> to vector<1xf32>
    %97 = vector.shape_cast %96 : vector<1xf32> to vector<1x1x1xf32>
    %98 = vector.extract %97[0, 0, 0] : f32 from vector<1x1x1xf32>
    %cst_30 = arith.constant 0.000000e+00 : f32
    %99 = arith.subf %cst_30, %98 : f32
    %c0_31 = arith.constant 0 : index
    %c0_32 = arith.constant 0 : index
    %100 = vector.load %arg4[%c0_31, %c0_32] : memref<1x1xf32, #tpu.memory_space<vmem>>, vector<1x1xf32>
    %cst_33 = arith.constant 0.001953125 : f32
    %101 = vector.broadcast %cst_33 : f32 to vector<1x1xf32>
    %102 = arith.mulf %100, %101 : vector<1x1xf32>
    %103 = arith.subf %71, %99 : f32
    %104 = vector.broadcast %103 : f32 to vector<1x1xf32>
    %105 = arith.addf %104, %102 : vector<1x1xf32>
    %c0_34 = arith.constant 0 : index
    %c0_35 = arith.constant 0 : index
    %106 = vector.load %arg7[%c0_34, %c0_35] : memref<1x1xf32, #tpu.memory_space<vmem>>, vector<1x1xf32>
    tpu.vector_store %arg7[%c0_34, %c0_35], %105 {strides = array<i32>} : memref<1x1xf32, #tpu.memory_space<vmem>>, vector<1x1xf32>,
    %c0_36 = arith.constant 0 : index
    %c0_37 = arith.constant 0 : index
    %107 = vector.load %arg3[%c0_36, %c0_37] : memref<1x128xf32, #tpu.memory_space<vmem>>, vector<1x128xf32>
    %108 = vector.broadcast %107 : vector<1x128xf32> to vector<16x128xf32>
    %109 = arith.addf %7, %108 : vector<16x128xf32>
    %c0_38 = arith.constant 0 : index
    %c0_39 = arith.constant 0 : index
    %110 = vector.load %arg5[%c0_38, %c0_39] : memref<16x128xf32, #tpu.memory_space<vmem>>, vector<16x128xf32>
    tpu.vector_store %arg5[%c0_38, %c0_39], %109 {strides = array<i32>} : memref<16x128xf32, #tpu.memory_space<vmem>>, vector<16x128xf32>,
    return
  }
}

</mosaic_0001>

<llo_original>
// kernel: adaptor_forward.3
$region0: #{adaptor_forward.3}
  #allocation0 [shape = 'u32[]', space=smem, size = 0x4, offset = 0x4, fixed_abs, tag = 'smem constant byte address 0x4 - core index']
  #allocation1 [shape = 'u32[72,128]{1,0:T(1,128)}', space=vmem, size = 0x9000, scoped, tag = 'internal scratch']
  #allocation2 [shape = 'f32[1,1]{1,0:T(1,128)S(1)}', space=vmem, size = 0x200, scoped, tag = 'scoped memory for adaptor_forward.3']
  %s0 = inlined_call_operand.vmem [shape: bf16[16,32], index: 0, kind: input, shape index: {}]
  %s1 = inlined_call_operand.vmem [shape: bf16[256,32], index: 1, kind: input, shape index: {}]
  %s2 = inlined_call_operand.vmem [shape: f32[1,128], index: 2, kind: input, shape index: {}, may-alias: {2,6}]
  %s3 = inlined_call_operand.vmem [shape: f32[1,128], index: 3, kind: input, shape index: {}]
  %s4 = inlined_call_operand.<no memory space> [shape: f32[1,1], index: 4, kind: input, shape index: {}]
  %s5 = inlined_call_operand.vmem [shape: f32[16,128], index: 5, kind: output, shape index: {0}]
  %s6 = inlined_call_operand.vmem [shape: f32[1,128], index: 6, kind: output, shape index: {1}, may-alias: {2,6}]
  %s7 = inlined_call_operand.hbm [shape: f32[1,1], index: 7, kind: output, shape index: {2}]
  %8 = xla_tuple %s5, %s6, %s7
  %s9 = sld [smem:[#allocation0]]
  $region46: #{adaptor_forward.3} parent=0
    _
  %s11 = ssub.s32 1, %s9
  %s12 = scalar_select 0, %s11, %s9
  %v13 = vstv %s4
  %14 = vst [vmem:[#allocation2] sm:$0x1] %v13
  $region1: #{adaptor_forward.3} parent=0
    #allocation3 [shape = 'u8[512]{0}', space=vmem, size = 0x400, scoped, tag = 'output window, operand 2, single buffered']
    #allocation4 [shape = 's32[1]{0}', space=sflag, size = 0x4, scoped, tag = 'scoped memory for adaptor_forward.3']
    %15 = vsyncpa [#allocation4], 0
    // Predicated region
    $region2: #{adaptor_forward.3} parent=1 // pred_check
      _
    $region3: #{adaptor_forward.3} parent=1 // pred_check_branch
      %17 = sbr.rel (0) target = $region5
    $region4: #{adaptor_forward.3} parent=1 // pred_region
      _
    $region5: #{adaptor_forward.3} parent=1 // pred_fallthru
      _
    // Predicated region
    $region6: #{adaptor_forward.3} parent=1 // pred_check
      _
    $region7: #{adaptor_forward.3} parent=1 // pred_check_branch
      %19 = sbr.rel (0) target = $region9
    $region8: #{adaptor_forward.3} parent=1 // pred_region
      _
    $region9: #{adaptor_forward.3} parent=1 // pred_fallthru
      _
    // Predicated region
    $region10: #{adaptor_forward.3} parent=1 // pred_check
      _
    $region11: #{adaptor_forward.3} parent=1 // pred_check_branch
      %21 = sbr.rel (0) target = $region13
    $region12: #{adaptor_forward.3} parent=1 // pred_region
      _
    $region13: #{adaptor_forward.3} parent=1 // pred_fallthru
      _
    // Predicated region
    $region14: #{adaptor_forward.3} parent=1 // pred_check
      _
    $region15: #{adaptor_forward.3} parent=1 // pred_check_branch
      %23 = sbr.rel (0) target = $region17
    $region16: #{adaptor_forward.3} parent=1 // pred_region
      _
    $region17: #{adaptor_forward.3} parent=1 // pred_fallthru
      _
    // Predicated region
    $region18: #{adaptor_forward.3} parent=1 // pred_check
      _
    $region19: #{adaptor_forward.3} parent=1 // pred_check_branch
      %25 = sbr.rel (0) target = $region21
    $region20: #{adaptor_forward.3} parent=1 // pred_region
      _
    $region21: #{adaptor_forward.3} parent=1 // pred_fallthru
      _
    %v26 = vld [vmem:[%s0] sm:$0xf]
    %v27 = vld [vmem:[%s0 + $0x4] sm:$0xf]
    %v28 = vld [vmem:[%s1] sm:$0xf]
    %v29 = vld [vmem:[%s1 + $0x4] sm:$0xf]
    %v30 = vld [vmem:[%s1 + $0x8] sm:$0xf]
    %v31 = vld [vmem:[%s1 + $0xc] sm:$0xf]
    %v32 = vld [vmem:[%s1 + $0x10] sm:$0xf]
    %v33 = vld [vmem:[%s1 + $0x14] sm:$0xf]
    %v34 = vld [vmem:[%s1 + $0x18] sm:$0xf]
    %v35 = vld [vmem:[%s1 + $0x1c] sm:$0xf]
    %v36 = vld [vmem:[%s1 + $0x20] sm:$0xf]
    %v37 = vld [vmem:[%s1 + $0x24] sm:$0xf]
    %v38 = vld [vmem:[%s1 + $0x28] sm:$0xf]
    %v39 = vld [vmem:[%s1 + $0x2c] sm:$0xf]
    %v40 = vld [vmem:[%s1 + $0x30] sm:$0xf]
    %v41 = vld [vmem:[%s1 + $0x34] sm:$0xf]
    %v42 = vld [vmem:[%s1 + $0x38] sm:$0xf]
    %v43 = vld [vmem:[%s1 + $0x3c] sm:$0xf]
    %v44 = vld [vmem:[%s1 + $0x40] sm:$0xf]
    %v45 = vld [vmem:[%s1 + $0x44] sm:$0xf]
    %v46 = vld [vmem:[%s1 + $0x48] sm:$0xf]
    %v47 = vld [vmem:[%s1 + $0x4c] sm:$0xf]
    %v48 = vld [vmem:[%s1 + $0x50] sm:$0xf]
    %v49 = vld [vmem:[%s1 + $0x54] sm:$0xf]
    %v50 = vld [vmem:[%s1 + $0x58] sm:$0xf]
    %v51 = vld [vmem:[%s1 + $0x5c] sm:$0xf]
    %v52 = vld [vmem:[%s1 + $0x60] sm:$0xf]
    %v53 = vld [vmem:[%s1 + $0x64] sm:$0xf]
    %v54 = vld [vmem:[%s1 + $0x68] sm:$0xf]
    %v55 = vld [vmem:[%s1 + $0x6c] sm:$0xf]
    %v56 = vld [vmem:[%s1 + $0x70] sm:$0xf]
    %v57 = vld [vmem:[%s1 + $0x74] sm:$0xf]
    %v58 = vld [vmem:[%s1 + $0x78] sm:$0xf]
    %v59 = vld [vmem:[%s1 + $0x7c] sm:$0xf]
    %v60 = vld [vmem:[%s2] sm:$0x1]
    %v63 = vunpack.c.l.b16 %v26
    %v64 = vunpack.c.l.b16 %v27
    %v65 = vpack.c.b16 %v64, %v63
    %v98 = vunpack.c.l.b16 %v28
    %v99 = vunpack.c.l.b16 %v29
    %v100 = vunpack.c.l.b16 %v30
    %v101 = vunpack.c.l.b16 %v31
    %v102 = vunpack.c.l.b16 %v32
    %v103 = vunpack.c.l.b16 %v33
    %v104 = vunpack.c.l.b16 %v34
    %v105 = vunpack.c.l.b16 %v35
    %v106 = vunpack.c.l.b16 %v36
    %v107 = vunpack.c.l.b16 %v37
    %v108 = vunpack.c.l.b16 %v38
    %v109 = vunpack.c.l.b16 %v39
    %v110 = vunpack.c.l.b16 %v40
    %v111 = vunpack.c.l.b16 %v41
    %v112 = vunpack.c.l.b16 %v42
    %v113 = vunpack.c.l.b16 %v43
    %v114 = vunpack.c.l.b16 %v44
    %v115 = vunpack.c.l.b16 %v45
    %v116 = vunpack.c.l.b16 %v46
    %v117 = vunpack.c.l.b16 %v47
    %v118 = vunpack.c.l.b16 %v48
    %v119 = vunpack.c.l.b16 %v49
    %v120 = vunpack.c.l.b16 %v50
    %v121 = vunpack.c.l.b16 %v51
    %v122 = vunpack.c.l.b16 %v52
    %v123 = vunpack.c.l.b16 %v53
    %v124 = vunpack.c.l.b16 %v54
    %v125 = vunpack.c.l.b16 %v55
    %v126 = vunpack.c.l.b16 %v56
    %v127 = vunpack.c.l.b16 %v57
    %v128 = vunpack.c.l.b16 %v58
    %v129 = vunpack.c.l.b16 %v59
    %v130 = vpack.c.b16 %v99, %v98
    %v131 = vpack.c.b16 %v101, %v100
    %v132 = vpack.c.b16 %v103, %v102
    %v133 = vpack.c.b16 %v105, %v104
    %v134 = vpack.c.b16 %v107, %v106
    %v135 = vpack.c.b16 %v109, %v108
    %v136 = vpack.c.b16 %v111, %v110
    %v137 = vpack.c.b16 %v113, %v112
    %v138 = vpack.c.b16 %v115, %v114
    %v139 = vpack.c.b16 %v117, %v116
    %v140 = vpack.c.b16 %v119, %v118
    %v141 = vpack.c.b16 %v121, %v120
    %v142 = vpack.c.b16 %v123, %v122
    %v143 = vpack.c.b16 %v125, %v124
    %v144 = vpack.c.b16 %v127, %v126
    %v145 = vpack.c.b16 %v129, %v128
    %vm146 = vcmask 261120
    %v148 = vsel %vm146, %v65, 0
    %v151 = vsel %vm146, %v130, 0
    %v154 = vsel %vm146, %v131, 0
    %v157 = vsel %vm146, %v132, 0
    %v160 = vsel %vm146, %v133, 0
    %v163 = vsel %vm146, %v134, 0
    %v166 = vsel %vm146, %v135, 0
    %v169 = vsel %vm146, %v136, 0
    %v172 = vsel %vm146, %v137, 0
    %v175 = vsel %vm146, %v138, 0
    %v178 = vsel %vm146, %v139, 0
    %v181 = vsel %vm146, %v140, 0
    %v184 = vsel %vm146, %v141, 0
    %v187 = vsel %vm146, %v142, 0
    %v190 = vsel %vm146, %v143, 0
    %v193 = vsel %vm146, %v144, 0
    %v196 = vsel %vm146, %v145, 0
    %198 = vmatpush.bf16.xpose.msra.mxu0 %v172
    %199 = vmatpush.bf16.xpose.msra.mxu0 %v169
    %200 = vmatpush.bf16.xpose.msra.mxu0 %v166
    %201 = vmatpush.bf16.xpose.msra.mxu0 %v163
    %202 = vmatpush.bf16.xpose.msra.mxu0 %v160
    %203 = vmatpush.bf16.xpose.msra.mxu0 %v157
    %204 = vmatpush.bf16.xpose.msra.mxu0 %v154
    %205 = vmatpush.bf16.xpose.msra.mxu0 %v151
    %206 = vmatmul.bf16.gmra.mxu0 %v148
    %v207 = vpop.f32.mrf.mxu0
    %v208 = vadd.f32 0.0, %v207
    %v209 = vpop.f32.mrf.mxu0
    %v210 = vadd.f32 0.0, %v209
    %211 = vdwg.mxu0
    %212 = vmatpush.bf16.xpose.msra.mxu0 %v196
    %213 = vmatpush.bf16.xpose.msra.mxu0 %v193
    %214 = vmatpush.bf16.xpose.msra.mxu0 %v190
    %215 = vmatpush.bf16.xpose.msra.mxu0 %v187
    %216 = vmatpush.bf16.xpose.msra.mxu0 %v184
    %217 = vmatpush.bf16.xpose.msra.mxu0 %v181
    %218 = vmatpush.bf16.xpose.msra.mxu0 %v178
    %219 = vmatpush.bf16.xpose.msra.mxu0 %v175
    %220 = vmatmul.bf16.gmra.mxu0 %v148
    %v221 = vpop.f32.mrf.mxu0
    %v222 = vadd.f32 0.0, %v221
    %v223 = vpop.f32.mrf.mxu0
    %v224 = vadd.f32 0.0, %v223
    %225 = vdwg.mxu0
    %v226 = vmul.f32 %v208, 2.0
    %v227 = vmul.f32 %v210, 2.0
    %v228 = vlaneseq
    %v229 = vand.u32 %v228, 127
    %vm230 = vcmp.lt.s32.totalorder %v229, 8
    %v231 = vadd.f32 %v60, 1e-06
    %v232 = vlog2.pop %v231
    %v233 = vmul.f32 %v232, 0.6931472
    %v235 = vperm.slane %v233, 0
    %v237 = vadd.f32 %v226, %v235
    %v238 = vadd.f32 %v227, %v235
    %v239 = vsel %vm230, 1, 0
    %vm240 = vcmp.eq.s32.totalorder %v239, 1
    %v241 = vsel %vm240, %v237, -1e+30
    %v242 = vsel %vm240, %v238, -1e+30
    %243 = vmax.xlane.f32.xlu0 %v241
    %v244 = vpop.xlane.xlu0 %243
    %245 = vmax.xlane.f32.xlu0 %v242
    %v246 = vpop.xlane.xlu0 %245
    %v247 = vsub.f32 %v241, %v244
    %v248 = vsub.f32 %v242, %v246
    %v249 = vmul.f32 %v247, 1.442695
    %v250 = vpow.pop %v249
    %v251 = vmul.f32 %v248, 1.442695
    %v252 = vpow.pop %v251
    %253 = vadd.xlane.f32.xlu0 %v250
    %v254 = vpop.xlane.xlu0 %253
    %255 = vadd.xlane.f32.xlu0 %v252
    %v256 = vpop.xlane.xlu0 %255
    %v257 = vrcp.pop %v254
    %v258 = vmul.f32 %v254, %v257
    %v259 = vsub.f32 1.0, %v258
    %v260 = vmul.f32 %v257, %v259
    %v261 = vadd.f32 %v257, %v260
    %vm262 = vweird.f32 %v254
    %vm263 = vweird.f32 %v257
    %vm264 = vmor %vm262, %vm263
    %v265 = vsel %vm264, %v257, %v261
    %v266 = vand.u32 2147483647, %v254
    %vm267 = vcmp.eq.f32.partialorder %v266, 8.507059e+37
    %v268 = vand.u32 %v254, 2147483648
    %v269 = vor.u32 1.1754944e-38, %v268
    %v270 = vsel %vm267, %v269, %v265
    %v271 = vmul.f32 %v250, %v270
    %v272 = vrcp.pop %v256
    %v273 = vmul.f32 %v256, %v272
    %v274 = vsub.f32 1.0, %v273
    %v275 = vmul.f32 %v272, %v274
    %v276 = vadd.f32 %v272, %v275
    %vm277 = vweird.f32 %v256
    %vm278 = vweird.f32 %v272
    %vm279 = vmor %vm277, %vm278
    %v280 = vsel %vm279, %v272, %v276
    %v281 = vand.u32 2147483647, %v256
    %vm282 = vcmp.eq.f32.partialorder %v281, 8.507059e+37
    %v283 = vand.u32 %v256, 2147483648
    %v284 = vor.u32 1.1754944e-38, %v283
    %v285 = vsel %vm282, %v284, %v280
    %v286 = vmul.f32 %v252, %v285
    %v287 = vadd.f32 %v271, %v286
    %v288 = vrot.slane %v287, 4
    %v289 = vadd.f32 %v287, %v288
    %v290 = vrot.slane %v289, 2
    %v291 = vadd.f32 %v289, %v290
    %v292 = vrot.slane %v291, 1
    %v293 = vadd.f32 %v291, %v292
    %v294 = vrcp.pop 16.0
    %v295 = vmul.f32 16.0, %v294
    %v296 = vsub.f32 1.0, %v295
    %v297 = vmul.f32 %v294, %v296
    %v298 = vadd.f32 %v294, %v297
    %vm299 = vweird.f32 %v294
    %v300 = vsel %vm299, %v294, %v298
    %v301 = vmul.f32 %v293, %v300
    %v302 = vmul.f32 %v60, 0.9
    %v303 = vmul.f32 %v301, 0.1
    %v304 = vadd.f32 %v302, %v303
    %305 = vst [vmem:[%s6] sm:$0x1] %v304
    %v306 = vadd.f32 %v304, 1e-06
    %v307 = vlog2.pop %v306
    %v308 = vmul.f32 %v307, 0.6931472
    %v310 = vperm.slane %v308, 0
    %v312 = vadd.f32 %v226, %v310
    %v313 = vadd.f32 %v227, %v310
    %v314 = vsel %vm240, %v312, -1e+30
    %v315 = vsel %vm240, %v313, -1e+30
    %316 = vmax.xlane.f32.xlu0 %v314
    %v317 = vpop.xlane.xlu0 %316
    %318 = vmax.xlane.f32.xlu0 %v315
    %v319 = vpop.xlane.xlu0 %318
    %v320 = vsub.f32 %v314, %v317
    %v321 = vsub.f32 %v315, %v319
    %v322 = vmul.f32 %v320, 1.442695
    %v323 = vpow.pop %v322
    %v324 = vmul.f32 %v321, 1.442695
    %v325 = vpow.pop %v324
    %326 = vadd.xlane.f32.xlu0 %v323
    %v327 = vpop.xlane.xlu0 %326
    %328 = vadd.xlane.f32.xlu0 %v325
    %v329 = vpop.xlane.xlu0 %328
    %v330 = vrcp.pop %v327
    %v331 = vmul.f32 %v327, %v330
    %v332 = vsub.f32 1.0, %v331
    %v333 = vmul.f32 %v330, %v332
    %v334 = vadd.f32 %v330, %v333
    %vm335 = vweird.f32 %v327
    %vm336 = vweird.f32 %v330
    %vm337 = vmor %vm335, %vm336
    %v338 = vsel %vm337, %v330, %v334
    %v339 = vand.u32 2147483647, %v327
    %vm340 = vcmp.eq.f32.partialorder %v339, 8.507059e+37
    %v341 = vand.u32 %v327, 2147483648
    %v342 = vor.u32 1.1754944e-38, %v341
    %v343 = vsel %vm340, %v342, %v338
    %v344 = vmul.f32 %v323, %v343
    %v345 = vrcp.pop %v329
    %v346 = vmul.f32 %v329, %v345
    %v347 = vsub.f32 1.0, %v346
    %v348 = vmul.f32 %v345, %v347
    %v349 = vadd.f32 %v345, %v348
    %vm350 = vweird.f32 %v329
    %vm351 = vweird.f32 %v345
    %vm352 = vmor %vm350, %vm351
    %v353 = vsel %vm352, %v345, %v349
    %v354 = vand.u32 2147483647, %v329
    %vm355 = vcmp.eq.f32.partialorder %v354, 8.507059e+37
    %v356 = vand.u32 %v329, 2147483648
    %v357 = vor.u32 1.1754944e-38, %v356
    %v358 = vsel %vm355, %v357, %v353
    %v359 = vmul.f32 %v325, %v358
    %v360 = vlog2.pop %v327
    %v361 = vmul.f32 %v360, 0.6931472
    %v362 = vlog2.pop %v329
    %v363 = vmul.f32 %v362, 0.6931472
    %v364 = vsub.f32 %v320, %v361
    %v365 = vsub.f32 %v321, %v363
    %v366 = vmul.f32 %v344, %v364
    %v367 = vmul.f32 %v359, %v365
    %368 = vadd.xlane.f32.xlu0 %v366
    %v369 = vpop.xlane.xlu0 %368
    %370 = vadd.xlane.f32.xlu0 %v367
    %v371 = vpop.xlane.xlu0 %370
    %v372 = vsub.f32 0.0, %v369
    %v373 = vsub.f32 0.0, %v371
    %vm374 = vcmask 7168
    %v375 = vsel %vm374, %v372, 0.0
    %v376 = vsel %vm374, %v373, 0.0
    %v377 = vadd.f32 %v375, %v376
    %378 = vadd.xlane.f32.xlu0 %v377
    %v379 = vpop.xlane.xlu0 %378
    %v380 = vrot.slane %v379, 4
    %v381 = vadd.f32 %v379, %v380
    %v382 = vrot.slane %v381, 2
    %v383 = vadd.f32 %v381, %v382
    %v384 = vrot.slane %v383, 1
    %v385 = vadd.f32 %v383, %v384
    %s386 = vtos %v385
    %v387 = vrcp.pop 16.0
    %v388 = vmul.f32 16.0, %v387
    %v389 = vsub.f32 1.0, %v388
    %v390 = vmul.f32 %v387, %v389
    %v391 = vadd.f32 %v387, %v390
    %vm392 = vweird.f32 %v387
    %v393 = vsel %vm392, %v387, %v391
    %s394 = vtos %v393
    %s395 = smul.f32 %s386, %s394
    %v396 = vsel %vm240, %v312, 0.0
    %v397 = vsel %vm240, %v313, 0.0
    %398 = vadd.xlane.f32.xlu0 %v396
    %v399 = vpop.xlane.xlu0 %398
    %400 = vadd.xlane.f32.xlu0 %v397
    %v401 = vpop.xlane.xlu0 %400
    %v402 = vmul.f32 %v399, 0.125
    %v403 = vmul.f32 %v401, 0.125
    %v404 = vmax.f32 %v402, %v403
    %v405 = vrot.slane %v404, 4
    %v406 = vmax.f32 %v404, %v405
    %v407 = vrot.slane %v406, 2
    %v408 = vmax.f32 %v406, %v407
    %v409 = vrot.slane %v408, 1
    %v410 = vmax.f32 %v408, %v409
    %v411 = vsub.f32 %v402, %v410
    %v412 = vsub.f32 %v403, %v410
    %v413 = vmul.f32 %v411, 1.442695
    %v414 = vpow.pop %v413
    %v415 = vmul.f32 %v412, 1.442695
    %v416 = vpow.pop %v415
    %v417 = vadd.f32 %v414, %v416
    %v418 = vrot.slane %v417, 4
    %v419 = vadd.f32 %v417, %v418
    %v420 = vrot.slane %v419, 2
    %v421 = vadd.f32 %v419, %v420
    %v422 = vrot.slane %v421, 1
    %v423 = vadd.f32 %v421, %v422
    %v424 = vrcp.pop %v423
    %v425 = vmul.f32 %v423, %v424
    %v426 = vsub.f32 1.0, %v425
    %v427 = vmul.f32 %v424, %v426
    %v428 = vadd.f32 %v424, %v427
    %vm429 = vweird.f32 %v423
    %vm430 = vweird.f32 %v424
    %vm431 = vmor %vm429, %vm430
    %v432 = vsel %vm431, %v424, %v428
    %v433 = vand.u32 2147483647, %v423
    %vm434 = vcmp.eq.f32.partialorder %v433, 8.507059e+37
    %v435 = vand.u32 %v423, 2147483648
    %v436 = vor.u32 1.1754944e-38, %v435
    %v437 = vsel %vm434, %v436, %v432
    %v438 = vmul.f32 %v414, %v437
    %v439 = vmul.f32 %v416, %v437
    %v440 = vlog2.pop %v423
    %v441 = vmul.f32 %v440, 0.6931472
    %v442 = vsub.f32 %v411, %v441
    %v443 = vsub.f32 %v412, %v441
    %v444 = vmul.f32 %v438, %v442
    %v445 = vmul.f32 %v439, %v443
    %v446 = vsel %vm374, %v444, 0.0
    %v447 = vsel %vm374, %v445, 0.0
    %v448 = vadd.f32 %v446, %v447
    %449 = vadd.xlane.f32.xlu0 %v448
    %v450 = vpop.xlane.xlu0 %449
    %v451 = vrot.slane %v450, 4
    %v452 = vadd.f32 %v450, %v451
    %v453 = vrot.slane %v452, 2
    %v454 = vadd.f32 %v452, %v453
    %v455 = vrot.slane %v454, 1
    %v456 = vadd.f32 %v454, %v455
    %s457 = vtos %v456
    %s458 = ssub.f32 0.0, %s457
    %v459 = vld [vmem:[#allocation2] sm:$0x1]
    %v460 = vmul.f32 %v459, 0.001953125
    %s461 = ssub.f32 %s395, %s458
    %v462 = vstv %s461
    %v463 = vadd.f32 %v462, %v460
    %vm464 = vcmask 0
    %465 = vst.msk [vmem:[#allocation3] sm:$0x1] %vm464, %v463
    %v466 = vld [vmem:[%s3] sm:$0x1]
    %v468 = vperm.slane %v466, 0
    %v470 = vadd.f32 %v222, %v468
    %v471 = vadd.f32 %v224, %v468
    %472 = vst [vmem:[%s5] sm:$0xff] %v470
    %473 = vst [vmem:[%s5 + $0x8] sm:$0xff] %v471
    // Predicated region
    $region22: #{adaptor_forward.3} parent=1 // pred_check
      _
    $region23: #{adaptor_forward.3} parent=1 // pred_check_branch
      %475 = sbr.rel (0) target = $region25
    $region24: #{adaptor_forward.3} parent=1 // pred_region
      _
    $region25: #{adaptor_forward.3} parent=1 // pred_fallthru
      _
    // Predicated region
    $region26: #{adaptor_forward.3} parent=1 // pred_check
      _
    $region27: #{adaptor_forward.3} parent=1 // pred_check_branch
      %477 = sbr.rel (0) target = $region29
    $region28: #{adaptor_forward.3} parent=1 // pred_region
      _
    $region29: #{adaptor_forward.3} parent=1 // pred_fallthru
      _
    // Predicated region
    $region30: #{adaptor_forward.3} parent=1 // pred_check
      _
    $region31: #{adaptor_forward.3} parent=1 // pred_check_branch
      %479 = sbr.rel (0) target = $region33
    $region32: #{adaptor_forward.3} parent=1 // pred_region
      %481 = vsyncadd [#allocation4], 0
      %s483 = sshll.u32 [#allocation3], 4
      %s484 = int_to_ptr.vmem [resolvable:$true] %s483
      %s485 = sshll.u32 %s7, 4
      %s486 = int_to_ptr.hbm [resolvable:$true] %s485
      %488 = dma.vmem_to_hbm [thread:$0]  %s484, 16, %s486, [#allocation4]
    $region33: #{adaptor_forward.3} parent=1 // pred_fallthru
      _
    // Predicated region
    $region34: #{adaptor_forward.3} parent=1 // pred_check
      _
    $region35: #{adaptor_forward.3} parent=1 // pred_check_branch
      %490 = sbr.rel (0) target = $region37
    $region36: #{adaptor_forward.3} parent=1 // pred_region
      _
    $region37: #{adaptor_forward.3} parent=1 // pred_fallthru
      _
    // Predicated region
    $region38: #{adaptor_forward.3} parent=1 // pred_check
      _
    $region39: #{adaptor_forward.3} parent=1 // pred_check_branch
      %492 = sbr.rel (0) target = $region41
    $region40: #{adaptor_forward.3} parent=1 // pred_region
      _
    $region41: #{adaptor_forward.3} parent=1 // pred_fallthru
      _
    // Predicated region
    $region42: #{adaptor_forward.3} parent=1 // pred_check
      _
    $region43: #{adaptor_forward.3} parent=1 // pred_check_branch
      %494 = sbr.rel (0) target = $region45
    $region44: #{adaptor_forward.3} parent=1 // pred_region
      %496 = dma.done [#allocation4], 16
    $region45: #{adaptor_forward.3} parent=1 // pred_fallthru
      _
    %497 = vsyncpa [#allocation4], 1

// kernel: adaptor_forward.2
$region0: #{adaptor_forward.2}
  #allocation0 [shape = 'u32[]', space=smem, size = 0x4, offset = 0x4, fixed_abs, tag = 'smem constant byte address 0x4 - core index']
  #allocation1 [shape = 'u32[72,128]{1,0:T(1,128)}', space=vmem, size = 0x9000, scoped, tag = 'internal scratch']
  #allocation2 [shape = 'f32[512,32]{1,0:T(8,128)}', space=vmem, size = 0x40000, scoped, tag = 'scratch operand']
  #allocation3 [shape = 'f32[512,1]{1,0:T(8,128)}', space=vmem, size = 0x40000, scoped, tag = 'scratch operand']
  %s0 = inlined_call_operand.vmem [shape: s8[512,512], index: 0, kind: input, shape index: {}]
  %s1 = inlined_call_operand.vmem [shape: bf16[512,32], index: 1, kind: input, shape index: {}]
  %s2 = inlined_call_operand.vmem [shape: bf16[32,32], index: 2, kind: input, shape index: {}]
  %s3 = inlined_call_operand.vmem [shape: bf16[32,32], index: 3, kind: input, shape index: {}]
  %s4 = inlined_call_operand.vmem [shape: bf16[512,32], index: 4, kind: output, shape index: {0}]
  %s5 = inlined_call_operand.vmem [shape: f32[512,1], index: 5, kind: output, shape index: {1}]
  %6 = xla_tuple %s4, %s5
  %s7 = sld [smem:[#allocation0]]
  $region42: #{adaptor_forward.2} parent=0
    _
  %s9 = ssub.s32 1, %s7
  %s10 = scalar_select 0, %s9, %s7
  // Predicated region
  $region2: #{adaptor_forward.2} parent=0 // pred_check
    _
  $region3: #{adaptor_forward.2} parent=0 // pred_check_branch
    %12 = sbr.rel (0) target = $region5
  $region4: #{adaptor_forward.2} parent=0 // pred_region
    _
  $region5: #{adaptor_forward.2} parent=0 // pred_fallthru
    _
  // Predicated region
  $region6: #{adaptor_forward.2} parent=0 // pred_check
    _
  $region7: #{adaptor_forward.2} parent=0 // pred_check_branch
    %14 = sbr.rel (0) target = $region9
  $region8: #{adaptor_forward.2} parent=0 // pred_region
    _
  $region9: #{adaptor_forward.2} parent=0 // pred_fallthru
    _
  // Predicated region
  $region10: #{adaptor_forward.2} parent=0 // pred_check
    _
  $region11: #{adaptor_forward.2} parent=0 // pred_check_branch
    %16 = sbr.rel (0) target = $region13
  $region12: #{adaptor_forward.2} parent=0 // pred_region
    _
  $region13: #{adaptor_forward.2} parent=0 // pred_fallthru
    _
  // Predicated region
  $region14: #{adaptor_forward.2} parent=0 // pred_check
    _
  $region15: #{adaptor_forward.2} parent=0 // pred_check_branch
    %18 = sbr.rel (0) target = $region17
  $region16: #{adaptor_forward.2} parent=0 // pred_region
    _
  $region17: #{adaptor_forward.2} parent=0 // pred_fallthru
    _
  %p20 = scmp.eq.s32.totalorder 0, 0
  // Predicated region
  $region18: #{adaptor_forward.2} parent=0 // pred_check
    %p21 = pneg %p20
  $region19: #{adaptor_forward.2} parent=0 // pred_check_branch
    %23 = sbr.rel (%p21) target = $region21
  $region20: #{adaptor_forward.2} parent=0 // pred_region
    %vm24 = vcmask 261120
    %25 = vst.msk [vmem:[#allocation2] sm:$0xff] %vm24, 0.0
    %26 = vst.msk [vmem:[#allocation2 + $0x8] sm:$0xff] %vm24, 0.0
    %27 = vst.msk [vmem:[#allocation2 + $0x10] sm:$0xff] %vm24, 0.0
    %28 = vst.msk [vmem:[#allocation2 + $0x18] sm:$0xff] %vm24, 0.0
    %29 = vst.msk [vmem:[#allocation2 + $0x20] sm:$0xff] %vm24, 0.0
    %30 = vst.msk [vmem:[#allocation2 + $0x28] sm:$0xff] %vm24, 0.0
    %31 = vst.msk [vmem:[#allocation2 + $0x30] sm:$0xff] %vm24, 0.0
    %32 = vst.msk [vmem:[#allocation2 + $0x38] sm:$0xff] %vm24, 0.0
    %33 = vst.msk [vmem:[#allocation2 + $0x40] sm:$0xff] %vm24, 0.0
    %34 = vst.msk [vmem:[#allocation2 + $0x48] sm:$0xff] %vm24, 0.0
    %35 = vst.msk [vmem:[#allocation2 + $0x50] sm:$0xff] %vm24, 0.0
    %36 = vst.msk [vmem:[#allocation2 + $0x58] sm:$0xff] %vm24, 0.0
    %37 = vst.msk [vmem:[#allocation2 + $0x60] sm:$0xff] %vm24, 0.0
    %38 = vst.msk [vmem:[#allocation2 + $0x68] sm:$0xff] %vm24, 0.0
    %39 = vst.msk [vmem:[#allocation2 + $0x70] sm:$0xff] %vm24, 0.0
    %40 = vst.msk [vmem:[#allocation2 + $0x78] sm:$0xff] %vm24, 0.0
    %41 = vst.msk [vmem:[#allocation2 + $0x80] sm:$0xff] %vm24, 0.0
    %42 = vst.msk [vmem:[#allocation2 + $0x88] sm:$0xff] %vm24, 0.0
    %43 = vst.msk [vmem:[#allocation2 + $0x90] sm:$0xff] %vm24, 0.0
    %44 = vst.msk [vmem:[#allocation2 + $0x98] sm:$0xff] %vm24, 0.0
    %45 = vst.msk [vmem:[#allocation2 + $0xa0] sm:$0xff] %vm24, 0.0
    %46 = vst.msk [vmem:[#allocation2 + $0xa8] sm:$0xff] %vm24, 0.0
    %47 = vst.msk [vmem:[#allocation2 + $0xb0] sm:$0xff] %vm24, 0.0
    %48 = vst.msk [vmem:[#allocation2 + $0xb8] sm:$0xff] %vm24, 0.0
    %49 = vst.msk [vmem:[#allocation2 + $0xc0] sm:$0xff] %vm24, 0.0
    %50 = vst.msk [vmem:[#allocation2 + $0xc8] sm:$0xff] %vm24, 0.0
    %51 = vst.msk [vmem:[#allocation2 + $0xd0] sm:$0xff] %vm24, 0.0
    %52 = vst.msk [vmem:[#allocation2 + $0xd8] sm:$0xff] %vm24, 0.0
    %53 = vst.msk [vmem:[#allocation2 + $0xe0] sm:$0xff] %vm24, 0.0
    %54 = vst.msk [vmem:[#allocation2 + $0xe8] sm:$0xff] %vm24, 0.0
    %55 = vst.msk [vmem:[#allocation2 + $0xf0] sm:$0xff] %vm24, 0.0
    %56 = vst.msk [vmem:[#allocation2 + $0xf8] sm:$0xff] %vm24, 0.0
    %57 = vst.msk [vmem:[#allocation2 + $0x100] sm:$0xff] %vm24, 0.0
    %58 = vst.msk [vmem:[#allocation2 + $0x108] sm:$0xff] %vm24, 0.0
    %59 = vst.msk [vmem:[#allocation2 + $0x110] sm:$0xff] %vm24, 0.0
    %60 = vst.msk [vmem:[#allocation2 + $0x118] sm:$0xff] %vm24, 0.0
    %61 = vst.msk [vmem:[#allocation2 + $0x120] sm:$0xff] %vm24, 0.0
    %62 = vst.msk [vmem:[#allocation2 + $0x128] sm:$0xff] %vm24, 0.0
    %63 = vst.msk [vmem:[#allocation2 + $0x130] sm:$0xff] %vm24, 0.0
    %64 = vst.msk [vmem:[#allocation2 + $0x138] sm:$0xff] %vm24, 0.0
    %65 = vst.msk [vmem:[#allocation2 + $0x140] sm:$0xff] %vm24, 0.0
    %66 = vst.msk [vmem:[#allocation2 + $0x148] sm:$0xff] %vm24, 0.0
    %67 = vst.msk [vmem:[#allocation2 + $0x150] sm:$0xff] %vm24, 0.0
    %68 = vst.msk [vmem:[#allocation2 + $0x158] sm:$0xff] %vm24, 0.0
    %69 = vst.msk [vmem:[#allocation2 + $0x160] sm:$0xff] %vm24, 0.0
    %70 = vst.msk [vmem:[#allocation2 + $0x168] sm:$0xff] %vm24, 0.0
    %71 = vst.msk [vmem:[#allocation2 + $0x170] sm:$0xff] %vm24, 0.0
    %72 = vst.msk [vmem:[#allocation2 + $0x178] sm:$0xff] %vm24, 0.0
    %73 = vst.msk [vmem:[#allocation2 + $0x180] sm:$0xff] %vm24, 0.0
    %74 = vst.msk [vmem:[#allocation2 + $0x188] sm:$0xff] %vm24, 0.0
    %75 = vst.msk [vmem:[#allocation2 + $0x190] sm:$0xff] %vm24, 0.0
    %76 = vst.msk [vmem:[#allocation2 + $0x198] sm:$0xff] %vm24, 0.0
    %77 = vst.msk [vmem:[#allocation2 + $0x1a0] sm:$0xff] %vm24, 0.0
    %78 = vst.msk [vmem:[#allocation2 + $0x1a8] sm:$0xff] %vm24, 0.0
    %79 = vst.msk [vmem:[#allocation2 + $0x1b0] sm:$0xff] %vm24, 0.0
    %80 = vst.msk [vmem:[#allocation2 + $0x1b8] sm:$0xff] %vm24, 0.0
    %81 = vst.msk [vmem:[#allocation2 + $0x1c0] sm:$0xff] %vm24, 0.0
    %82 = vst.msk [vmem:[#allocation2 + $0x1c8] sm:$0xff] %vm24, 0.0
    %83 = vst.msk [vmem:[#allocation2 + $0x1d0] sm:$0xff] %vm24, 0.0
    %84 = vst.msk [vmem:[#allocation2 + $0x1d8] sm:$0xff] %vm24, 0.0
    %85 = vst.msk [vmem:[#allocation2 + $0x1e0] sm:$0xff] %vm24, 0.0
    %86 = vst.msk [vmem:[#allocation2 + $0x1e8] sm:$0xff] %vm24, 0.0
    %87 = vst.msk [vmem:[#allocation2 + $0x1f0] sm:$0xff] %vm24, 0.0
    %88 = vst.msk [vmem:[#allocation2 + $0x1f8] sm:$0xff] %vm24, 0.0
    %vm89 = vcmask 7168
    %90 = vst.msk [vmem:[#allocation3] sm:$0xff] %vm89, 0.0
    %91 = vst.msk [vmem:[#allocation3 + $0x8] sm:$0xff] %vm89, 0.0
    %92 = vst.msk [vmem:[#allocation3 + $0x10] sm:$0xff] %vm89, 0.0
    %93 = vst.msk [vmem:[#allocation3 + $0x18] sm:$0xff] %vm89, 0.0
    %94 = vst.msk [vmem:[#allocation3 + $0x20] sm:$0xff] %vm89, 0.0
    %95 = vst.msk [vmem:[#allocation3 + $0x28] sm:$0xff] %vm89, 0.0
    %96 = vst.msk [vmem:[#allocation3 + $0x30] sm:$0xff] %vm89, 0.0
    %97 = vst.msk [vmem:[#allocation3 + $0x38] sm:$0xff] %vm89, 0.0
    %98 = vst.msk [vmem:[#allocation3 + $0x40] sm:$0xff] %vm89, 0.0
    %99 = vst.msk [vmem:[#allocation3 + $0x48] sm:$0xff] %vm89, 0.0
    %100 = vst.msk [vmem:[#allocation3 + $0x50] sm:$0xff] %vm89, 0.0
    %101 = vst.msk [vmem:[#allocation3 + $0x58] sm:$0xff] %vm89, 0.0
    %102 = vst.msk [vmem:[#allocation3 + $0x60] sm:$0xff] %vm89, 0.0
    %103 = vst.msk [vmem:[#allocation3 + $0x68] sm:$0xff] %vm89, 0.0
    %104 = vst.msk [vmem:[#allocation3 + $0x70] sm:$0xff] %vm89, 0.0
    %105 = vst.msk [vmem:[#allocation3 + $0x78] sm:$0xff] %vm89, 0.0
    %106 = vst.msk [vmem:[#allocation3 + $0x80] sm:$0xff] %vm89, 0.0
    %107 = vst.msk [vmem:[#allocation3 + $0x88] sm:$0xff] %vm89, 0.0
    %108 = vst.msk [vmem:[#allocation3 + $0x90] sm:$0xff] %vm89, 0.0
    %109 = vst.msk [vmem:[#allocation3 + $0x98] sm:$0xff] %vm89, 0.0
    %110 = vst.msk [vmem:[#allocation3 + $0xa0] sm:$0xff] %vm89, 0.0
    %111 = vst.msk [vmem:[#allocation3 + $0xa8] sm:$0xff] %vm89, 0.0
    %112 = vst.msk [vmem:[#allocation3 + $0xb0] sm:$0xff] %vm89, 0.0
    %113 = vst.msk [vmem:[#allocation3 + $0xb8] sm:$0xff] %vm89, 0.0
    %114 = vst.msk [vmem:[#allocation3 + $0xc0] sm:$0xff] %vm89, 0.0
    %115 = vst.msk [vmem:[#allocation3 + $0xc8] sm:$0xff] %vm89, 0.0
    %116 = vst.msk [vmem:[#allocation3 + $0xd0] sm:$0xff] %vm89, 0.0
    %117 = vst.msk [vmem:[#allocation3 + $0xd8] sm:$0xff] %vm89, 0.0
    %118 = vst.msk [vmem:[#allocation3 + $0xe0] sm:$0xff] %vm89, 0.0
    %119 = vst.msk [vmem:[#allocation3 + $0xe8] sm:$0xff] %vm89, 0.0
    %120 = vst.msk [vmem:[#allocation3 + $0xf0] sm:$0xff] %vm89, 0.0
    %121 = vst.msk [vmem:[#allocation3 + $0xf8] sm:$0xff] %vm89, 0.0
    %122 = vst.msk [vmem:[#allocation3 + $0x100] sm:$0xff] %vm89, 0.0
    %123 = vst.msk [vmem:[#allocation3 + $0x108] sm:$0xff] %vm89, 0.0
    %124 = vst.msk [vmem:[#allocation3 + $0x110] sm:$0xff] %vm89, 0.0
    %125 = vst.msk [vmem:[#allocation3 + $0x118] sm:$0xff] %vm89, 0.0
    %126 = vst.msk [vmem:[#allocation3 + $0x120] sm:$0xff] %vm89, 0.0
    %127 = vst.msk [vmem:[#allocation3 + $0x128] sm:$0xff] %vm89, 0.0
    %128 = vst.msk [vmem:[#allocation3 + $0x130] sm:$0xff] %vm89, 0.0
    %129 = vst.msk [vmem:[#allocation3 + $0x138] sm:$0xff] %vm89, 0.0
    %130 = vst.msk [vmem:[#allocation3 + $0x140] sm:$0xff] %vm89, 0.0
    %131 = vst.msk [vmem:[#allocation3 + $0x148] sm:$0xff] %vm89, 0.0
    %132 = vst.msk [vmem:[#allocation3 + $0x150] sm:$0xff] %vm89, 0.0
    %133 = vst.msk [vmem:[#allocation3 + $0x158] sm:$0xff] %vm89, 0.0
    %134 = vst.msk [vmem:[#allocation3 + $0x160] sm:$0xff] %vm89, 0.0
    %135 = vst.msk [vmem:[#allocation3 + $0x168] sm:$0xff] %vm89, 0.0
    %136 = vst.msk [vmem:[#allocation3 + $0x170] sm:$0xff] %vm89, 0.0
    %137 = vst.msk [vmem:[#allocation3 + $0x178] sm:$0xff] %vm89, 0.0
    %138 = vst.msk [vmem:[#allocation3 + $0x180] sm:$0xff] %vm89, 0.0
    %139 = vst.msk [vmem:[#allocation3 + $0x188] sm:$0xff] %vm89, 0.0
    %140 = vst.msk [vmem:[#allocation3 + $0x190] sm:$0xff] %vm89, 0.0
    %141 = vst.msk [vmem:[#allocation3 + $0x198] sm:$0xff] %vm89, 0.0
    %142 = vst.msk [vmem:[#allocation3 + $0x1a0] sm:$0xff] %vm89, 0.0
    %143 = vst.msk [vmem:[#allocation3 + $0x1a8] sm:$0xff] %vm89, 0.0
    %144 = vst.msk [vmem:[#allocation3 + $0x1b0] sm:$0xff] %vm89, 0.0
    %145 = vst.msk [vmem:[#allocation3 + $0x1b8] sm:$0xff] %vm89, 0.0
    %146 = vst.msk [vmem:[#allocation3 + $0x1c0] sm:$0xff] %vm89, 0.0
    %147 = vst.msk [vmem:[#allocation3 + $0x1c8] sm:$0xff] %vm89, 0.0
    %148 = vst.msk [vmem:[#allocation3 + $0x1d0] sm:$0xff] %vm89, 0.0
    %149 = vst.msk [vmem:[#allocation3 + $0x1d8] sm:$0xff] %vm89, 0.0
    %150 = vst.msk [vmem:[#allocation3 + $0x1e0] sm:$0xff] %vm89, 0.0
    %151 = vst.msk [vmem:[#allocation3 + $0x1e8] sm:$0xff] %vm89, 0.0
    %152 = vst.msk [vmem:[#allocation3 + $0x1f0] sm:$0xff] %vm89, 0.0
    %153 = vst.msk [vmem:[#allocation3 + $0x1f8] sm:$0xff] %vm89, 0.0
  $region21: #{adaptor_forward.2} parent=0 // pred_fallthru
    _
  %v154 = vld [vmem:[%s0] sm:$0xff]
  %v155 = vld [vmem:[%s0 + $0x8] sm:$0xff]
  %v156 = vld [vmem:[%s0 + $0x10] sm:$0xff]
  %v157 = vld [vmem:[%s0 + $0x18] sm:$0xff]
  %v158 = vld [vmem:[%s0 + $0x20] sm:$0xff]
  %v159 = vld [vmem:[%s0 + $0x28] sm:$0xff]
  %v160 = vld [vmem:[%s0 + $0x30] sm:$0xff]
  %v161 = vld [vmem:[%s0 + $0x38] sm:$0xff]
  %v162 = vld [vmem:[%s0 + $0x40] sm:$0xff]
  %v163 = vld [vmem:[%s0 + $0x48] sm:$0xff]
  %v164 = vld [vmem:[%s0 + $0x50] sm:$0xff]
  %v165 = vld [vmem:[%s0 + $0x58] sm:$0xff]
  %v166 = vld [vmem:[%s0 + $0x60] sm:$0xff]
  %v167 = vld [vmem:[%s0 + $0x68] sm:$0xff]
  %v168 = vld [vmem:[%s0 + $0x70] sm:$0xff]
  %v169 = vld [vmem:[%s0 + $0x78] sm:$0xff]
  %v170 = vld [vmem:[%s0 + $0x80] sm:$0xff]
  %v171 = vld [vmem:[%s0 + $0x88] sm:$0xff]
  %v172 = vld [vmem:[%s0 + $0x90] sm:$0xff]
  %v173 = vld [vmem:[%s0 + $0x98] sm:$0xff]
  %v174 = vld [vmem:[%s0 + $0xa0] sm:$0xff]
  %v175 = vld [vmem:[%s0 + $0xa8] sm:$0xff]
  %v176 = vld [vmem:[%s0 + $0xb0] sm:$0xff]
  %v177 = vld [vmem:[%s0 + $0xb8] sm:$0xff]
  %v178 = vld [vmem:[%s0 + $0xc0] sm:$0xff]
  %v179 = vld [vmem:[%s0 + $0xc8] sm:$0xff]
  %v180 = vld [vmem:[%s0 + $0xd0] sm:$0xff]
  %v181 = vld [vmem:[%s0 + $0xd8] sm:$0xff]
  %v182 = vld [vmem:[%s0 + $0xe0] sm:$0xff]
  %v183 = vld [vmem:[%s0 + $0xe8] sm:$0xff]
  %v184 = vld [vmem:[%s0 + $0xf0] sm:$0xff]
  %v185 = vld [vmem:[%s0 + $0xf8] sm:$0xff]
  %v186 = vld [vmem:[%s0 + $0x100] sm:$0xff]
  %v187 = vld [vmem:[%s0 + $0x108] sm:$0xff]
  %v188 = vld [vmem:[%s0 + $0x110] sm:$0xff]
  %v189 = vld [vmem:[%s0 + $0x118] sm:$0xff]
  %v190 = vld [vmem:[%s0 + $0x120] sm:$0xff]
  %v191 = vld [vmem:[%s0 + $0x128] sm:$0xff]
  %v192 = vld [vmem:[%s0 + $0x130] sm:$0xff]
  %v193 = vld [vmem:[%s0 + $0x138] sm:$0xff]
  %v194 = vld [vmem:[%s0 + $0x140] sm:$0xff]
  %v195 = vld [vmem:[%s0 + $0x148] sm:$0xff]
  %v196 = vld [vmem:[%s0 + $0x150] sm:$0xff]
  %v197 = vld [vmem:[%s0 + $0x158] sm:$0xff]
  %v198 = vld [vmem:[%s0 + $0x160] sm:$0xff]
  %v199 = vld [vmem:[%s0 + $0x168] sm:$0xff]
  %v200 = vld [vmem:[%s0 + $0x170] sm:$0xff]
  %v201 = vld [vmem:[%s0 + $0x178] sm:$0xff]
  %v202 = vld [vmem:[%s0 + $0x180] sm:$0xff]
  %v203 = vld [vmem:[%s0 + $0x188] sm:$0xff]
  %v204 = vld [vmem:[%s0 + $0x190] sm:$0xff]
  %v205 = vld [vmem:[%s0 + $0x198] sm:$0xff]
  %v206 = vld [vmem:[%s0 + $0x1a0] sm:$0xff]
  %v207 = vld [vmem:[%s0 + $0x1a8] sm:$0xff]
  %v208 = vld [vmem:[%s0 + $0x1b0] sm:$0xff]
  %v209 = vld [vmem:[%s0 + $0x1b8] sm:$0xff]
  %v210 = vld [vmem:[%s0 + $0x1c0] sm:$0xff]
  %v211 = vld [vmem:[%s0 + $0x1c8] sm:$0xff]
  %v212 = vld [vmem:[%s0 + $0x1d0] sm:$0xff]
  %v213 = vld [vmem:[%s0 + $0x1d8] sm:$0xff]
  %v214 = vld [vmem:[%s0 + $0x1e0] sm:$0xff]
  %v215 = vld [vmem:[%s0 + $0x1e8] sm:$0xff]
  %v216 = vld [vmem:[%s0 + $0x1f0] sm:$0xff]
  %v217 = vld [vmem:[%s0 + $0x1f8] sm:$0xff]
  %v218 = vunpack.c.0.s8 %v154
  %v219 = vunpack.c.1.s8 %v154
  %v220 = vunpack.c.2.s8 %v154
  %v221 = vunpack.c.3.s8 %v154
  %v222 = vunpack.c.0.s8 %v155
  %v223 = vunpack.c.1.s8 %v155
  %v224 = vunpack.c.2.s8 %v155
  %v225 = vunpack.c.3.s8 %v155
  %v226 = vunpack.c.0.s8 %v156
  %v227 = vunpack.c.1.s8 %v156
  %v228 = vunpack.c.2.s8 %v156
  %v229 = vunpack.c.3.s8 %v156
  %v230 = vunpack.c.0.s8 %v157
  %v231 = vunpack.c.1.s8 %v157
  %v232 = vunpack.c.2.s8 %v157
  %v233 = vunpack.c.3.s8 %v157
  %v234 = vunpack.c.0.s8 %v158
  %v235 = vunpack.c.1.s8 %v158
  %v236 = vunpack.c.2.s8 %v158
  %v237 = vunpack.c.3.s8 %v158
  %v238 = vunpack.c.0.s8 %v159
  %v239 = vunpack.c.1.s8 %v159
  %v240 = vunpack.c.2.s8 %v159
  %v241 = vunpack.c.3.s8 %v159
  %v242 = vunpack.c.0.s8 %v160
  %v243 = vunpack.c.1.s8 %v160
  %v244 = vunpack.c.2.s8 %v160
  %v245 = vunpack.c.3.s8 %v160
  %v246 = vunpack.c.0.s8 %v161
  %v247 = vunpack.c.1.s8 %v161
  %v248 = vunpack.c.2.s8 %v161
  %v249 = vunpack.c.3.s8 %v161
  %v250 = vunpack.c.0.s8 %v162
  %v251 = vunpack.c.1.s8 %v162
  %v252 = vunpack.c.2.s8 %v162
  %v253 = vunpack.c.3.s8 %v162
  %v254 = vunpack.c.0.s8 %v163
  %v255 = vunpack.c.1.s8 %v163
  %v256 = vunpack.c.2.s8 %v163
  %v257 = vunpack.c.3.s8 %v163
  %v258 = vunpack.c.0.s8 %v164
  %v259 = vunpack.c.1.s8 %v164
  %v260 = vunpack.c.2.s8 %v164
  %v261 = vunpack.c.3.s8 %v164
  %v262 = vunpack.c.0.s8 %v165
  %v263 = vunpack.c.1.s8 %v165
  %v264 = vunpack.c.2.s8 %v165
  %v265 = vunpack.c.3.s8 %v165
  %v266 = vunpack.c.0.s8 %v166
  %v267 = vunpack.c.1.s8 %v166
  %v268 = vunpack.c.2.s8 %v166
  %v269 = vunpack.c.3.s8 %v166
  %v270 = vunpack.c.0.s8 %v167
  %v271 = vunpack.c.1.s8 %v167
  %v272 = vunpack.c.2.s8 %v167
  %v273 = vunpack.c.3.s8 %v167
  %v274 = vunpack.c.0.s8 %v168
  %v275 = vunpack.c.1.s8 %v168
  %v276 = vunpack.c.2.s8 %v168
  %v277 = vunpack.c.3.s8 %v168
  %v278 = vunpack.c.0.s8 %v169
  %v279 = vunpack.c.1.s8 %v169
  %v280 = vunpack.c.2.s8 %v169
  %v281 = vunpack.c.3.s8 %v169
  %v282 = vunpack.c.0.s8 %v170
  %v283 = vunpack.c.1.s8 %v170
  %v284 = vunpack.c.2.s8 %v170
  %v285 = vunpack.c.3.s8 %v170
  %v286 = vunpack.c.0.s8 %v171
  %v287 = vunpack.c.1.s8 %v171
  %v288 = vunpack.c.2.s8 %v171
  %v289 = vunpack.c.3.s8 %v171
  %v290 = vunpack.c.0.s8 %v172
  %v291 = vunpack.c.1.s8 %v172
  %v292 = vunpack.c.2.s8 %v172
  %v293 = vunpack.c.3.s8 %v172
  %v294 = vunpack.c.0.s8 %v173
  %v295 = vunpack.c.1.s8 %v173
  %v296 = vunpack.c.2.s8 %v173
  %v297 = vunpack.c.3.s8 %v173
  %v298 = vunpack.c.0.s8 %v174
  %v299 = vunpack.c.1.s8 %v174
  %v300 = vunpack.c.2.s8 %v174
  %v301 = vunpack.c.3.s8 %v174
  %v302 = vunpack.c.0.s8 %v175
  %v303 = vunpack.c.1.s8 %v175
  %v304 = vunpack.c.2.s8 %v175
  %v305 = vunpack.c.3.s8 %v175
  %v306 = vunpack.c.0.s8 %v176
  %v307 = vunpack.c.1.s8 %v176
  %v308 = vunpack.c.2.s8 %v176
  %v309 = vunpack.c.3.s8 %v176
  %v310 = vunpack.c.0.s8 %v177
  %v311 = vunpack.c.1.s8 %v177
  %v312 = vunpack.c.2.s8 %v177
  %v313 = vunpack.c.3.s8 %v177
  %v314 = vunpack.c.0.s8 %v178
  %v315 = vunpack.c.1.s8 %v178
  %v316 = vunpack.c.2.s8 %v178
  %v317 = vunpack.c.3.s8 %v178
  %v318 = vunpack.c.0.s8 %v179
  %v319 = vunpack.c.1.s8 %v179
  %v320 = vunpack.c.2.s8 %v179
  %v321 = vunpack.c.3.s8 %v179
  %v322 = vunpack.c.0.s8 %v180
  %v323 = vunpack.c.1.s8 %v180
  %v324 = vunpack.c.2.s8 %v180
  %v325 = vunpack.c.3.s8 %v180
  %v326 = vunpack.c.0.s8 %v181
  %v327 = vunpack.c.1.s8 %v181
  %v328 = vunpack.c.2.s8 %v181
  %v329 = vunpack.c.3.s8 %v181
  %v330 = vunpack.c.0.s8 %v182
  %v331 = vunpack.c.1.s8 %v182
  %v332 = vunpack.c.2.s8 %v182
  %v333 = vunpack.c.3.s8 %v182
  %v334 = vunpack.c.0.s8 %v183
  %v335 = vunpack.c.1.s8 %v183
  %v336 = vunpack.c.2.s8 %v183
  %v337 = vunpack.c.3.s8 %v183
  %v338 = vunpack.c.0.s8 %v184
  %v339 = vunpack.c.1.s8 %v184
  %v340 = vunpack.c.2.s8 %v184
  %v341 = vunpack.c.3.s8 %v184
  %v342 = vunpack.c.0.s8 %v185
  %v343 = vunpack.c.1.s8 %v185
  %v344 = vunpack.c.2.s8 %v185
  %v345 = vunpack.c.3.s8 %v185
  %v346 = vunpack.c.0.s8 %v186
  %v347 = vunpack.c.1.s8 %v186
  %v348 = vunpack.c.2.s8 %v186
  %v349 = vunpack.c.3.s8 %v186
  %v350 = vunpack.c.0.s8 %v187
  %v351 = vunpack.c.1.s8 %v187
  %v352 = vunpack.c.2.s8 %v187
  %v353 = vunpack.c.3.s8 %v187
  %v354 = vunpack.c.0.s8 %v188
  %v355 = vunpack.c.1.s8 %v188
  %v356 = vunpack.c.2.s8 %v188
  %v357 = vunpack.c.3.s8 %v188
  %v358 = vunpack.c.0.s8 %v189
  %v359 = vunpack.c.1.s8 %v189
  %v360 = vunpack.c.2.s8 %v189
  %v361 = vunpack.c.3.s8 %v189
  %v362 = vunpack.c.0.s8 %v190
  %v363 = vunpack.c.1.s8 %v190
  %v364 = vunpack.c.2.s8 %v190
  %v365 = vunpack.c.3.s8 %v190
  %v366 = vunpack.c.0.s8 %v191
  %v367 = vunpack.c.1.s8 %v191
  %v368 = vunpack.c.2.s8 %v191
  %v369 = vunpack.c.3.s8 %v191
  %v370 = vunpack.c.0.s8 %v192
  %v371 = vunpack.c.1.s8 %v192
  %v372 = vunpack.c.2.s8 %v192
  %v373 = vunpack.c.3.s8 %v192
  %v374 = vunpack.c.0.s8 %v193
  %v375 = vunpack.c.1.s8 %v193
  %v376 = vunpack.c.2.s8 %v193
  %v377 = vunpack.c.3.s8 %v193
  %v378 = vunpack.c.0.s8 %v194
  %v379 = vunpack.c.1.s8 %v194
  %v380 = vunpack.c.2.s8 %v194
  %v381 = vunpack.c.3.s8 %v194
  %v382 = vunpack.c.0.s8 %v195
  %v383 = vunpack.c.1.s8 %v195
  %v384 = vunpack.c.2.s8 %v195
  %v385 = vunpack.c.3.s8 %v195
  %v386 = vunpack.c.0.s8 %v196
  %v387 = vunpack.c.1.s8 %v196
  %v388 = vunpack.c.2.s8 %v196
  %v389 = vunpack.c.3.s8 %v196
  %v390 = vunpack.c.0.s8 %v197
  %v391 = vunpack.c.1.s8 %v197
  %v392 = vunpack.c.2.s8 %v197
  %v393 = vunpack.c.3.s8 %v197
  %v394 = vunpack.c.0.s8 %v198
  %v395 = vunpack.c.1.s8 %v198
  %v396 = vunpack.c.2.s8 %v198
  %v397 = vunpack.c.3.s8 %v198
  %v398 = vunpack.c.0.s8 %v199
  %v399 = vunpack.c.1.s8 %v199
  %v400 = vunpack.c.2.s8 %v199
  %v401 = vunpack.c.3.s8 %v199
  %v402 = vunpack.c.0.s8 %v200
  %v403 = vunpack.c.1.s8 %v200
  %v404 = vunpack.c.2.s8 %v200
  %v405 = vunpack.c.3.s8 %v200
  %v406 = vunpack.c.0.s8 %v201
  %v407 = vunpack.c.1.s8 %v201
  %v408 = vunpack.c.2.s8 %v201
  %v409 = vunpack.c.3.s8 %v201
  %v410 = vunpack.c.0.s8 %v202
  %v411 = vunpack.c.1.s8 %v202
  %v412 = vunpack.c.2.s8 %v202
  %v413 = vunpack.c.3.s8 %v202
  %v414 = vunpack.c.0.s8 %v203
  %v415 = vunpack.c.1.s8 %v203
  %v416 = vunpack.c.2.s8 %v203
  %v417 = vunpack.c.3.s8 %v203
  %v418 = vunpack.c.0.s8 %v204
  %v419 = vunpack.c.1.s8 %v204
  %v420 = vunpack.c.2.s8 %v204
  %v421 = vunpack.c.3.s8 %v204
  %v422 = vunpack.c.0.s8 %v205
  %v423 = vunpack.c.1.s8 %v205
  %v424 = vunpack.c.2.s8 %v205
  %v425 = vunpack.c.3.s8 %v205
  %v426 = vunpack.c.0.s8 %v206
  %v427 = vunpack.c.1.s8 %v206
  %v428 = vunpack.c.2.s8 %v206
  %v429 = vunpack.c.3.s8 %v206
  %v430 = vunpack.c.0.s8 %v207
  %v431 = vunpack.c.1.s8 %v207
  %v432 = vunpack.c.2.s8 %v207
  %v433 = vunpack.c.3.s8 %v207
  %v434 = vunpack.c.0.s8 %v208
  %v435 = vunpack.c.1.s8 %v208
  %v436 = vunpack.c.2.s8 %v208
  %v437 = vunpack.c.3.s8 %v208
  %v438 = vunpack.c.0.s8 %v209
  %v439 = vunpack.c.1.s8 %v209
  %v440 = vunpack.c.2.s8 %v209
  %v441 = vunpack.c.3.s8 %v209
  %v442 = vunpack.c.0.s8 %v210
  %v443 = vunpack.c.1.s8 %v210
  %v444 = vunpack.c.2.s8 %v210
  %v445 = vunpack.c.3.s8 %v210
  %v446 = vunpack.c.0.s8 %v211
  %v447 = vunpack.c.1.s8 %v211
  %v448 = vunpack.c.2.s8 %v211
  %v449 = vunpack.c.3.s8 %v211
  %v450 = vunpack.c.0.s8 %v212
  %v451 = vunpack.c.1.s8 %v212
  %v452 = vunpack.c.2.s8 %v212
  %v453 = vunpack.c.3.s8 %v212
  %v454 = vunpack.c.0.s8 %v213
  %v455 = vunpack.c.1.s8 %v213
  %v456 = vunpack.c.2.s8 %v213
  %v457 = vunpack.c.3.s8 %v213
  %v458 = vunpack.c.0.s8 %v214
  %v459 = vunpack.c.1.s8 %v214
  %v460 = vunpack.c.2.s8 %v214
  %v461 = vunpack.c.3.s8 %v214
  %v462 = vunpack.c.0.s8 %v215
  %v463 = vunpack.c.1.s8 %v215
  %v464 = vunpack.c.2.s8 %v215
  %v465 = vunpack.c.3.s8 %v215
  %v466 = vunpack.c.0.s8 %v216
  %v467 = vunpack.c.1.s8 %v216
  %v468 = vunpack.c.2.s8 %v216
  %v469 = vunpack.c.3.s8 %v216
  %v470 = vunpack.c.0.s8 %v217
  %v471 = vunpack.c.1.s8 %v217
  %v472 = vunpack.c.2.s8 %v217
  %v473 = vunpack.c.3.s8 %v217
  %v474 = vcvt.s32.f32 %v218
  %v475 = vcvt.s32.f32 %v219
  %v476 = vcvt.s32.f32 %v220
  %v477 = vcvt.s32.f32 %v221
  %v478 = vcvt.s32.f32 %v222
  %v479 = vcvt.s32.f32 %v223
  %v480 = vcvt.s32.f32 %v224
  %v481 = vcvt.s32.f32 %v225
  %v482 = vcvt.s32.f32 %v226
  %v483 = vcvt.s32.f32 %v227
  %v484 = vcvt.s32.f32 %v228
  %v485 = vcvt.s32.f32 %v229
  %v486 = vcvt.s32.f32 %v230
  %v487 = vcvt.s32.f32 %v231
  %v488 = vcvt.s32.f32 %v232
  %v489 = vcvt.s32.f32 %v233
  %v490 = vcvt.s32.f32 %v234
  %v491 = vcvt.s32.f32 %v235
  %v492 = vcvt.s32.f32 %v236
  %v493 = vcvt.s32.f32 %v237
  %v494 = vcvt.s32.f32 %v238
  %v495 = vcvt.s32.f32 %v239
  %v496 = vcvt.s32.f32 %v240
  %v497 = vcvt.s32.f32 %v241
  %v498 = vcvt.s32.f32 %v242
  %v499 = vcvt.s32.f32 %v243
  %v500 = vcvt.s32.f32 %v244
  %v501 = vcvt.s32.f32 %v245
  %v502 = vcvt.s32.f32 %v246
  %v503 = vcvt.s32.f32 %v247
  %v504 = vcvt.s32.f32 %v248
  %v505 = vcvt.s32.f32 %v249
  %v506 = vcvt.s32.f32 %v250
  %v507 = vcvt.s32.f32 %v251
  %v508 = vcvt.s32.f32 %v252
  %v509 = vcvt.s32.f32 %v253
  %v510 = vcvt.s32.f32 %v254
  %v511 = vcvt.s32.f32 %v255
  %v512 = vcvt.s32.f32 %v256
  %v513 = vcvt.s32.f32 %v257
  %v514 = vcvt.s32.f32 %v258
  %v515 = vcvt.s32.f32 %v259
  %v516 = vcvt.s32.f32 %v260
  %v517 = vcvt.s32.f32 %v261
  %v518 = vcvt.s32.f32 %v262
  %v519 = vcvt.s32.f32 %v263
  %v520 = vcvt.s32.f32 %v264
  %v521 = vcvt.s32.f32 %v265
  %v522 = vcvt.s32.f32 %v266
  %v523 = vcvt.s32.f32 %v267
  %v524 = vcvt.s32.f32 %v268
  %v525 = vcvt.s32.f32 %v269
  %v526 = vcvt.s32.f32 %v270
  %v527 = vcvt.s32.f32 %v271
  %v528 = vcvt.s32.f32 %v272
  %v529 = vcvt.s32.f32 %v273
  %v530 = vcvt.s32.f32 %v274
  %v531 = vcvt.s32.f32 %v275
  %v532 = vcvt.s32.f32 %v276
  %v533 = vcvt.s32.f32 %v277
  %v534 = vcvt.s32.f32 %v278
  %v535 = vcvt.s32.f32 %v279
  %v536 = vcvt.s32.f32 %v280
  %v537 = vcvt.s32.f32 %v281
  %v538 = vcvt.s32.f32 %v282
  %v539 = vcvt.s32.f32 %v283
  %v540 = vcvt.s32.f32 %v284
  %v541 = vcvt.s32.f32 %v285
  %v542 = vcvt.s32.f32 %v286
  %v543 = vcvt.s32.f32 %v287
  %v544 = vcvt.s32.f32 %v288
  %v545 = vcvt.s32.f32 %v289
  %v546 = vcvt.s32.f32 %v290
  %v547 = vcvt.s32.f32 %v291
  %v548 = vcvt.s32.f32 %v292
  %v549 = vcvt.s32.f32 %v293
  %v550 = vcvt.s32.f32 %v294
  %v551 = vcvt.s32.f32 %v295
  %v552 = vcvt.s32.f32 %v296
  %v553 = vcvt.s32.f32 %v297
  %v554 = vcvt.s32.f32 %v298
  %v555 = vcvt.s32.f32 %v299
  %v556 = vcvt.s32.f32 %v300
  %v557 = vcvt.s32.f32 %v301
  %v558 = vcvt.s32.f32 %v302
  %v559 = vcvt.s32.f32 %v303
  %v560 = vcvt.s32.f32 %v304
  %v561 = vcvt.s32.f32 %v305
  %v562 = vcvt.s32.f32 %v306
  %v563 = vcvt.s32.f32 %v307
  %v564 = vcvt.s32.f32 %v308
  %v565 = vcvt.s32.f32 %v309
  %v566 = vcvt.s32.f32 %v310
  %v567 = vcvt.s32.f32 %v311
  %v568 = vcvt.s32.f32 %v312
  %v569 = vcvt.s32.f32 %v313
  %v570 = vcvt.s32.f32 %v314
  %v571 = vcvt.s32.f32 %v315
  %v572 = vcvt.s32.f32 %v316
  %v573 = vcvt.s32.f32 %v317
  %v574 = vcvt.s32.f32 %v318
  %v575 = vcvt.s32.f32 %v319
  %v576 = vcvt.s32.f32 %v320
  %v577 = vcvt.s32.f32 %v321
  %v578 = vcvt.s32.f32 %v322
  %v579 = vcvt.s32.f32 %v323
  %v580 = vcvt.s32.f32 %v324
  %v581 = vcvt.s32.f32 %v325
  %v582 = vcvt.s32.f32 %v326
  %v583 = vcvt.s32.f32 %v327
  %v584 = vcvt.s32.f32 %v328
  %v585 = vcvt.s32.f32 %v329
  %v586 = vcvt.s32.f32 %v330
  %v587 = vcvt.s32.f32 %v331
  %v588 = vcvt.s32.f32 %v332
  %v589 = vcvt.s32.f32 %v333
  %v590 = vcvt.s32.f32 %v334
  %v591 = vcvt.s32.f32 %v335
  %v592 = vcvt.s32.f32 %v336
  %v593 = vcvt.s32.f32 %v337
  %v594 = vcvt.s32.f32 %v338
  %v595 = vcvt.s32.f32 %v339
  %v596 = vcvt.s32.f32 %v340
  %v597 = vcvt.s32.f32 %v341
  %v598 = vcvt.s32.f32 %v342
  %v599 = vcvt.s32.f32 %v343
  %v600 = vcvt.s32.f32 %v344
  %v601 = vcvt.s32.f32 %v345
  %v602 = vcvt.s32.f32 %v346
  %v603 = vcvt.s32.f32 %v347
  %v604 = vcvt.s32.f32 %v348
  %v605 = vcvt.s32.f32 %v349
  %v606 = vcvt.s32.f32 %v350
  %v607 = vcvt.s32.f32 %v351
  %v608 = vcvt.s32.f32 %v352
  %v609 = vcvt.s32.f32 %v353
  %v610 = vcvt.s32.f32 %v354
  %v611 = vcvt.s32.f32 %v355
  %v612 = vcvt.s32.f32 %v356
  %v613 = vcvt.s32.f32 %v357
  %v614 = vcvt.s32.f32 %v358
  %v615 = vcvt.s32.f32 %v359
  %v616 = vcvt.s32.f32 %v360
  %v617 = vcvt.s32.f32 %v361
  %v618 = vcvt.s32.f32 %v362
  %v619 = vcvt.s32.f32 %v363
  %v620 = vcvt.s32.f32 %v364
  %v621 = vcvt.s32.f32 %v365
  %v622 = vcvt.s32.f32 %v366
  %v623 = vcvt.s32.f32 %v367
  %v624 = vcvt.s32.f32 %v368
  %v625 = vcvt.s32.f32 %v369
  %v626 = vcvt.s32.f32 %v370
  %v627 = vcvt.s32.f32 %v371
  %v628 = vcvt.s32.f32 %v372
  %v629 = vcvt.s32.f32 %v373
  %v630 = vcvt.s32.f32 %v374
  %v631 = vcvt.s32.f32 %v375
  %v632 = vcvt.s32.f32 %v376
  %v633 = vcvt.s32.f32 %v377
  %v634 = vcvt.s32.f32 %v378
  %v635 = vcvt.s32.f32 %v379
  %v636 = vcvt.s32.f32 %v380
  %v637 = vcvt.s32.f32 %v381
  %v638 = vcvt.s32.f32 %v382
  %v639 = vcvt.s32.f32 %v383
  %v640 = vcvt.s32.f32 %v384
  %v641 = vcvt.s32.f32 %v385
  %v642 = vcvt.s32.f32 %v386
  %v643 = vcvt.s32.f32 %v387
  %v644 = vcvt.s32.f32 %v388
  %v645 = vcvt.s32.f32 %v389
  %v646 = vcvt.s32.f32 %v390
  %v647 = vcvt.s32.f32 %v391
  %v648 = vcvt.s32.f32 %v392
  %v649 = vcvt.s32.f32 %v393
  %v650 = vcvt.s32.f32 %v394
  %v651 = vcvt.s32.f32 %v395
  %v652 = vcvt.s32.f32 %v396
  %v653 = vcvt.s32.f32 %v397
  %v654 = vcvt.s32.f32 %v398
  %v655 = vcvt.s32.f32 %v399
  %v656 = vcvt.s32.f32 %v400
  %v657 = vcvt.s32.f32 %v401
  %v658 = vcvt.s32.f32 %v402
  %v659 = vcvt.s32.f32 %v403
  %v660 = vcvt.s32.f32 %v404
  %v661 = vcvt.s32.f32 %v405
  %v662 = vcvt.s32.f32 %v406
  %v663 = vcvt.s32.f32 %v407
  %v664 = vcvt.s32.f32 %v408
  %v665 = vcvt.s32.f32 %v409
  %v666 = vcvt.s32.f32 %v410
  %v667 = vcvt.s32.f32 %v411
  %v668 = vcvt.s32.f32 %v412
  %v669 = vcvt.s32.f32 %v413
  %v670 = vcvt.s32.f32 %v414
  %v671 = vcvt.s32.f32 %v415
  %v672 = vcvt.s32.f32 %v416
  %v673 = vcvt.s32.f32 %v417
  %v674 = vcvt.s32.f32 %v418
  %v675 = vcvt.s32.f32 %v419
  %v676 = vcvt.s32.f32 %v420
  %v677 = vcvt.s32.f32 %v421
  %v678 = vcvt.s32.f32 %v422
  %v679 = vcvt.s32.f32 %v423
  %v680 = vcvt.s32.f32 %v424
  %v681 = vcvt.s32.f32 %v425
  %v682 = vcvt.s32.f32 %v426
  %v683 = vcvt.s32.f32 %v427
  %v684 = vcvt.s32.f32 %v428
  %v685 = vcvt.s32.f32 %v429
  %v686 = vcvt.s32.f32 %v430
  %v687 = vcvt.s32.f32 %v431
  %v688 = vcvt.s32.f32 %v432
  %v689 = vcvt.s32.f32 %v433
  %v690 = vcvt.s32.f32 %v434
  %v691 = vcvt.s32.f32 %v435
  %v692 = vcvt.s32.f32 %v436
  %v693 = vcvt.s32.f32 %v437
  %v694 = vcvt.s32.f32 %v438
  %v695 = vcvt.s32.f32 %v439
  %v696 = vcvt.s32.f32 %v440
  %v697 = vcvt.s32.f32 %v441
  %v698 = vcvt.s32.f32 %v442
  %v699 = vcvt.s32.f32 %v443
  %v700 = vcvt.s32.f32 %v444
  %v701 = vcvt.s32.f32 %v445
  %v702 = vcvt.s32.f32 %v446
  %v703 = vcvt.s32.f32 %v447
  %v704 = vcvt.s32.f32 %v448
  %v705 = vcvt.s32.f32 %v449
  %v706 = vcvt.s32.f32 %v450
  %v707 = vcvt.s32.f32 %v451
  %v708 = vcvt.s32.f32 %v452
  %v709 = vcvt.s32.f32 %v453
  %v710 = vcvt.s32.f32 %v454
  %v711 = vcvt.s32.f32 %v455
  %v712 = vcvt.s32.f32 %v456
  %v713 = vcvt.s32.f32 %v457
  %v714 = vcvt.s32.f32 %v458
  %v715 = vcvt.s32.f32 %v459
  %v716 = vcvt.s32.f32 %v460
  %v717 = vcvt.s32.f32 %v461
  %v718 = vcvt.s32.f32 %v462
  %v719 = vcvt.s32.f32 %v463
  %v720 = vcvt.s32.f32 %v464
  %v721 = vcvt.s32.f32 %v465
  %v722 = vcvt.s32.f32 %v466
  %v723 = vcvt.s32.f32 %v467
  %v724 = vcvt.s32.f32 %v468
  %v725 = vcvt.s32.f32 %v469
  %v726 = vcvt.s32.f32 %v470
  %v727 = vcvt.s32.f32 %v471
  %v728 = vcvt.s32.f32 %v472
  %v729 = vcvt.s32.f32 %v473
  %v730 = vpack.c.bf16 %v478, %v474
  %v731 = vpack.c.bf16 %v479, %v475
  %v732 = vpack.c.bf16 %v480, %v476
  %v733 = vpack.c.bf16 %v481, %v477
  %v734 = vpack.c.bf16 %v486, %v482
  %v735 = vpack.c.bf16 %v487, %v483
  %v736 = vpack.c.bf16 %v488, %v484
  %v737 = vpack.c.bf16 %v489, %v485
  %v738 = vpack.c.bf16 %v494, %v490
  %v739 = vpack.c.bf16 %v495, %v491
  %v740 = vpack.c.bf16 %v496, %v492
  %v741 = vpack.c.bf16 %v497, %v493
  %v742 = vpack.c.bf16 %v502, %v498
  %v743 = vpack.c.bf16 %v503, %v499
  %v744 = vpack.c.bf16 %v504, %v500
  %v745 = vpack.c.bf16 %v505, %v501
  %v746 = vpack.c.bf16 %v510, %v506
  %v747 = vpack.c.bf16 %v511, %v507
  %v748 = vpack.c.bf16 %v512, %v508
  %v749 = vpack.c.bf16 %v513, %v509
  %v750 = vpack.c.bf16 %v518, %v514
  %v751 = vpack.c.bf16 %v519, %v515
  %v752 = vpack.c.bf16 %v520, %v516
  %v753 = vpack.c.bf16 %v521, %v517
  %v754 = vpack.c.bf16 %v526, %v522
  %v755 = vpack.c.bf16 %v527, %v523
  %v756 = vpack.c.bf16 %v528, %v524
  %v757 = vpack.c.bf16 %v529, %v525
  %v758 = vpack.c.bf16 %v534, %v530
  %v759 = vpack.c.bf16 %v535, %v531
  %v760 = vpack.c.bf16 %v536, %v532
  %v761 = vpack.c.bf16 %v537, %v533
  %v762 = vpack.c.bf16 %v542, %v538
  %v763 = vpack.c.bf16 %v543, %v539
  %v764 = vpack.c.bf16 %v544, %v540
  %v765 = vpack.c.bf16 %v545, %v541
  %v766 = vpack.c.bf16 %v550, %v546
  %v767 = vpack.c.bf16 %v551, %v547
  %v768 = vpack.c.bf16 %v552, %v548
  %v769 = vpack.c.bf16 %v553, %v549
  %v770 = vpack.c.bf16 %v558, %v554
  %v771 = vpack.c.bf16 %v559, %v555
  %v772 = vpack.c.bf16 %v560, %v556
  %v773 = vpack.c.bf16 %v561, %v557
  %v774 = vpack.c.bf16 %v566, %v562
  %v775 = vpack.c.bf16 %v567, %v563
  %v776 = vpack.c.bf16 %v568, %v564
  %v777 = vpack.c.bf16 %v569, %v565
  %v778 = vpack.c.bf16 %v574, %v570
  %v779 = vpack.c.bf16 %v575, %v571
  %v780 = vpack.c.bf16 %v576, %v572
  %v781 = vpack.c.bf16 %v577, %v573
  %v782 = vpack.c.bf16 %v582, %v578
  %v783 = vpack.c.bf16 %v583, %v579
  %v784 = vpack.c.bf16 %v584, %v580
  %v785 = vpack.c.bf16 %v585, %v581
  %v786 = vpack.c.bf16 %v590, %v586
  %v787 = vpack.c.bf16 %v591, %v587
  %v788 = vpack.c.bf16 %v592, %v588
  %v789 = vpack.c.bf16 %v593, %v589
  %v790 = vpack.c.bf16 %v598, %v594
  %v791 = vpack.c.bf16 %v599, %v595
  %v792 = vpack.c.bf16 %v600, %v596
  %v793 = vpack.c.bf16 %v601, %v597
  %v794 = vpack.c.bf16 %v606, %v602
  %v795 = vpack.c.bf16 %v607, %v603
  %v796 = vpack.c.bf16 %v608, %v604
  %v797 = vpack.c.bf16 %v609, %v605
  %v798 = vpack.c.bf16 %v614, %v610
  %v799 = vpack.c.bf16 %v615, %v611
  %v800 = vpack.c.bf16 %v616, %v612
  %v801 = vpack.c.bf16 %v617, %v613
  %v802 = vpack.c.bf16 %v622, %v618
  %v803 = vpack.c.bf16 %v623, %v619
  %v804 = vpack.c.bf16 %v624, %v620
  %v805 = vpack.c.bf16 %v625, %v621
  %v806 = vpack.c.bf16 %v630, %v626
  %v807 = vpack.c.bf16 %v631, %v627
  %v808 = vpack.c.bf16 %v632, %v628
  %v809 = vpack.c.bf16 %v633, %v629
  %v810 = vpack.c.bf16 %v638, %v634
  %v811 = vpack.c.bf16 %v639, %v635
  %v812 = vpack.c.bf16 %v640, %v636
  %v813 = vpack.c.bf16 %v641, %v637
  %v814 = vpack.c.bf16 %v646, %v642
  %v815 = vpack.c.bf16 %v647, %v643
  %v816 = vpack.c.bf16 %v648, %v644
  %v817 = vpack.c.bf16 %v649, %v645
  %v818 = vpack.c.bf16 %v654, %v650
  %v819 = vpack.c.bf16 %v655, %v651
  %v820 = vpack.c.bf16 %v656, %v652
  %v821 = vpack.c.bf16 %v657, %v653
  %v822 = vpack.c.bf16 %v662, %v658
  %v823 = vpack.c.bf16 %v663, %v659
  %v824 = vpack.c.bf16 %v664, %v660
  %v825 = vpack.c.bf16 %v665, %v661
  %v826 = vpack.c.bf16 %v670, %v666
  %v827 = vpack.c.bf16 %v671, %v667
  %v828 = vpack.c.bf16 %v672, %v668
  %v829 = vpack.c.bf16 %v673, %v669
  %v830 = vpack.c.bf16 %v678, %v674
  %v831 = vpack.c.bf16 %v679, %v675
  %v832 = vpack.c.bf16 %v680, %v676
  %v833 = vpack.c.bf16 %v681, %v677
  %v834 = vpack.c.bf16 %v686, %v682
  %v835 = vpack.c.bf16 %v687, %v683
  %v836 = vpack.c.bf16 %v688, %v684
  %v837 = vpack.c.bf16 %v689, %v685
  %v838 = vpack.c.bf16 %v694, %v690
  %v839 = vpack.c.bf16 %v695, %v691
  %v840 = vpack.c.bf16 %v696, %v692
  %v841 = vpack.c.bf16 %v697, %v693
  %v842 = vpack.c.bf16 %v702, %v698
  %v843 = vpack.c.bf16 %v703, %v699
  %v844 = vpack.c.bf16 %v704, %v700
  %v845 = vpack.c.bf16 %v705, %v701
  %v846 = vpack.c.bf16 %v710, %v706
  %v847 = vpack.c.bf16 %v711, %v707
  %v848 = vpack.c.bf16 %v712, %v708
  %v849 = vpack.c.bf16 %v713, %v709
  %v850 = vpack.c.bf16 %v718, %v714
  %v851 = vpack.c.bf16 %v719, %v715
  %v852 = vpack.c.bf16 %v720, %v716
  %v853 = vpack.c.bf16 %v721, %v717
  %v854 = vpack.c.bf16 %v726, %v722
  %v855 = vpack.c.bf16 %v727, %v723
  %v856 = vpack.c.bf16 %v728, %v724
  %v857 = vpack.c.bf16 %v729, %v725
  %v858 = vld [vmem:[#allocation3] sm:$0xff]
  %v859 = vld [vmem:[#allocation3 + $0x8] sm:$0xff]
  %v860 = vld [vmem:[#allocation3 + $0x10] sm:$0xff]
  %v861 = vld [vmem:[#allocation3 + $0x18] sm:$0xff]
  %v862 = vld [vmem:[#allocation3 + $0x20] sm:$0xff]
  %v863 = vld [vmem:[#allocation3 + $0x28] sm:$0xff]
  %v864 = vld [vmem:[#allocation3 + $0x30] sm:$0xff]
  %v865 = vld [vmem:[#allocation3 + $0x38] sm:$0xff]
  %v866 = vld [vmem:[#allocation3 + $0x40] sm:$0xff]
  %v867 = vld [vmem:[#allocation3 + $0x48] sm:$0xff]
  %v868 = vld [vmem:[#allocation3 + $0x50] sm:$0xff]
  %v869 = vld [vmem:[#allocation3 + $0x58] sm:$0xff]
  %v870 = vld [vmem:[#allocation3 + $0x60] sm:$0xff]
  %v871 = vld [vmem:[#allocation3 + $0x68] sm:$0xff]
  %v872 = vld [vmem:[#allocation3 + $0x70] sm:$0xff]
  %v873 = vld [vmem:[#allocation3 + $0x78] sm:$0xff]
  %v874 = vld [vmem:[#allocation3 + $0x80] sm:$0xff]
  %v875 = vld [vmem:[#allocation3 + $0x88] sm:$0xff]
  %v876 = vld [vmem:[#allocation3 + $0x90] sm:$0xff]
  %v877 = vld [vmem:[#allocation3 + $0x98] sm:$0xff]
  %v878 = vld [vmem:[#allocation3 + $0xa0] sm:$0xff]
  %v879 = vld [vmem:[#allocation3 + $0xa8] sm:$0xff]
  %v880 = vld [vmem:[#allocation3 + $0xb0] sm:$0xff]
  %v881 = vld [vmem:[#allocation3 + $0xb8] sm:$0xff]
  %v882 = vld [vmem:[#allocation3 + $0xc0] sm:$0xff]
  %v883 = vld [vmem:[#allocation3 + $0xc8] sm:$0xff]
  %v884 = vld [vmem:[#allocation3 + $0xd0] sm:$0xff]
  %v885 = vld [vmem:[#allocation3 + $0xd8] sm:$0xff]
  %v886 = vld [vmem:[#allocation3 + $0xe0] sm:$0xff]
  %v887 = vld [vmem:[#allocation3 + $0xe8] sm:$0xff]
  %v888 = vld [vmem:[#allocation3 + $0xf0] sm:$0xff]
  %v889 = vld [vmem:[#allocation3 + $0xf8] sm:$0xff]
  %v890 = vld [vmem:[#allocation3 + $0x100] sm:$0xff]
  %v891 = vld [vmem:[#allocation3 + $0x108] sm:$0xff]
  %v892 = vld [vmem:[#allocation3 + $0x110] sm:$0xff]
  %v893 = vld [vmem:[#allocation3 + $0x118] sm:$0xff]
  %v894 = vld [vmem:[#allocation3 + $0x120] sm:$0xff]
  %v895 = vld [vmem:[#allocation3 + $0x128] sm:$0xff]
  %v896 = vld [vmem:[#allocation3 + $0x130] sm:$0xff]
  %v897 = vld [vmem:[#allocation3 + $0x138] sm:$0xff]
  %v898 = vld [vmem:[#allocation3 + $0x140] sm:$0xff]
  %v899 = vld [vmem:[#allocation3 + $0x148] sm:$0xff]
  %v900 = vld [vmem:[#allocation3 + $0x150] sm:$0xff]
  %v901 = vld [vmem:[#allocation3 + $0x158] sm:$0xff]
  %v902 = vld [vmem:[#allocation3 + $0x160] sm:$0xff]
  %v903 = vld [vmem:[#allocation3 + $0x168] sm:$0xff]
  %v904 = vld [vmem:[#allocation3 + $0x170] sm:$0xff]
  %v905 = vld [vmem:[#allocation3 + $0x178] sm:$0xff]
  %v906 = vld [vmem:[#allocation3 + $0x180] sm:$0xff]
  %v907 = vld [vmem:[#allocation3 + $0x188] sm:$0xff]
  %v908 = vld [vmem:[#allocation3 + $0x190] sm:$0xff]
  %v909 = vld [vmem:[#allocation3 + $0x198] sm:$0xff]
  %v910 = vld [vmem:[#allocation3 + $0x1a0] sm:$0xff]
  %v911 = vld [vmem:[#allocation3 + $0x1a8] sm:$0xff]
  %v912 = vld [vmem:[#allocation3 + $0x1b0] sm:$0xff]
  %v913 = vld [vmem:[#allocation3 + $0x1b8] sm:$0xff]
  %v914 = vld [vmem:[#allocation3 + $0x1c0] sm:$0xff]
  %v915 = vld [vmem:[#allocation3 + $0x1c8] sm:$0xff]
  %v916 = vld [vmem:[#allocation3 + $0x1d0] sm:$0xff]
  %v917 = vld [vmem:[#allocation3 + $0x1d8] sm:$0xff]
  %v918 = vld [vmem:[#allocation3 + $0x1e0] sm:$0xff]
  %v919 = vld [vmem:[#allocation3 + $0x1e8] sm:$0xff]
  %v920 = vld [vmem:[#allocation3 + $0x1f0] sm:$0xff]
  %v921 = vld [vmem:[#allocation3 + $0x1f8] sm:$0xff]
  %v922 = vunpack.c.l.bf16 %v730
  %v923 = vunpack.c.l.bf16 %v731
  %v924 = vunpack.c.l.bf16 %v732
  %v925 = vunpack.c.l.bf16 %v733
  %v926 = vunpack.c.h.bf16 %v730
  %v927 = vunpack.c.h.bf16 %v731
  %v928 = vunpack.c.h.bf16 %v732
  %v929 = vunpack.c.h.bf16 %v733
  %v930 = vunpack.c.l.bf16 %v734
  %v931 = vunpack.c.l.bf16 %v735
  %v932 = vunpack.c.l.bf16 %v736
  %v933 = vunpack.c.l.bf16 %v737
  %v934 = vunpack.c.h.bf16 %v734
  %v935 = vunpack.c.h.bf16 %v735
  %v936 = vunpack.c.h.bf16 %v736
  %v937 = vunpack.c.h.bf16 %v737
  %v938 = vunpack.c.l.bf16 %v738
  %v939 = vunpack.c.l.bf16 %v739
  %v940 = vunpack.c.l.bf16 %v740
  %v941 = vunpack.c.l.bf16 %v741
  %v942 = vunpack.c.h.bf16 %v738
  %v943 = vunpack.c.h.bf16 %v739
  %v944 = vunpack.c.h.bf16 %v740
  %v945 = vunpack.c.h.bf16 %v741
  %v946 = vunpack.c.l.bf16 %v742
  %v947 = vunpack.c.l.bf16 %v743
  %v948 = vunpack.c.l.bf16 %v744
  %v949 = vunpack.c.l.bf16 %v745
  %v950 = vunpack.c.h.bf16 %v742
  %v951 = vunpack.c.h.bf16 %v743
  %v952 = vunpack.c.h.bf16 %v744
  %v953 = vunpack.c.h.bf16 %v745
  %v954 = vunpack.c.l.bf16 %v746
  %v955 = vunpack.c.l.bf16 %v747
  %v956 = vunpack.c.l.bf16 %v748
  %v957 = vunpack.c.l.bf16 %v749
  %v958 = vunpack.c.h.bf16 %v746
  %v959 = vunpack.c.h.bf16 %v747
  %v960 = vunpack.c.h.bf16 %v748
  %v961 = vunpack.c.h.bf16 %v749
  %v962 = vunpack.c.l.bf16 %v750
  %v963 = vunpack.c.l.bf16 %v751
  %v964 = vunpack.c.l.bf16 %v752
  %v965 = vunpack.c.l.bf16 %v753
  %v966 = vunpack.c.h.bf16 %v750
  %v967 = vunpack.c.h.bf16 %v751
  %v968 = vunpack.c.h.bf16 %v752
  %v969 = vunpack.c.h.bf16 %v753
  %v970 = vunpack.c.l.bf16 %v754
  %v971 = vunpack.c.l.bf16 %v755
  %v972 = vunpack.c.l.bf16 %v756
  %v973 = vunpack.c.l.bf16 %v757
  %v974 = vunpack.c.h.bf16 %v754
  %v975 = vunpack.c.h.bf16 %v755
  %v976 = vunpack.c.h.bf16 %v756
  %v977 = vunpack.c.h.bf16 %v757
  %v978 = vunpack.c.l.bf16 %v758
  %v979 = vunpack.c.l.bf16 %v759
  %v980 = vunpack.c.l.bf16 %v760
  %v981 = vunpack.c.l.bf16 %v761
  %v982 = vunpack.c.h.bf16 %v758
  %v983 = vunpack.c.h.bf16 %v759
  %v984 = vunpack.c.h.bf16 %v760
  %v985 = vunpack.c.h.bf16 %v761
  %v986 = vunpack.c.l.bf16 %v762
  %v987 = vunpack.c.l.bf16 %v763
  %v988 = vunpack.c.l.bf16 %v764
  %v989 = vunpack.c.l.bf16 %v765
  %v990 = vunpack.c.h.bf16 %v762
  %v991 = vunpack.c.h.bf16 %v763
  %v992 = vunpack.c.h.bf16 %v764
  %v993 = vunpack.c.h.bf16 %v765
  %v994 = vunpack.c.l.bf16 %v766
  %v995 = vunpack.c.l.bf16 %v767
  %v996 = vunpack.c.l.bf16 %v768
  %v997 = vunpack.c.l.bf16 %v769
  %v998 = vunpack.c.h.bf16 %v766
  %v999 = vunpack.c.h.bf16 %v767
  %v1000 = vunpack.c.h.bf16 %v768
  %v1001 = vunpack.c.h.bf16 %v769
  %v1002 = vunpack.c.l.bf16 %v770
  %v1003 = vunpack.c.l.bf16 %v771
  %v1004 = vunpack.c.l.bf16 %v772
  %v1005 = vunpack.c.l.bf16 %v773
  %v1006 = vunpack.c.h.bf16 %v770
  %v1007 = vunpack.c.h.bf16 %v771
  %v1008 = vunpack.c.h.bf16 %v772
  %v1009 = vunpack.c.h.bf16 %v773
  %v1010 = vunpack.c.l.bf16 %v774
  %v1011 = vunpack.c.l.bf16 %v775
  %v1012 = vunpack.c.l.bf16 %v776
  %v1013 = vunpack.c.l.bf16 %v777
  %v1014 = vunpack.c.h.bf16 %v774
  %v1015 = vunpack.c.h.bf16 %v775
  %v1016 = vunpack.c.h.bf16 %v776
  %v1017 = vunpack.c.h.bf16 %v777
  %v1018 = vunpack.c.l.bf16 %v778
  %v1019 = vunpack.c.l.bf16 %v779
  %v1020 = vunpack.c.l.bf16 %v780
  %v1021 = vunpack.c.l.bf16 %v781
  %v1022 = vunpack.c.h.bf16 %v778
  %v1023 = vunpack.c.h.bf16 %v779
  %v1024 = vunpack.c.h.bf16 %v780
  %v1025 = vunpack.c.h.bf16 %v781
  %v1026 = vunpack.c.l.bf16 %v782
  %v1027 = vunpack.c.l.bf16 %v783
  %v1028 = vunpack.c.l.bf16 %v784
  %v1029 = vunpack.c.l.bf16 %v785
  %v1030 = vunpack.c.h.bf16 %v782
  %v1031 = vunpack.c.h.bf16 %v783
  %v1032 = vunpack.c.h.bf16 %v784
  %v1033 = vunpack.c.h.bf16 %v785
  %v1034 = vunpack.c.l.bf16 %v786
  %v1035 = vunpack.c.l.bf16 %v787
  %v1036 = vunpack.c.l.bf16 %v788
  %v1037 = vunpack.c.l.bf16 %v789
  %v1038 = vunpack.c.h.bf16 %v786
  %v1039 = vunpack.c.h.bf16 %v787
  %v1040 = vunpack.c.h.bf16 %v788
  %v1041 = vunpack.c.h.bf16 %v789
  %v1042 = vunpack.c.l.bf16 %v790
  %v1043 = vunpack.c.l.bf16 %v791
  %v1044 = vunpack.c.l.bf16 %v792
  %v1045 = vunpack.c.l.bf16 %v793
  %v1046 = vunpack.c.h.bf16 %v790
  %v1047 = vunpack.c.h.bf16 %v791
  %v1048 = vunpack.c.h.bf16 %v792
  %v1049 = vunpack.c.h.bf16 %v793
  %v1050 = vunpack.c.l.bf16 %v794
  %v1051 = vunpack.c.l.bf16 %v795
  %v1052 = vunpack.c.l.bf16 %v796
  %v1053 = vunpack.c.l.bf16 %v797
  %v1054 = vunpack.c.h.bf16 %v794
  %v1055 = vunpack.c.h.bf16 %v795
  %v1056 = vunpack.c.h.bf16 %v796
  %v1057 = vunpack.c.h.bf16 %v797
  %v1058 = vunpack.c.l.bf16 %v798
  %v1059 = vunpack.c.l.bf16 %v799
  %v1060 = vunpack.c.l.bf16 %v800
  %v1061 = vunpack.c.l.bf16 %v801
  %v1062 = vunpack.c.h.bf16 %v798
  %v1063 = vunpack.c.h.bf16 %v799
  %v1064 = vunpack.c.h.bf16 %v800
  %v1065 = vunpack.c.h.bf16 %v801
  %v1066 = vunpack.c.l.bf16 %v802
  %v1067 = vunpack.c.l.bf16 %v803
  %v1068 = vunpack.c.l.bf16 %v804
  %v1069 = vunpack.c.l.bf16 %v805
  %v1070 = vunpack.c.h.bf16 %v802
  %v1071 = vunpack.c.h.bf16 %v803
  %v1072 = vunpack.c.h.bf16 %v804
  %v1073 = vunpack.c.h.bf16 %v805
  %v1074 = vunpack.c.l.bf16 %v806
  %v1075 = vunpack.c.l.bf16 %v807
  %v1076 = vunpack.c.l.bf16 %v808
  %v1077 = vunpack.c.l.bf16 %v809
  %v1078 = vunpack.c.h.bf16 %v806
  %v1079 = vunpack.c.h.bf16 %v807
  %v1080 = vunpack.c.h.bf16 %v808
  %v1081 = vunpack.c.h.bf16 %v809
  %v1082 = vunpack.c.l.bf16 %v810
  %v1083 = vunpack.c.l.bf16 %v811
  %v1084 = vunpack.c.l.bf16 %v812
  %v1085 = vunpack.c.l.bf16 %v813
  %v1086 = vunpack.c.h.bf16 %v810
  %v1087 = vunpack.c.h.bf16 %v811
  %v1088 = vunpack.c.h.bf16 %v812
  %v1089 = vunpack.c.h.bf16 %v813
  %v1090 = vunpack.c.l.bf16 %v814
  %v1091 = vunpack.c.l.bf16 %v815
  %v1092 = vunpack.c.l.bf16 %v816
  %v1093 = vunpack.c.l.bf16 %v817
  %v1094 = vunpack.c.h.bf16 %v814
  %v1095 = vunpack.c.h.bf16 %v815
  %v1096 = vunpack.c.h.bf16 %v816
  %v1097 = vunpack.c.h.bf16 %v817
  %v1098 = vunpack.c.l.bf16 %v818
  %v1099 = vunpack.c.l.bf16 %v819
  %v1100 = vunpack.c.l.bf16 %v820
  %v1101 = vunpack.c.l.bf16 %v821
  %v1102 = vunpack.c.h.bf16 %v818
  %v1103 = vunpack.c.h.bf16 %v819
  %v1104 = vunpack.c.h.bf16 %v820
  %v1105 = vunpack.c.h.bf16 %v821
  %v1106 = vunpack.c.l.bf16 %v822
  %v1107 = vunpack.c.l.bf16 %v823
  %v1108 = vunpack.c.l.bf16 %v824
  %v1109 = vunpack.c.l.bf16 %v825
  %v1110 = vunpack.c.h.bf16 %v822
  %v1111 = vunpack.c.h.bf16 %v823
  %v1112 = vunpack.c.h.bf16 %v824
  %v1113 = vunpack.c.h.bf16 %v825
  %v1114 = vunpack.c.l.bf16 %v826
  %v1115 = vunpack.c.l.bf16 %v827
  %v1116 = vunpack.c.l.bf16 %v828
  %v1117 = vunpack.c.l.bf16 %v829
  %v1118 = vunpack.c.h.bf16 %v826
  %v1119 = vunpack.c.h.bf16 %v827
  %v1120 = vunpack.c.h.bf16 %v828
  %v1121 = vunpack.c.h.bf16 %v829
  %v1122 = vunpack.c.l.bf16 %v830
  %v1123 = vunpack.c.l.bf16 %v831
  %v1124 = vunpack.c.l.bf16 %v832
  %v1125 = vunpack.c.l.bf16 %v833
  %v1126 = vunpack.c.h.bf16 %v830
  %v1127 = vunpack.c.h.bf16 %v831
  %v1128 = vunpack.c.h.bf16 %v832
  %v1129 = vunpack.c.h.bf16 %v833
  %v1130 = vunpack.c.l.bf16 %v834
  %v1131 = vunpack.c.l.bf16 %v835
  %v1132 = vunpack.c.l.bf16 %v836
  %v1133 = vunpack.c.l.bf16 %v837
  %v1134 = vunpack.c.h.bf16 %v834
  %v1135 = vunpack.c.h.bf16 %v835
  %v1136 = vunpack.c.h.bf16 %v836
  %v1137 = vunpack.c.h.bf16 %v837
  %v1138 = vunpack.c.l.bf16 %v838
  %v1139 = vunpack.c.l.bf16 %v839
  %v1140 = vunpack.c.l.bf16 %v840
  %v1141 = vunpack.c.l.bf16 %v841
  %v1142 = vunpack.c.h.bf16 %v838
  %v1143 = vunpack.c.h.bf16 %v839
  %v1144 = vunpack.c.h.bf16 %v840
  %v1145 = vunpack.c.h.bf16 %v841
  %v1146 = vunpack.c.l.bf16 %v842
  %v1147 = vunpack.c.l.bf16 %v843
  %v1148 = vunpack.c.l.bf16 %v844
  %v1149 = vunpack.c.l.bf16 %v845
  %v1150 = vunpack.c.h.bf16 %v842
  %v1151 = vunpack.c.h.bf16 %v843
  %v1152 = vunpack.c.h.bf16 %v844
  %v1153 = vunpack.c.h.bf16 %v845
  %v1154 = vunpack.c.l.bf16 %v846
  %v1155 = vunpack.c.l.bf16 %v847
  %v1156 = vunpack.c.l.bf16 %v848
  %v1157 = vunpack.c.l.bf16 %v849
  %v1158 = vunpack.c.h.bf16 %v846
  %v1159 = vunpack.c.h.bf16 %v847
  %v1160 = vunpack.c.h.bf16 %v848
  %v1161 = vunpack.c.h.bf16 %v849
  %v1162 = vunpack.c.l.bf16 %v850
  %v1163 = vunpack.c.l.bf16 %v851
  %v1164 = vunpack.c.l.bf16 %v852
  %v1165 = vunpack.c.l.bf16 %v853
  %v1166 = vunpack.c.h.bf16 %v850
  %v1167 = vunpack.c.h.bf16 %v851
  %v1168 = vunpack.c.h.bf16 %v852
  %v1169 = vunpack.c.h.bf16 %v853
  %v1170 = vunpack.c.l.bf16 %v854
  %v1171 = vunpack.c.l.bf16 %v855
  %v1172 = vunpack.c.l.bf16 %v856
  %v1173 = vunpack.c.l.bf16 %v857
  %v1174 = vunpack.c.h.bf16 %v854
  %v1175 = vunpack.c.h.bf16 %v855
  %v1176 = vunpack.c.h.bf16 %v856
  %v1177 = vunpack.c.h.bf16 %v857
  %v1178 = vadd.f32 %v922, %v923
  %v1179 = vadd.f32 %v1178, %v924
  %v1180 = vadd.f32 %v1179, %v925
  %1181 = vadd.xlane.f32.xlu0 %v1180
  %v1182 = vpop.xlane.xlu0 %1181
  %v1183 = vadd.f32 %v926, %v927
  %v1184 = vadd.f32 %v1183, %v928
  %v1185 = vadd.f32 %v1184, %v929
  %1186 = vadd.xlane.f32.xlu0 %v1185
  %v1187 = vpop.xlane.xlu0 %1186
  %v1188 = vadd.f32 %v930, %v931
  %v1189 = vadd.f32 %v1188, %v932
  %v1190 = vadd.f32 %v1189, %v933
  %1191 = vadd.xlane.f32.xlu0 %v1190
  %v1192 = vpop.xlane.xlu0 %1191
  %v1193 = vadd.f32 %v934, %v935
  %v1194 = vadd.f32 %v1193, %v936
  %v1195 = vadd.f32 %v1194, %v937
  %1196 = vadd.xlane.f32.xlu0 %v1195
  %v1197 = vpop.xlane.xlu0 %1196
  %v1198 = vadd.f32 %v938, %v939
  %v1199 = vadd.f32 %v1198, %v940
  %v1200 = vadd.f32 %v1199, %v941
  %1201 = vadd.xlane.f32.xlu0 %v1200
  %v1202 = vpop.xlane.xlu0 %1201
  %v1203 = vadd.f32 %v942, %v943
  %v1204 = vadd.f32 %v1203, %v944
  %v1205 = vadd.f32 %v1204, %v945
  %1206 = vadd.xlane.f32.xlu0 %v1205
  %v1207 = vpop.xlane.xlu0 %1206
  %v1208 = vadd.f32 %v946, %v947
  %v1209 = vadd.f32 %v1208, %v948
  %v1210 = vadd.f32 %v1209, %v949
  %1211 = vadd.xlane.f32.xlu0 %v1210
  %v1212 = vpop.xlane.xlu0 %1211
  %v1213 = vadd.f32 %v950, %v951
  %v1214 = vadd.f32 %v1213, %v952
  %v1215 = vadd.f32 %v1214, %v953
  %1216 = vadd.xlane.f32.xlu0 %v1215
  %v1217 = vpop.xlane.xlu0 %1216
  %v1218 = vadd.f32 %v954, %v955
  %v1219 = vadd.f32 %v1218, %v956
  %v1220 = vadd.f32 %v1219, %v957
  %1221 = vadd.xlane.f32.xlu0 %v1220
  %v1222 = vpop.xlane.xlu0 %1221
  %v1223 = vadd.f32 %v958, %v959
  %v1224 = vadd.f32 %v1223, %v960
  %v1225 = vadd.f32 %v1224, %v961
  %1226 = vadd.xlane.f32.xlu0 %v1225
  %v1227 = vpop.xlane.xlu0 %1226
  %v1228 = vadd.f32 %v962, %v963
  %v1229 = vadd.f32 %v1228, %v964
  %v1230 = vadd.f32 %v1229, %v965
  %1231 = vadd.xlane.f32.xlu0 %v1230
  %v1232 = vpop.xlane.xlu0 %1231
  %v1233 = vadd.f32 %v966, %v967
  %v1234 = vadd.f32 %v1233, %v968
  %v1235 = vadd.f32 %v1234, %v969
  %1236 = vadd.xlane.f32.xlu0 %v1235
  %v1237 = vpop.xlane.xlu0 %1236
  %v1238 = vadd.f32 %v970, %v971
  %v1239 = vadd.f32 %v1238, %v972
  %v1240 = vadd.f32 %v1239, %v973
  %1241 = vadd.xlane.f32.xlu0 %v1240
  %v1242 = vpop.xlane.xlu0 %1241
  %v1243 = vadd.f32 %v974, %v975
  %v1244 = vadd.f32 %v1243, %v976
  %v1245 = vadd.f32 %v1244, %v977
  %1246 = vadd.xlane.f32.xlu0 %v1245
  %v1247 = vpop.xlane.xlu0 %1246
  %v1248 = vadd.f32 %v978, %v979
  %v1249 = vadd.f32 %v1248, %v980
  %v1250 = vadd.f32 %v1249, %v981
  %1251 = vadd.xlane.f32.xlu0 %v1250
  %v1252 = vpop.xlane.xlu0 %1251
  %v1253 = vadd.f32 %v982, %v983
  %v1254 = vadd.f32 %v1253, %v984
  %v1255 = vadd.f32 %v1254, %v985
  %1256 = vadd.xlane.f32.xlu0 %v1255
  %v1257 = vpop.xlane.xlu0 %1256
  %v1258 = vadd.f32 %v986, %v987
  %v1259 = vadd.f32 %v1258, %v988
  %v1260 = vadd.f32 %v1259, %v989
  %1261 = vadd.xlane.f32.xlu0 %v1260
  %v1262 = vpop.xlane.xlu0 %1261
  %v1263 = vadd.f32 %v990, %v991
  %v1264 = vadd.f32 %v1263, %v992
  %v1265 = vadd.f32 %v1264, %v993
  %1266 = vadd.xlane.f32.xlu0 %v1265
  %v1267 = vpop.xlane.xlu0 %1266
  %v1268 = vadd.f32 %v994, %v995
  %v1269 = vadd.f32 %v1268, %v996
  %v1270 = vadd.f32 %v1269, %v997
  %1271 = vadd.xlane.f32.xlu0 %v1270
  %v1272 = vpop.xlane.xlu0 %1271
  %v1273 = vadd.f32 %v998, %v999
  %v1274 = vadd.f32 %v1273, %v1000
  %v1275 = vadd.f32 %v1274, %v1001
  %1276 = vadd.xlane.f32.xlu0 %v1275
  %v1277 = vpop.xlane.xlu0 %1276
  %v1278 = vadd.f32 %v1002, %v1003
  %v1279 = vadd.f32 %v1278, %v1004
  %v1280 = vadd.f32 %v1279, %v1005
  %1281 = vadd.xlane.f32.xlu0 %v1280
  %v1282 = vpop.xlane.xlu0 %1281
  %v1283 = vadd.f32 %v1006, %v1007
  %v1284 = vadd.f32 %v1283, %v1008
  %v1285 = vadd.f32 %v1284, %v1009
  %1286 = vadd.xlane.f32.xlu0 %v1285
  %v1287 = vpop.xlane.xlu0 %1286
  %v1288 = vadd.f32 %v1010, %v1011
  %v1289 = vadd.f32 %v1288, %v1012
  %v1290 = vadd.f32 %v1289, %v1013
  %1291 = vadd.xlane.f32.xlu0 %v1290
  %v1292 = vpop.xlane.xlu0 %1291
  %v1293 = vadd.f32 %v1014, %v1015
  %v1294 = vadd.f32 %v1293, %v1016
  %v1295 = vadd.f32 %v1294, %v1017
  %1296 = vadd.xlane.f32.xlu0 %v1295
  %v1297 = vpop.xlane.xlu0 %1296
  %v1298 = vadd.f32 %v1018, %v1019
  %v1299 = vadd.f32 %v1298, %v1020
  %v1300 = vadd.f32 %v1299, %v1021
  %1301 = vadd.xlane.f32.xlu0 %v1300
  %v1302 = vpop.xlane.xlu0 %1301
  %v1303 = vadd.f32 %v1022, %v1023
  %v1304 = vadd.f32 %v1303, %v1024
  %v1305 = vadd.f32 %v1304, %v1025
  %1306 = vadd.xlane.f32.xlu0 %v1305
  %v1307 = vpop.xlane.xlu0 %1306
  %v1308 = vadd.f32 %v1026, %v1027
  %v1309 = vadd.f32 %v1308, %v1028
  %v1310 = vadd.f32 %v1309, %v1029
  %1311 = vadd.xlane.f32.xlu0 %v1310
  %v1312 = vpop.xlane.xlu0 %1311
  %v1313 = vadd.f32 %v1030, %v1031
  %v1314 = vadd.f32 %v1313, %v1032
  %v1315 = vadd.f32 %v1314, %v1033
  %1316 = vadd.xlane.f32.xlu0 %v1315
  %v1317 = vpop.xlane.xlu0 %1316
  %v1318 = vadd.f32 %v1034, %v1035
  %v1319 = vadd.f32 %v1318, %v1036
  %v1320 = vadd.f32 %v1319, %v1037
  %1321 = vadd.xlane.f32.xlu0 %v1320
  %v1322 = vpop.xlane.xlu0 %1321
  %v1323 = vadd.f32 %v1038, %v1039
  %v1324 = vadd.f32 %v1323, %v1040
  %v1325 = vadd.f32 %v1324, %v1041
  %1326 = vadd.xlane.f32.xlu0 %v1325
  %v1327 = vpop.xlane.xlu0 %1326
  %v1328 = vadd.f32 %v1042, %v1043
  %v1329 = vadd.f32 %v1328, %v1044
  %v1330 = vadd.f32 %v1329, %v1045
  %1331 = vadd.xlane.f32.xlu0 %v1330
  %v1332 = vpop.xlane.xlu0 %1331
  %v1333 = vadd.f32 %v1046, %v1047
  %v1334 = vadd.f32 %v1333, %v1048
  %v1335 = vadd.f32 %v1334, %v1049
  %1336 = vadd.xlane.f32.xlu0 %v1335
  %v1337 = vpop.xlane.xlu0 %1336
  %v1338 = vadd.f32 %v1050, %v1051
  %v1339 = vadd.f32 %v1338, %v1052
  %v1340 = vadd.f32 %v1339, %v1053
  %1341 = vadd.xlane.f32.xlu0 %v1340
  %v1342 = vpop.xlane.xlu0 %1341
  %v1343 = vadd.f32 %v1054, %v1055
  %v1344 = vadd.f32 %v1343, %v1056
  %v1345 = vadd.f32 %v1344, %v1057
  %1346 = vadd.xlane.f32.xlu0 %v1345
  %v1347 = vpop.xlane.xlu0 %1346
  %v1348 = vadd.f32 %v1058, %v1059
  %v1349 = vadd.f32 %v1348, %v1060
  %v1350 = vadd.f32 %v1349, %v1061
  %1351 = vadd.xlane.f32.xlu0 %v1350
  %v1352 = vpop.xlane.xlu0 %1351
  %v1353 = vadd.f32 %v1062, %v1063
  %v1354 = vadd.f32 %v1353, %v1064
  %v1355 = vadd.f32 %v1354, %v1065
  %1356 = vadd.xlane.f32.xlu0 %v1355
  %v1357 = vpop.xlane.xlu0 %1356
  %v1358 = vadd.f32 %v1066, %v1067
  %v1359 = vadd.f32 %v1358, %v1068
  %v1360 = vadd.f32 %v1359, %v1069
  %1361 = vadd.xlane.f32.xlu0 %v1360
  %v1362 = vpop.xlane.xlu0 %1361
  %v1363 = vadd.f32 %v1070, %v1071
  %v1364 = vadd.f32 %v1363, %v1072
  %v1365 = vadd.f32 %v1364, %v1073
  %1366 = vadd.xlane.f32.xlu0 %v1365
  %v1367 = vpop.xlane.xlu0 %1366
  %v1368 = vadd.f32 %v1074, %v1075
  %v1369 = vadd.f32 %v1368, %v1076
  %v1370 = vadd.f32 %v1369, %v1077
  %1371 = vadd.xlane.f32.xlu0 %v1370
  %v1372 = vpop.xlane.xlu0 %1371
  %v1373 = vadd.f32 %v1078, %v1079
  %v1374 = vadd.f32 %v1373, %v1080
  %v1375 = vadd.f32 %v1374, %v1081
  %1376 = vadd.xlane.f32.xlu0 %v1375
  %v1377 = vpop.xlane.xlu0 %1376
  %v1378 = vadd.f32 %v1082, %v1083
  %v1379 = vadd.f32 %v1378, %v1084
  %v1380 = vadd.f32 %v1379, %v1085
  %1381 = vadd.xlane.f32.xlu0 %v1380
  %v1382 = vpop.xlane.xlu0 %1381
  %v1383 = vadd.f32 %v1086, %v1087
  %v1384 = vadd.f32 %v1383, %v1088
  %v1385 = vadd.f32 %v1384, %v1089
  %1386 = vadd.xlane.f32.xlu0 %v1385
  %v1387 = vpop.xlane.xlu0 %1386
  %v1388 = vadd.f32 %v1090, %v1091
  %v1389 = vadd.f32 %v1388, %v1092
  %v1390 = vadd.f32 %v1389, %v1093
  %1391 = vadd.xlane.f32.xlu0 %v1390
  %v1392 = vpop.xlane.xlu0 %1391
  %v1393 = vadd.f32 %v1094, %v1095
  %v1394 = vadd.f32 %v1393, %v1096
  %v1395 = vadd.f32 %v1394, %v1097
  %1396 = vadd.xlane.f32.xlu0 %v1395
  %v1397 = vpop.xlane.xlu0 %1396
  %v1398 = vadd.f32 %v1098, %v1099
  %v1399 = vadd.f32 %v1398, %v1100
  %v1400 = vadd.f32 %v1399, %v1101
  %1401 = vadd.xlane.f32.xlu0 %v1400
  %v1402 = vpop.xlane.xlu0 %1401
  %v1403 = vadd.f32 %v1102, %v1103
  %v1404 = vadd.f32 %v1403, %v1104
  %v1405 = vadd.f32 %v1404, %v1105
  %1406 = vadd.xlane.f32.xlu0 %v1405
  %v1407 = vpop.xlane.xlu0 %1406
  %v1408 = vadd.f32 %v1106, %v1107
  %v1409 = vadd.f32 %v1408, %v1108
  %v1410 = vadd.f32 %v1409, %v1109
  %1411 = vadd.xlane.f32.xlu0 %v1410
  %v1412 = vpop.xlane.xlu0 %1411
  %v1413 = vadd.f32 %v1110, %v1111
  %v1414 = vadd.f32 %v1413, %v1112
  %v1415 = vadd.f32 %v1414, %v1113
  %1416 = vadd.xlane.f32.xlu0 %v1415
  %v1417 = vpop.xlane.xlu0 %1416
  %v1418 = vadd.f32 %v1114, %v1115
  %v1419 = vadd.f32 %v1418, %v1116
  %v1420 = vadd.f32 %v1419, %v1117
  %1421 = vadd.xlane.f32.xlu0 %v1420
  %v1422 = vpop.xlane.xlu0 %1421
  %v1423 = vadd.f32 %v1118, %v1119
  %v1424 = vadd.f32 %v1423, %v1120
  %v1425 = vadd.f32 %v1424, %v1121
  %1426 = vadd.xlane.f32.xlu0 %v1425
  %v1427 = vpop.xlane.xlu0 %1426
  %v1428 = vadd.f32 %v1122, %v1123
  %v1429 = vadd.f32 %v1428, %v1124
  %v1430 = vadd.f32 %v1429, %v1125
  %1431 = vadd.xlane.f32.xlu0 %v1430
  %v1432 = vpop.xlane.xlu0 %1431
  %v1433 = vadd.f32 %v1126, %v1127
  %v1434 = vadd.f32 %v1433, %v1128
  %v1435 = vadd.f32 %v1434, %v1129
  %1436 = vadd.xlane.f32.xlu0 %v1435
  %v1437 = vpop.xlane.xlu0 %1436
  %v1438 = vadd.f32 %v1130, %v1131
  %v1439 = vadd.f32 %v1438, %v1132
  %v1440 = vadd.f32 %v1439, %v1133
  %1441 = vadd.xlane.f32.xlu0 %v1440
  %v1442 = vpop.xlane.xlu0 %1441
  %v1443 = vadd.f32 %v1134, %v1135
  %v1444 = vadd.f32 %v1443, %v1136
  %v1445 = vadd.f32 %v1444, %v1137
  %1446 = vadd.xlane.f32.xlu0 %v1445
  %v1447 = vpop.xlane.xlu0 %1446
  %v1448 = vadd.f32 %v1138, %v1139
  %v1449 = vadd.f32 %v1448, %v1140
  %v1450 = vadd.f32 %v1449, %v1141
  %1451 = vadd.xlane.f32.xlu0 %v1450
  %v1452 = vpop.xlane.xlu0 %1451
  %v1453 = vadd.f32 %v1142, %v1143
  %v1454 = vadd.f32 %v1453, %v1144
  %v1455 = vadd.f32 %v1454, %v1145
  %1456 = vadd.xlane.f32.xlu0 %v1455
  %v1457 = vpop.xlane.xlu0 %1456
  %v1458 = vadd.f32 %v1146, %v1147
  %v1459 = vadd.f32 %v1458, %v1148
  %v1460 = vadd.f32 %v1459, %v1149
  %1461 = vadd.xlane.f32.xlu0 %v1460
  %v1462 = vpop.xlane.xlu0 %1461
  %v1463 = vadd.f32 %v1150, %v1151
  %v1464 = vadd.f32 %v1463, %v1152
  %v1465 = vadd.f32 %v1464, %v1153
  %1466 = vadd.xlane.f32.xlu0 %v1465
  %v1467 = vpop.xlane.xlu0 %1466
  %v1468 = vadd.f32 %v1154, %v1155
  %v1469 = vadd.f32 %v1468, %v1156
  %v1470 = vadd.f32 %v1469, %v1157
  %1471 = vadd.xlane.f32.xlu0 %v1470
  %v1472 = vpop.xlane.xlu0 %1471
  %v1473 = vadd.f32 %v1158, %v1159
  %v1474 = vadd.f32 %v1473, %v1160
  %v1475 = vadd.f32 %v1474, %v1161
  %1476 = vadd.xlane.f32.xlu0 %v1475
  %v1477 = vpop.xlane.xlu0 %1476
  %v1478 = vadd.f32 %v1162, %v1163
  %v1479 = vadd.f32 %v1478, %v1164
  %v1480 = vadd.f32 %v1479, %v1165
  %1481 = vadd.xlane.f32.xlu0 %v1480
  %v1482 = vpop.xlane.xlu0 %1481
  %v1483 = vadd.f32 %v1166, %v1167
  %v1484 = vadd.f32 %v1483, %v1168
  %v1485 = vadd.f32 %v1484, %v1169
  %1486 = vadd.xlane.f32.xlu0 %v1485
  %v1487 = vpop.xlane.xlu0 %1486
  %v1488 = vadd.f32 %v1170, %v1171
  %v1489 = vadd.f32 %v1488, %v1172
  %v1490 = vadd.f32 %v1489, %v1173
  %1491 = vadd.xlane.f32.xlu0 %v1490
  %v1492 = vpop.xlane.xlu0 %1491
  %v1493 = vadd.f32 %v1174, %v1175
  %v1494 = vadd.f32 %v1493, %v1176
  %v1495 = vadd.f32 %v1494, %v1177
  %1496 = vadd.xlane.f32.xlu0 %v1495
  %v1497 = vpop.xlane.xlu0 %1496
  %v1498 = vadd.f32 %v858, %v1182
  %v1499 = vadd.f32 %v859, %v1187
  %v1500 = vadd.f32 %v860, %v1192
  %v1501 = vadd.f32 %v861, %v1197
  %v1502 = vadd.f32 %v862, %v1202
  %v1503 = vadd.f32 %v863, %v1207
  %v1504 = vadd.f32 %v864, %v1212
  %v1505 = vadd.f32 %v865, %v1217
  %v1506 = vadd.f32 %v866, %v1222
  %v1507 = vadd.f32 %v867, %v1227
  %v1508 = vadd.f32 %v868, %v1232
  %v1509 = vadd.f32 %v869, %v1237
  %v1510 = vadd.f32 %v870, %v1242
  %v1511 = vadd.f32 %v871, %v1247
  %v1512 = vadd.f32 %v872, %v1252
  %v1513 = vadd.f32 %v873, %v1257
  %v1514 = vadd.f32 %v874, %v1262
  %v1515 = vadd.f32 %v875, %v1267
  %v1516 = vadd.f32 %v876, %v1272
  %v1517 = vadd.f32 %v877, %v1277
  %v1518 = vadd.f32 %v878, %v1282
  %v1519 = vadd.f32 %v879, %v1287
  %v1520 = vadd.f32 %v880, %v1292
  %v1521 = vadd.f32 %v881, %v1297
  %v1522 = vadd.f32 %v882, %v1302
  %v1523 = vadd.f32 %v883, %v1307
  %v1524 = vadd.f32 %v884, %v1312
  %v1525 = vadd.f32 %v885, %v1317
  %v1526 = vadd.f32 %v886, %v1322
  %v1527 = vadd.f32 %v887, %v1327
  %v1528 = vadd.f32 %v888, %v1332
  %v1529 = vadd.f32 %v889, %v1337
  %v1530 = vadd.f32 %v890, %v1342
  %v1531 = vadd.f32 %v891, %v1347
  %v1532 = vadd.f32 %v892, %v1352
  %v1533 = vadd.f32 %v893, %v1357
  %v1534 = vadd.f32 %v894, %v1362
  %v1535 = vadd.f32 %v895, %v1367
  %v1536 = vadd.f32 %v896, %v1372
  %v1537 = vadd.f32 %v897, %v1377
  %v1538 = vadd.f32 %v898, %v1382
  %v1539 = vadd.f32 %v899, %v1387
  %v1540 = vadd.f32 %v900, %v1392
  %v1541 = vadd.f32 %v901, %v1397
  %v1542 = vadd.f32 %v902, %v1402
  %v1543 = vadd.f32 %v903, %v1407
  %v1544 = vadd.f32 %v904, %v1412
  %v1545 = vadd.f32 %v905, %v1417
  %v1546 = vadd.f32 %v906, %v1422
  %v1547 = vadd.f32 %v907, %v1427
  %v1548 = vadd.f32 %v908, %v1432
  %v1549 = vadd.f32 %v909, %v1437
  %v1550 = vadd.f32 %v910, %v1442
  %v1551 = vadd.f32 %v911, %v1447
  %v1552 = vadd.f32 %v912, %v1452
  %v1553 = vadd.f32 %v913, %v1457
  %v1554 = vadd.f32 %v914, %v1462
  %v1555 = vadd.f32 %v915, %v1467
  %v1556 = vadd.f32 %v916, %v1472
  %v1557 = vadd.f32 %v917, %v1477
  %v1558 = vadd.f32 %v918, %v1482
  %v1559 = vadd.f32 %v919, %v1487
  %v1560 = vadd.f32 %v920, %v1492
  %v1561 = vadd.f32 %v921, %v1497
  %vm1562 = vcmask 7168
  %1563 = vst.msk [vmem:[#allocation3] sm:$0xff] %vm1562, %v1498
  %1564 = vst.msk [vmem:[#allocation3 + $0x8] sm:$0xff] %vm1562, %v1499
  %1565 = vst.msk [vmem:[#allocation3 + $0x10] sm:$0xff] %vm1562, %v1500
  %1566 = vst.msk [vmem:[#allocation3 + $0x18] sm:$0xff] %vm1562, %v1501
  %1567 = vst.msk [vmem:[#allocation3 + $0x20] sm:$0xff] %vm1562, %v1502
  %1568 = vst.msk [vmem:[#allocation3 + $0x28] sm:$0xff] %vm1562, %v1503
  %1569 = vst.msk [vmem:[#allocation3 + $0x30] sm:$0xff] %vm1562, %v1504
  %1570 = vst.msk [vmem:[#allocation3 + $0x38] sm:$0xff] %vm1562, %v1505
  %1571 = vst.msk [vmem:[#allocation3 + $0x40] sm:$0xff] %vm1562, %v1506
  %1572 = vst.msk [vmem:[#allocation3 + $0x48] sm:$0xff] %vm1562, %v1507
  %1573 = vst.msk [vmem:[#allocation3 + $0x50] sm:$0xff] %vm1562, %v1508
  %1574 = vst.msk [vmem:[#allocation3 + $0x58] sm:$0xff] %vm1562, %v1509
  %1575 = vst.msk [vmem:[#allocation3 + $0x60] sm:$0xff] %vm1562, %v1510
  %1576 = vst.msk [vmem:[#allocation3 + $0x68] sm:$0xff] %vm1562, %v1511
  %1577 = vst.msk [vmem:[#allocation3 + $0x70] sm:$0xff] %vm1562, %v1512
  %1578 = vst.msk [vmem:[#allocation3 + $0x78] sm:$0xff] %vm1562, %v1513
  %1579 = vst.msk [vmem:[#allocation3 + $0x80] sm:$0xff] %vm1562, %v1514
  %1580 = vst.msk [vmem:[#allocation3 + $0x88] sm:$0xff] %vm1562, %v1515
  %1581 = vst.msk [vmem:[#allocation3 + $0x90] sm:$0xff] %vm1562, %v1516
  %1582 = vst.msk [vmem:[#allocation3 + $0x98] sm:$0xff] %vm1562, %v1517
  %1583 = vst.msk [vmem:[#allocation3 + $0xa0] sm:$0xff] %vm1562, %v1518
  %1584 = vst.msk [vmem:[#allocation3 + $0xa8] sm:$0xff] %vm1562, %v1519
  %1585 = vst.msk [vmem:[#allocation3 + $0xb0] sm:$0xff] %vm1562, %v1520
  %1586 = vst.msk [vmem:[#allocation3 + $0xb8] sm:$0xff] %vm1562, %v1521
  %1587 = vst.msk [vmem:[#allocation3 + $0xc0] sm:$0xff] %vm1562, %v1522
  %1588 = vst.msk [vmem:[#allocation3 + $0xc8] sm:$0xff] %vm1562, %v1523
  %1589 = vst.msk [vmem:[#allocation3 + $0xd0] sm:$0xff] %vm1562, %v1524
  %1590 = vst.msk [vmem:[#allocation3 + $0xd8] sm:$0xff] %vm1562, %v1525
  %1591 = vst.msk [vmem:[#allocation3 + $0xe0] sm:$0xff] %vm1562, %v1526
  %1592 = vst.msk [vmem:[#allocation3 + $0xe8] sm:$0xff] %vm1562, %v1527
  %1593 = vst.msk [vmem:[#allocation3 + $0xf0] sm:$0xff] %vm1562, %v1528
  %1594 = vst.msk [vmem:[#allocation3 + $0xf8] sm:$0xff] %vm1562, %v1529
  %1595 = vst.msk [vmem:[#allocation3 + $0x100] sm:$0xff] %vm1562, %v1530
  %1596 = vst.msk [vmem:[#allocation3 + $0x108] sm:$0xff] %vm1562, %v1531
  %1597 = vst.msk [vmem:[#allocation3 + $0x110] sm:$0xff] %vm1562, %v1532
  %1598 = vst.msk [vmem:[#allocation3 + $0x118] sm:$0xff] %vm1562, %v1533
  %1599 = vst.msk [vmem:[#allocation3 + $0x120] sm:$0xff] %vm1562, %v1534
  %1600 = vst.msk [vmem:[#allocation3 + $0x128] sm:$0xff] %vm1562, %v1535
  %1601 = vst.msk [vmem:[#allocation3 + $0x130] sm:$0xff] %vm1562, %v1536
  %1602 = vst.msk [vmem:[#allocation3 + $0x138] sm:$0xff] %vm1562, %v1537
  %1603 = vst.msk [vmem:[#allocation3 + $0x140] sm:$0xff] %vm1562, %v1538
  %1604 = vst.msk [vmem:[#allocation3 + $0x148] sm:$0xff] %vm1562, %v1539
  %1605 = vst.msk [vmem:[#allocation3 + $0x150] sm:$0xff] %vm1562, %v1540
  %1606 = vst.msk [vmem:[#allocation3 + $0x158] sm:$0xff] %vm1562, %v1541
  %1607 = vst.msk [vmem:[#allocation3 + $0x160] sm:$0xff] %vm1562, %v1542
  %1608 = vst.msk [vmem:[#allocation3 + $0x168] sm:$0xff] %vm1562, %v1543
  %1609 = vst.msk [vmem:[#allocation3 + $0x170] sm:$0xff] %vm1562, %v1544
  %1610 = vst.msk [vmem:[#allocation3 + $0x178] sm:$0xff] %vm1562, %v1545
  %1611 = vst.msk [vmem:[#allocation3 + $0x180] sm:$0xff] %vm1562, %v1546
  %1612 = vst.msk [vmem:[#allocation3 + $0x188] sm:$0xff] %vm1562, %v1547
  %1613 = vst.msk [vmem:[#allocation3 + $0x190] sm:$0xff] %vm1562, %v1548
  %1614 = vst.msk [vmem:[#allocation3 + $0x198] sm:$0xff] %vm1562, %v1549
  %1615 = vst.msk [vmem:[#allocation3 + $0x1a0] sm:$0xff] %vm1562, %v1550
  %1616 = vst.msk [vmem:[#allocation3 + $0x1a8] sm:$0xff] %vm1562, %v1551
  %1617 = vst.msk [vmem:[#allocation3 + $0x1b0] sm:$0xff] %vm1562, %v1552
  %1618 = vst.msk [vmem:[#allocation3 + $0x1b8] sm:$0xff] %vm1562, %v1553
  %1619 = vst.msk [vmem:[#allocation3 + $0x1c0] sm:$0xff] %vm1562, %v1554
  %1620 = vst.msk [vmem:[#allocation3 + $0x1c8] sm:$0xff] %vm1562, %v1555
  %1621 = vst.msk [vmem:[#allocation3 + $0x1d0] sm:$0xff] %vm1562, %v1556
  %1622 = vst.msk [vmem:[#allocation3 + $0x1d8] sm:$0xff] %vm1562, %v1557
  %1623 = vst.msk [vmem:[#allocation3 + $0x1e0] sm:$0xff] %vm1562, %v1558
  %1624 = vst.msk [vmem:[#allocation3 + $0x1e8] sm:$0xff] %vm1562, %v1559
  %1625 = vst.msk [vmem:[#allocation3 + $0x1f0] sm:$0xff] %vm1562, %v1560
  %1626 = vst.msk [vmem:[#allocation3 + $0x1f8] sm:$0xff] %vm1562, %v1561
  %s1627 = smul.u32 0, 512
  %s1628 = sshra.s32 %s1627, 3
  %s1629 = sand.u32 %s1627, 7
  %s1630 = smul.addr %s1628, 4
  %s1631 = scalar_lea.vmem %s1, %s1630
  %v1632 = vld [vmem:[%s1631] sm:$0xf]
  %v1633 = vld [vmem:[%s1631 + $0x4] sm:$0xf]
  %v1634 = vld [vmem:[%s1631 + $0x8] sm:$0xf]
  %v1635 = vld [vmem:[%s1631 + $0xc] sm:$0xf]
  %v1636 = vld [vmem:[%s1631 + $0x10] sm:$0xf]
  %v1637 = vld [vmem:[%s1631 + $0x14] sm:$0xf]
  %v1638 = vld [vmem:[%s1631 + $0x18] sm:$0xf]
  %v1639 = vld [vmem:[%s1631 + $0x1c] sm:$0xf]
  %v1640 = vld [vmem:[%s1631 + $0x20] sm:$0xf]
  %v1641 = vld [vmem:[%s1631 + $0x24] sm:$0xf]
  %v1642 = vld [vmem:[%s1631 + $0x28] sm:$0xf]
  %v1643 = vld [vmem:[%s1631 + $0x2c] sm:$0xf]
  %v1644 = vld [vmem:[%s1631 + $0x30] sm:$0xf]
  %v1645 = vld [vmem:[%s1631 + $0x34] sm:$0xf]
  %v1646 = vld [vmem:[%s1631 + $0x38] sm:$0xf]
  %v1647 = vld [vmem:[%s1631 + $0x3c] sm:$0xf]
  %v1648 = vld [vmem:[%s1631 + $0x40] sm:$0xf]
  %v1649 = vld [vmem:[%s1631 + $0x44] sm:$0xf]
  %v1650 = vld [vmem:[%s1631 + $0x48] sm:$0xf]
  %v1651 = vld [vmem:[%s1631 + $0x4c] sm:$0xf]
  %v1652 = vld [vmem:[%s1631 + $0x50] sm:$0xf]
  %v1653 = vld [vmem:[%s1631 + $0x54] sm:$0xf]
  %v1654 = vld [vmem:[%s1631 + $0x58] sm:$0xf]
  %v1655 = vld [vmem:[%s1631 + $0x5c] sm:$0xf]
  %v1656 = vld [vmem:[%s1631 + $0x60] sm:$0xf]
  %v1657 = vld [vmem:[%s1631 + $0x64] sm:$0xf]
  %v1658 = vld [vmem:[%s1631 + $0x68] sm:$0xf]
  %v1659 = vld [vmem:[%s1631 + $0x6c] sm:$0xf]
  %v1660 = vld [vmem:[%s1631 + $0x70] sm:$0xf]
  %v1661 = vld [vmem:[%s1631 + $0x74] sm:$0xf]
  %v1662 = vld [vmem:[%s1631 + $0x78] sm:$0xf]
  %v1663 = vld [vmem:[%s1631 + $0x7c] sm:$0xf]
  %v1664 = vld [vmem:[%s1631 + $0x80] sm:$0xf]
  %v1665 = vld [vmem:[%s1631 + $0x84] sm:$0xf]
  %v1666 = vld [vmem:[%s1631 + $0x88] sm:$0xf]
  %v1667 = vld [vmem:[%s1631 + $0x8c] sm:$0xf]
  %v1668 = vld [vmem:[%s1631 + $0x90] sm:$0xf]
  %v1669 = vld [vmem:[%s1631 + $0x94] sm:$0xf]
  %v1670 = vld [vmem:[%s1631 + $0x98] sm:$0xf]
  %v1671 = vld [vmem:[%s1631 + $0x9c] sm:$0xf]
  %v1672 = vld [vmem:[%s1631 + $0xa0] sm:$0xf]
  %v1673 = vld [vmem:[%s1631 + $0xa4] sm:$0xf]
  %v1674 = vld [vmem:[%s1631 + $0xa8] sm:$0xf]
  %v1675 = vld [vmem:[%s1631 + $0xac] sm:$0xf]
  %v1676 = vld [vmem:[%s1631 + $0xb0] sm:$0xf]
  %v1677 = vld [vmem:[%s1631 + $0xb4] sm:$0xf]
  %v1678 = vld [vmem:[%s1631 + $0xb8] sm:$0xf]
  %v1679 = vld [vmem:[%s1631 + $0xbc] sm:$0xf]
  %v1680 = vld [vmem:[%s1631 + $0xc0] sm:$0xf]
  %v1681 = vld [vmem:[%s1631 + $0xc4] sm:$0xf]
  %v1682 = vld [vmem:[%s1631 + $0xc8] sm:$0xf]
  %v1683 = vld [vmem:[%s1631 + $0xcc] sm:$0xf]
  %v1684 = vld [vmem:[%s1631 + $0xd0] sm:$0xf]
  %v1685 = vld [vmem:[%s1631 + $0xd4] sm:$0xf]
  %v1686 = vld [vmem:[%s1631 + $0xd8] sm:$0xf]
  %v1687 = vld [vmem:[%s1631 + $0xdc] sm:$0xf]
  %v1688 = vld [vmem:[%s1631 + $0xe0] sm:$0xf]
  %v1689 = vld [vmem:[%s1631 + $0xe4] sm:$0xf]
  %v1690 = vld [vmem:[%s1631 + $0xe8] sm:$0xf]
  %v1691 = vld [vmem:[%s1631 + $0xec] sm:$0xf]
  %v1692 = vld [vmem:[%s1631 + $0xf0] sm:$0xf]
  %v1693 = vld [vmem:[%s1631 + $0xf4] sm:$0xf]
  %v1694 = vld [vmem:[%s1631 + $0xf8] sm:$0xf]
  %v1695 = vld [vmem:[%s1631 + $0xfc] sm:$0xf]
  %v1696 = vld [vmem:[#allocation2] sm:$0xff]
  %v1697 = vld [vmem:[#allocation2 + $0x8] sm:$0xff]
  %v1698 = vld [vmem:[#allocation2 + $0x10] sm:$0xff]
  %v1699 = vld [vmem:[#allocation2 + $0x18] sm:$0xff]
  %v1700 = vld [vmem:[#allocation2 + $0x20] sm:$0xff]
  %v1701 = vld [vmem:[#allocation2 + $0x28] sm:$0xff]
  %v1702 = vld [vmem:[#allocation2 + $0x30] sm:$0xff]
  %v1703 = vld [vmem:[#allocation2 + $0x38] sm:$0xff]
  %v1704 = vld [vmem:[#allocation2 + $0x40] sm:$0xff]
  %v1705 = vld [vmem:[#allocation2 + $0x48] sm:$0xff]
  %v1706 = vld [vmem:[#allocation2 + $0x50] sm:$0xff]
  %v1707 = vld [vmem:[#allocation2 + $0x58] sm:$0xff]
  %v1708 = vld [vmem:[#allocation2 + $0x60] sm:$0xff]
  %v1709 = vld [vmem:[#allocation2 + $0x68] sm:$0xff]
  %v1710 = vld [vmem:[#allocation2 + $0x70] sm:$0xff]
  %v1711 = vld [vmem:[#allocation2 + $0x78] sm:$0xff]
  %v1712 = vld [vmem:[#allocation2 + $0x80] sm:$0xff]
  %v1713 = vld [vmem:[#allocation2 + $0x88] sm:$0xff]
  %v1714 = vld [vmem:[#allocation2 + $0x90] sm:$0xff]
  %v1715 = vld [vmem:[#allocation2 + $0x98] sm:$0xff]
  %v1716 = vld [vmem:[#allocation2 + $0xa0] sm:$0xff]
  %v1717 = vld [vmem:[#allocation2 + $0xa8] sm:$0xff]
  %v1718 = vld [vmem:[#allocation2 + $0xb0] sm:$0xff]
  %v1719 = vld [vmem:[#allocation2 + $0xb8] sm:$0xff]
  %v1720 = vld [vmem:[#allocation2 + $0xc0] sm:$0xff]
  %v1721 = vld [vmem:[#allocation2 + $0xc8] sm:$0xff]
  %v1722 = vld [vmem:[#allocation2 + $0xd0] sm:$0xff]
  %v1723 = vld [vmem:[#allocation2 + $0xd8] sm:$0xff]
  %v1724 = vld [vmem:[#allocation2 + $0xe0] sm:$0xff]
  %v1725 = vld [vmem:[#allocation2 + $0xe8] sm:$0xff]
  %v1726 = vld [vmem:[#allocation2 + $0xf0] sm:$0xff]
  %v1727 = vld [vmem:[#allocation2 + $0xf8] sm:$0xff]
  %v1728 = vld [vmem:[#allocation2 + $0x100] sm:$0xff]
  %v1729 = vld [vmem:[#allocation2 + $0x108] sm:$0xff]
  %v1730 = vld [vmem:[#allocation2 + $0x110] sm:$0xff]
  %v1731 = vld [vmem:[#allocation2 + $0x118] sm:$0xff]
  %v1732 = vld [vmem:[#allocation2 + $0x120] sm:$0xff]
  %v1733 = vld [vmem:[#allocation2 + $0x128] sm:$0xff]
  %v1734 = vld [vmem:[#allocation2 + $0x130] sm:$0xff]
  %v1735 = vld [vmem:[#allocation2 + $0x138] sm:$0xff]
  %v1736 = vld [vmem:[#allocation2 + $0x140] sm:$0xff]
  %v1737 = vld [vmem:[#allocation2 + $0x148] sm:$0xff]
  %v1738 = vld [vmem:[#allocation2 + $0x150] sm:$0xff]
  %v1739 = vld [vmem:[#allocation2 + $0x158] sm:$0xff]
  %v1740 = vld [vmem:[#allocation2 + $0x160] sm:$0xff]
  %v1741 = vld [vmem:[#allocation2 + $0x168] sm:$0xff]
  %v1742 = vld [vmem:[#allocation2 + $0x170] sm:$0xff]
  %v1743 = vld [vmem:[#allocation2 + $0x178] sm:$0xff]
  %v1744 = vld [vmem:[#allocation2 + $0x180] sm:$0xff]
  %v1745 = vld [vmem:[#allocation2 + $0x188] sm:$0xff]
  %v1746 = vld [vmem:[#allocation2 + $0x190] sm:$0xff]
  %v1747 = vld [vmem:[#allocation2 + $0x198] sm:$0xff]
  %v1748 = vld [vmem:[#allocation2 + $0x1a0] sm:$0xff]
  %v1749 = vld [vmem:[#allocation2 + $0x1a8] sm:$0xff]
  %v1750 = vld [vmem:[#allocation2 + $0x1b0] sm:$0xff]
  %v1751 = vld [vmem:[#allocation2 + $0x1b8] sm:$0xff]
  %v1752 = vld [vmem:[#allocation2 + $0x1c0] sm:$0xff]
  %v1753 = vld [vmem:[#allocation2 + $0x1c8] sm:$0xff]
  %v1754 = vld [vmem:[#allocation2 + $0x1d0] sm:$0xff]
  %v1755 = vld [vmem:[#allocation2 + $0x1d8] sm:$0xff]
  %v1756 = vld [vmem:[#allocation2 + $0x1e0] sm:$0xff]
  %v1757 = vld [vmem:[#allocation2 + $0x1e8] sm:$0xff]
  %v1758 = vld [vmem:[#allocation2 + $0x1f0] sm:$0xff]
  %v1759 = vld [vmem:[#allocation2 + $0x1f8] sm:$0xff]
  %v1824 = vunpack.c.l.b16 %v1632
  %v1825 = vunpack.c.l.b16 %v1633
  %v1826 = vunpack.c.l.b16 %v1634
  %v1827 = vunpack.c.l.b16 %v1635
  %v1828 = vunpack.c.l.b16 %v1636
  %v1829 = vunpack.c.l.b16 %v1637
  %v1830 = vunpack.c.l.b16 %v1638
  %v1831 = vunpack.c.l.b16 %v1639
  %v1832 = vunpack.c.l.b16 %v1640
  %v1833 = vunpack.c.l.b16 %v1641
  %v1834 = vunpack.c.l.b16 %v1642
  %v1835 = vunpack.c.l.b16 %v1643
  %v1836 = vunpack.c.l.b16 %v1644
  %v1837 = vunpack.c.l.b16 %v1645
  %v1838 = vunpack.c.l.b16 %v1646
  %v1839 = vunpack.c.l.b16 %v1647
  %v1840 = vunpack.c.l.b16 %v1648
  %v1841 = vunpack.c.l.b16 %v1649
  %v1842 = vunpack.c.l.b16 %v1650
  %v1843 = vunpack.c.l.b16 %v1651
  %v1844 = vunpack.c.l.b16 %v1652
  %v1845 = vunpack.c.l.b16 %v1653
  %v1846 = vunpack.c.l.b16 %v1654
  %v1847 = vunpack.c.l.b16 %v1655
  %v1848 = vunpack.c.l.b16 %v1656
  %v1849 = vunpack.c.l.b16 %v1657
  %v1850 = vunpack.c.l.b16 %v1658
  %v1851 = vunpack.c.l.b16 %v1659
  %v1852 = vunpack.c.l.b16 %v1660
  %v1853 = vunpack.c.l.b16 %v1661
  %v1854 = vunpack.c.l.b16 %v1662
  %v1855 = vunpack.c.l.b16 %v1663
  %v1856 = vunpack.c.l.b16 %v1664
  %v1857 = vunpack.c.l.b16 %v1665
  %v1858 = vunpack.c.l.b16 %v1666
  %v1859 = vunpack.c.l.b16 %v1667
  %v1860 = vunpack.c.l.b16 %v1668
  %v1861 = vunpack.c.l.b16 %v1669
  %v1862 = vunpack.c.l.b16 %v1670
  %v1863 = vunpack.c.l.b16 %v1671
  %v1864 = vunpack.c.l.b16 %v1672
  %v1865 = vunpack.c.l.b16 %v1673
  %v1866 = vunpack.c.l.b16 %v1674
  %v1867 = vunpack.c.l.b16 %v1675
  %v1868 = vunpack.c.l.b16 %v1676
  %v1869 = vunpack.c.l.b16 %v1677
  %v1870 = vunpack.c.l.b16 %v1678
  %v1871 = vunpack.c.l.b16 %v1679
  %v1872 = vunpack.c.l.b16 %v1680
  %v1873 = vunpack.c.l.b16 %v1681
  %v1874 = vunpack.c.l.b16 %v1682
  %v1875 = vunpack.c.l.b16 %v1683
  %v1876 = vunpack.c.l.b16 %v1684
  %v1877 = vunpack.c.l.b16 %v1685
  %v1878 = vunpack.c.l.b16 %v1686
  %v1879 = vunpack.c.l.b16 %v1687
  %v1880 = vunpack.c.l.b16 %v1688
  %v1881 = vunpack.c.l.b16 %v1689
  %v1882 = vunpack.c.l.b16 %v1690
  %v1883 = vunpack.c.l.b16 %v1691
  %v1884 = vunpack.c.l.b16 %v1692
  %v1885 = vunpack.c.l.b16 %v1693
  %v1886 = vunpack.c.l.b16 %v1694
  %v1887 = vunpack.c.l.b16 %v1695
  %v1888 = vpack.c.b16 %v1825, %v1824
  %v1889 = vpack.c.b16 %v1827, %v1826
  %v1890 = vpack.c.b16 %v1829, %v1828
  %v1891 = vpack.c.b16 %v1831, %v1830
  %v1892 = vpack.c.b16 %v1833, %v1832
  %v1893 = vpack.c.b16 %v1835, %v1834
  %v1894 = vpack.c.b16 %v1837, %v1836
  %v1895 = vpack.c.b16 %v1839, %v1838
  %v1896 = vpack.c.b16 %v1841, %v1840
  %v1897 = vpack.c.b16 %v1843, %v1842
  %v1898 = vpack.c.b16 %v1845, %v1844
  %v1899 = vpack.c.b16 %v1847, %v1846
  %v1900 = vpack.c.b16 %v1849, %v1848
  %v1901 = vpack.c.b16 %v1851, %v1850
  %v1902 = vpack.c.b16 %v1853, %v1852
  %v1903 = vpack.c.b16 %v1855, %v1854
  %v1904 = vpack.c.b16 %v1857, %v1856
  %v1905 = vpack.c.b16 %v1859, %v1858
  %v1906 = vpack.c.b16 %v1861, %v1860
  %v1907 = vpack.c.b16 %v1863, %v1862
  %v1908 = vpack.c.b16 %v1865, %v1864
  %v1909 = vpack.c.b16 %v1867, %v1866
  %v1910 = vpack.c.b16 %v1869, %v1868
  %v1911 = vpack.c.b16 %v1871, %v1870
  %v1912 = vpack.c.b16 %v1873, %v1872
  %v1913 = vpack.c.b16 %v1875, %v1874
  %v1914 = vpack.c.b16 %v1877, %v1876
  %v1915 = vpack.c.b16 %v1879, %v1878
  %v1916 = vpack.c.b16 %v1881, %v1880
  %v1917 = vpack.c.b16 %v1883, %v1882
  %v1918 = vpack.c.b16 %v1885, %v1884
  %v1919 = vpack.c.b16 %v1887, %v1886
  %1952 = vmatpush.bf16.msra.mxu0 %v1895
  %1953 = vmatpush.bf16.msra.mxu0 %v1894
  %1954 = vmatpush.bf16.msra.mxu0 %v1893
  %1955 = vmatpush.bf16.msra.mxu0 %v1892
  %1956 = vmatpush.bf16.msra.mxu0 %v1891
  %1957 = vmatpush.bf16.msra.mxu0 %v1890
  %1958 = vmatpush.bf16.msra.mxu0 %v1889
  %1959 = vmatpush.bf16.msra.mxu0 %v1888
  %1960 = vmatmul.bf16.gmra.mxu0 %v730
  %v1961 = vpop.f32.mrf.mxu0
  %v1962 = vadd.f32 0.0, %v1961
  %v1963 = vpop.f32.mrf.mxu0
  %v1964 = vadd.f32 0.0, %v1963
  %1965 = vmatmul.bf16.gmra.mxu0 %v734
  %v1966 = vpop.f32.mrf.mxu0
  %v1967 = vadd.f32 0.0, %v1966
  %v1968 = vpop.f32.mrf.mxu0
  %v1969 = vadd.f32 0.0, %v1968
  %1970 = vmatmul.bf16.gmra.mxu0 %v738
  %v1971 = vpop.f32.mrf.mxu0
  %v1972 = vadd.f32 0.0, %v1971
  %v1973 = vpop.f32.mrf.mxu0
  %v1974 = vadd.f32 0.0, %v1973
  %1975 = vmatmul.bf16.gmra.mxu0 %v742
  %v1976 = vpop.f32.mrf.mxu0
  %v1977 = vadd.f32 0.0, %v1976
  %v1978 = vpop.f32.mrf.mxu0
  %v1979 = vadd.f32 0.0, %v1978
  %1980 = vmatmul.bf16.gmra.mxu0 %v746
  %v1981 = vpop.f32.mrf.mxu0
  %v1982 = vadd.f32 0.0, %v1981
  %v1983 = vpop.f32.mrf.mxu0
  %v1984 = vadd.f32 0.0, %v1983
  %1985 = vmatmul.bf16.gmra.mxu0 %v750
  %v1986 = vpop.f32.mrf.mxu0
  %v1987 = vadd.f32 0.0, %v1986
  %v1988 = vpop.f32.mrf.mxu0
  %v1989 = vadd.f32 0.0, %v1988
  %1990 = vmatmul.bf16.gmra.mxu0 %v754
  %v1991 = vpop.f32.mrf.mxu0
  %v1992 = vadd.f32 0.0, %v1991
  %v1993 = vpop.f32.mrf.mxu0
  %v1994 = vadd.f32 0.0, %v1993
  %1995 = vmatmul.bf16.gmra.mxu0 %v758
  %v1996 = vpop.f32.mrf.mxu0
  %v1997 = vadd.f32 0.0, %v1996
  %v1998 = vpop.f32.mrf.mxu0
  %v1999 = vadd.f32 0.0, %v1998
  %2000 = vmatmul.bf16.gmra.mxu0 %v762
  %v2001 = vpop.f32.mrf.mxu0
  %v2002 = vadd.f32 0.0, %v2001
  %v2003 = vpop.f32.mrf.mxu0
  %v2004 = vadd.f32 0.0, %v2003
  %2005 = vmatmul.bf16.gmra.mxu0 %v766
  %v2006 = vpop.f32.mrf.mxu0
  %v2007 = vadd.f32 0.0, %v2006
  %v2008 = vpop.f32.mrf.mxu0
  %v2009 = vadd.f32 0.0, %v2008
  %2010 = vmatmul.bf16.gmra.mxu0 %v770
  %v2011 = vpop.f32.mrf.mxu0
  %v2012 = vadd.f32 0.0, %v2011
  %v2013 = vpop.f32.mrf.mxu0
  %v2014 = vadd.f32 0.0, %v2013
  %2015 = vmatmul.bf16.gmra.mxu0 %v774
  %v2016 = vpop.f32.mrf.mxu0
  %v2017 = vadd.f32 0.0, %v2016
  %v2018 = vpop.f32.mrf.mxu0
  %v2019 = vadd.f32 0.0, %v2018
  %2020 = vmatmul.bf16.gmra.mxu0 %v778
  %v2021 = vpop.f32.mrf.mxu0
  %v2022 = vadd.f32 0.0, %v2021
  %v2023 = vpop.f32.mrf.mxu0
  %v2024 = vadd.f32 0.0, %v2023
  %2025 = vmatmul.bf16.gmra.mxu0 %v782
  %v2026 = vpop.f32.mrf.mxu0
  %v2027 = vadd.f32 0.0, %v2026
  %v2028 = vpop.f32.mrf.mxu0
  %v2029 = vadd.f32 0.0, %v2028
  %2030 = vmatmul.bf16.gmra.mxu0 %v786
  %v2031 = vpop.f32.mrf.mxu0
  %v2032 = vadd.f32 0.0, %v2031
  %v2033 = vpop.f32.mrf.mxu0
  %v2034 = vadd.f32 0.0, %v2033
  %2035 = vmatmul.bf16.gmra.mxu0 %v790
  %v2036 = vpop.f32.mrf.mxu0
  %v2037 = vadd.f32 0.0, %v2036
  %v2038 = vpop.f32.mrf.mxu0
  %v2039 = vadd.f32 0.0, %v2038
  %2040 = vmatmul.bf16.gmra.mxu0 %v794
  %v2041 = vpop.f32.mrf.mxu0
  %v2042 = vadd.f32 0.0, %v2041
  %v2043 = vpop.f32.mrf.mxu0
  %v2044 = vadd.f32 0.0, %v2043
  %2045 = vmatmul.bf16.gmra.mxu0 %v798
  %v2046 = vpop.f32.mrf.mxu0
  %v2047 = vadd.f32 0.0, %v2046
  %v2048 = vpop.f32.mrf.mxu0
  %v2049 = vadd.f32 0.0, %v2048
  %2050 = vmatmul.bf16.gmra.mxu0 %v802
  %v2051 = vpop.f32.mrf.mxu0
  %v2052 = vadd.f32 0.0, %v2051
  %v2053 = vpop.f32.mrf.mxu0
  %v2054 = vadd.f32 0.0, %v2053
  %2055 = vmatmul.bf16.gmra.mxu0 %v806
  %v2056 = vpop.f32.mrf.mxu0
  %v2057 = vadd.f32 0.0, %v2056
  %v2058 = vpop.f32.mrf.mxu0
  %v2059 = vadd.f32 0.0, %v2058
  %2060 = vmatmul.bf16.gmra.mxu0 %v810
  %v2061 = vpop.f32.mrf.mxu0
  %v2062 = vadd.f32 0.0, %v2061
  %v2063 = vpop.f32.mrf.mxu0
  %v2064 = vadd.f32 0.0, %v2063
  %2065 = vmatmul.bf16.gmra.mxu0 %v814
  %v2066 = vpop.f32.mrf.mxu0
  %v2067 = vadd.f32 0.0, %v2066
  %v2068 = vpop.f32.mrf.mxu0
  %v2069 = vadd.f32 0.0, %v2068
  %2070 = vmatmul.bf16.gmra.mxu0 %v818
  %v2071 = vpop.f32.mrf.mxu0
  %v2072 = vadd.f32 0.0, %v2071
  %v2073 = vpop.f32.mrf.mxu0
  %v2074 = vadd.f32 0.0, %v2073
  %2075 = vmatmul.bf16.gmra.mxu0 %v822
  %v2076 = vpop.f32.mrf.mxu0
  %v2077 = vadd.f32 0.0, %v2076
  %v2078 = vpop.f32.mrf.mxu0
  %v2079 = vadd.f32 0.0, %v2078
  %2080 = vmatmul.bf16.gmra.mxu0 %v826
  %v2081 = vpop.f32.mrf.mxu0
  %v2082 = vadd.f32 0.0, %v2081
  %v2083 = vpop.f32.mrf.mxu0
  %v2084 = vadd.f32 0.0, %v2083
  %2085 = vmatmul.bf16.gmra.mxu0 %v830
  %v2086 = vpop.f32.mrf.mxu0
  %v2087 = vadd.f32 0.0, %v2086
  %v2088 = vpop.f32.mrf.mxu0
  %v2089 = vadd.f32 0.0, %v2088
  %2090 = vmatmul.bf16.gmra.mxu0 %v834
  %v2091 = vpop.f32.mrf.mxu0
  %v2092 = vadd.f32 0.0, %v2091
  %v2093 = vpop.f32.mrf.mxu0
  %v2094 = vadd.f32 0.0, %v2093
  %2095 = vmatmul.bf16.gmra.mxu0 %v838
  %v2096 = vpop.f32.mrf.mxu0
  %v2097 = vadd.f32 0.0, %v2096
  %v2098 = vpop.f32.mrf.mxu0
  %v2099 = vadd.f32 0.0, %v2098
  %2100 = vmatmul.bf16.gmra.mxu0 %v842
  %v2101 = vpop.f32.mrf.mxu0
  %v2102 = vadd.f32 0.0, %v2101
  %v2103 = vpop.f32.mrf.mxu0
  %v2104 = vadd.f32 0.0, %v2103
  %2105 = vmatmul.bf16.gmra.mxu0 %v846
  %v2106 = vpop.f32.mrf.mxu0
  %v2107 = vadd.f32 0.0, %v2106
  %v2108 = vpop.f32.mrf.mxu0
  %v2109 = vadd.f32 0.0, %v2108
  %2110 = vmatmul.bf16.gmra.mxu0 %v850
  %v2111 = vpop.f32.mrf.mxu0
  %v2112 = vadd.f32 0.0, %v2111
  %v2113 = vpop.f32.mrf.mxu0
  %v2114 = vadd.f32 0.0, %v2113
  %2115 = vmatmul.bf16.gmra.mxu0 %v854
  %v2116 = vpop.f32.mrf.mxu0
  %v2117 = vadd.f32 0.0, %v2116
  %v2118 = vpop.f32.mrf.mxu0
  %v2119 = vadd.f32 0.0, %v2118
  %2120 = vdwg.mxu0
  %2121 = vmatpush.bf16.msra.mxu0 %v1903
  %2122 = vmatpush.bf16.msra.mxu0 %v1902
  %2123 = vmatpush.bf16.msra.mxu0 %v1901
  %2124 = vmatpush.bf16.msra.mxu0 %v1900
  %2125 = vmatpush.bf16.msra.mxu0 %v1899
  %2126 = vmatpush.bf16.msra.mxu0 %v1898
  %2127 = vmatpush.bf16.msra.mxu0 %v1897
  %2128 = vmatpush.bf16.msra.mxu0 %v1896
  %2129 = vmatmul.bf16.gmra.mxu0 %v731
  %v2130 = vpop.f32.mrf.mxu0
  %v2131 = vadd.f32 %v1962, %v2130
  %v2132 = vpop.f32.mrf.mxu0
  %v2133 = vadd.f32 %v1964, %v2132
  %2134 = vmatmul.bf16.gmra.mxu0 %v735
  %v2135 = vpop.f32.mrf.mxu0
  %v2136 = vadd.f32 %v1967, %v2135
  %v2137 = vpop.f32.mrf.mxu0
  %v2138 = vadd.f32 %v1969, %v2137
  %2139 = vmatmul.bf16.gmra.mxu0 %v739
  %v2140 = vpop.f32.mrf.mxu0
  %v2141 = vadd.f32 %v1972, %v2140
  %v2142 = vpop.f32.mrf.mxu0
  %v2143 = vadd.f32 %v1974, %v2142
  %2144 = vmatmul.bf16.gmra.mxu0 %v743
  %v2145 = vpop.f32.mrf.mxu0
  %v2146 = vadd.f32 %v1977, %v2145
  %v2147 = vpop.f32.mrf.mxu0
  %v2148 = vadd.f32 %v1979, %v2147
  %2149 = vmatmul.bf16.gmra.mxu0 %v747
  %v2150 = vpop.f32.mrf.mxu0
  %v2151 = vadd.f32 %v1982, %v2150
  %v2152 = vpop.f32.mrf.mxu0
  %v2153 = vadd.f32 %v1984, %v2152
  %2154 = vmatmul.bf16.gmra.mxu0 %v751
  %v2155 = vpop.f32.mrf.mxu0
  %v2156 = vadd.f32 %v1987, %v2155
  %v2157 = vpop.f32.mrf.mxu0
  %v2158 = vadd.f32 %v1989, %v2157
  %2159 = vmatmul.bf16.gmra.mxu0 %v755
  %v2160 = vpop.f32.mrf.mxu0
  %v2161 = vadd.f32 %v1992, %v2160
  %v2162 = vpop.f32.mrf.mxu0
  %v2163 = vadd.f32 %v1994, %v2162
  %2164 = vmatmul.bf16.gmra.mxu0 %v759
  %v2165 = vpop.f32.mrf.mxu0
  %v2166 = vadd.f32 %v1997, %v2165
  %v2167 = vpop.f32.mrf.mxu0
  %v2168 = vadd.f32 %v1999, %v2167
  %2169 = vmatmul.bf16.gmra.mxu0 %v763
  %v2170 = vpop.f32.mrf.mxu0
  %v2171 = vadd.f32 %v2002, %v2170
  %v2172 = vpop.f32.mrf.mxu0
  %v2173 = vadd.f32 %v2004, %v2172
  %2174 = vmatmul.bf16.gmra.mxu0 %v767
  %v2175 = vpop.f32.mrf.mxu0
  %v2176 = vadd.f32 %v2007, %v2175
  %v2177 = vpop.f32.mrf.mxu0
  %v2178 = vadd.f32 %v2009, %v2177
  %2179 = vmatmul.bf16.gmra.mxu0 %v771
  %v2180 = vpop.f32.mrf.mxu0
  %v2181 = vadd.f32 %v2012, %v2180
  %v2182 = vpop.f32.mrf.mxu0
  %v2183 = vadd.f32 %v2014, %v2182
  %2184 = vmatmul.bf16.gmra.mxu0 %v775
  %v2185 = vpop.f32.mrf.mxu0
  %v2186 = vadd.f32 %v2017, %v2185
  %v2187 = vpop.f32.mrf.mxu0
  %v2188 = vadd.f32 %v2019, %v2187
  %2189 = vmatmul.bf16.gmra.mxu0 %v779
  %v2190 = vpop.f32.mrf.mxu0
  %v2191 = vadd.f32 %v2022, %v2190
  %v2192 = vpop.f32.mrf.mxu0
  %v2193 = vadd.f32 %v2024, %v2192
  %2194 = vmatmul.bf16.gmra.mxu0 %v783
  %v2195 = vpop.f32.mrf.mxu0
  %v2196 = vadd.f32 %v2027, %v2195
  %v2197 = vpop.f32.mrf.mxu0
  %v2198 = vadd.f32 %v2029, %v2197
  %2199 = vmatmul.bf16.gmra.mxu0 %v787
  %v2200 = vpop.f32.mrf.mxu0
  %v2201 = vadd.f32 %v2032, %v2200
  %v2202 = vpop.f32.mrf.mxu0
  %v2203 = vadd.f32 %v2034, %v2202
  %2204 = vmatmul.bf16.gmra.mxu0 %v791
  %v2205 = vpop.f32.mrf.mxu0
  %v2206 = vadd.f32 %v2037, %v2205
  %v2207 = vpop.f32.mrf.mxu0
  %v2208 = vadd.f32 %v2039, %v2207
  %2209 = vmatmul.bf16.gmra.mxu0 %v795
  %v2210 = vpop.f32.mrf.mxu0
  %v2211 = vadd.f32 %v2042, %v2210
  %v2212 = vpop.f32.mrf.mxu0
  %v2213 = vadd.f32 %v2044, %v2212
  %2214 = vmatmul.bf16.gmra.mxu0 %v799
  %v2215 = vpop.f32.mrf.mxu0
  %v2216 = vadd.f32 %v2047, %v2215
  %v2217 = vpop.f32.mrf.mxu0
  %v2218 = vadd.f32 %v2049, %v2217
  %2219 = vmatmul.bf16.gmra.mxu0 %v803
  %v2220 = vpop.f32.mrf.mxu0
  %v2221 = vadd.f32 %v2052, %v2220
  %v2222 = vpop.f32.mrf.mxu0
  %v2223 = vadd.f32 %v2054, %v2222
  %2224 = vmatmul.bf16.gmra.mxu0 %v807
  %v2225 = vpop.f32.mrf.mxu0
  %v2226 = vadd.f32 %v2057, %v2225
  %v2227 = vpop.f32.mrf.mxu0
  %v2228 = vadd.f32 %v2059, %v2227
  %2229 = vmatmul.bf16.gmra.mxu0 %v811
  %v2230 = vpop.f32.mrf.mxu0
  %v2231 = vadd.f32 %v2062, %v2230
  %v2232 = vpop.f32.mrf.mxu0
  %v2233 = vadd.f32 %v2064, %v2232
  %2234 = vmatmul.bf16.gmra.mxu0 %v815
  %v2235 = vpop.f32.mrf.mxu0
  %v2236 = vadd.f32 %v2067, %v2235
  %v2237 = vpop.f32.mrf.mxu0
  %v2238 = vadd.f32 %v2069, %v2237
  %2239 = vmatmul.bf16.gmra.mxu0 %v819
  %v2240 = vpop.f32.mrf.mxu0
  %v2241 = vadd.f32 %v2072, %v2240
  %v2242 = vpop.f32.mrf.mxu0
  %v2243 = vadd.f32 %v2074, %v2242
  %2244 = vmatmul.bf16.gmra.mxu0 %v823
  %v2245 = vpop.f32.mrf.mxu0
  %v2246 = vadd.f32 %v2077, %v2245
  %v2247 = vpop.f32.mrf.mxu0
  %v2248 = vadd.f32 %v2079, %v2247
  %2249 = vmatmul.bf16.gmra.mxu0 %v827
  %v2250 = vpop.f32.mrf.mxu0
  %v2251 = vadd.f32 %v2082, %v2250
  %v2252 = vpop.f32.mrf.mxu0
  %v2253 = vadd.f32 %v2084, %v2252
  %2254 = vmatmul.bf16.gmra.mxu0 %v831
  %v2255 = vpop.f32.mrf.mxu0
  %v2256 = vadd.f32 %v2087, %v2255
  %v2257 = vpop.f32.mrf.mxu0
  %v2258 = vadd.f32 %v2089, %v2257
  %2259 = vmatmul.bf16.gmra.mxu0 %v835
  %v2260 = vpop.f32.mrf.mxu0
  %v2261 = vadd.f32 %v2092, %v2260
  %v2262 = vpop.f32.mrf.mxu0
  %v2263 = vadd.f32 %v2094, %v2262
  %2264 = vmatmul.bf16.gmra.mxu0 %v839
  %v2265 = vpop.f32.mrf.mxu0
  %v2266 = vadd.f32 %v2097, %v2265
  %v2267 = vpop.f32.mrf.mxu0
  %v2268 = vadd.f32 %v2099, %v2267
  %2269 = vmatmul.bf16.gmra.mxu0 %v843
  %v2270 = vpop.f32.mrf.mxu0
  %v2271 = vadd.f32 %v2102, %v2270
  %v2272 = vpop.f32.mrf.mxu0
  %v2273 = vadd.f32 %v2104, %v2272
  %2274 = vmatmul.bf16.gmra.mxu0 %v847
  %v2275 = vpop.f32.mrf.mxu0
  %v2276 = vadd.f32 %v2107, %v2275
  %v2277 = vpop.f32.mrf.mxu0
  %v2278 = vadd.f32 %v2109, %v2277
  %2279 = vmatmul.bf16.gmra.mxu0 %v851
  %v2280 = vpop.f32.mrf.mxu0
  %v2281 = vadd.f32 %v2112, %v2280
  %v2282 = vpop.f32.mrf.mxu0
  %v2283 = vadd.f32 %v2114, %v2282
  %2284 = vmatmul.bf16.gmra.mxu0 %v855
  %v2285 = vpop.f32.mrf.mxu0
  %v2286 = vadd.f32 %v2117, %v2285
  %v2287 = vpop.f32.mrf.mxu0
  %v2288 = vadd.f32 %v2119, %v2287
  %2289 = vdwg.mxu0
  %2290 = vmatpush.bf16.msra.mxu0 %v1911
  %2291 = vmatpush.bf16.msra.mxu0 %v1910
  %2292 = vmatpush.bf16.msra.mxu0 %v1909
  %2293 = vmatpush.bf16.msra.mxu0 %v1908
  %2294 = vmatpush.bf16.msra.mxu0 %v1907
  %2295 = vmatpush.bf16.msra.mxu0 %v1906
  %2296 = vmatpush.bf16.msra.mxu0 %v1905
  %2297 = vmatpush.bf16.msra.mxu0 %v1904
  %2298 = vmatmul.bf16.gmra.mxu0 %v732
  %v2299 = vpop.f32.mrf.mxu0
  %v2300 = vadd.f32 %v2131, %v2299
  %v2301 = vpop.f32.mrf.mxu0
  %v2302 = vadd.f32 %v2133, %v2301
  %2303 = vmatmul.bf16.gmra.mxu0 %v736
  %v2304 = vpop.f32.mrf.mxu0
  %v2305 = vadd.f32 %v2136, %v2304
  %v2306 = vpop.f32.mrf.mxu0
  %v2307 = vadd.f32 %v2138, %v2306
  %2308 = vmatmul.bf16.gmra.mxu0 %v740
  %v2309 = vpop.f32.mrf.mxu0
  %v2310 = vadd.f32 %v2141, %v2309
  %v2311 = vpop.f32.mrf.mxu0
  %v2312 = vadd.f32 %v2143, %v2311
  %2313 = vmatmul.bf16.gmra.mxu0 %v744
  %v2314 = vpop.f32.mrf.mxu0
  %v2315 = vadd.f32 %v2146, %v2314
  %v2316 = vpop.f32.mrf.mxu0
  %v2317 = vadd.f32 %v2148, %v2316
  %2318 = vmatmul.bf16.gmra.mxu0 %v748
  %v2319 = vpop.f32.mrf.mxu0
  %v2320 = vadd.f32 %v2151, %v2319
  %v2321 = vpop.f32.mrf.mxu0
  %v2322 = vadd.f32 %v2153, %v2321
  %2323 = vmatmul.bf16.gmra.mxu0 %v752
  %v2324 = vpop.f32.mrf.mxu0
  %v2325 = vadd.f32 %v2156, %v2324
  %v2326 = vpop.f32.mrf.mxu0
  %v2327 = vadd.f32 %v2158, %v2326
  %2328 = vmatmul.bf16.gmra.mxu0 %v756
  %v2329 = vpop.f32.mrf.mxu0
  %v2330 = vadd.f32 %v2161, %v2329
  %v2331 = vpop.f32.mrf.mxu0
  %v2332 = vadd.f32 %v2163, %v2331
  %2333 = vmatmul.bf16.gmra.mxu0 %v760
  %v2334 = vpop.f32.mrf.mxu0
  %v2335 = vadd.f32 %v2166, %v2334
  %v2336 = vpop.f32.mrf.mxu0
  %v2337 = vadd.f32 %v2168, %v2336
  %2338 = vmatmul.bf16.gmra.mxu0 %v764
  %v2339 = vpop.f32.mrf.mxu0
  %v2340 = vadd.f32 %v2171, %v2339
  %v2341 = vpop.f32.mrf.mxu0
  %v2342 = vadd.f32 %v2173, %v2341
  %2343 = vmatmul.bf16.gmra.mxu0 %v768
  %v2344 = vpop.f32.mrf.mxu0
  %v2345 = vadd.f32 %v2176, %v2344
  %v2346 = vpop.f32.mrf.mxu0
  %v2347 = vadd.f32 %v2178, %v2346
  %2348 = vmatmul.bf16.gmra.mxu0 %v772
  %v2349 = vpop.f32.mrf.mxu0
  %v2350 = vadd.f32 %v2181, %v2349
  %v2351 = vpop.f32.mrf.mxu0
  %v2352 = vadd.f32 %v2183, %v2351
  %2353 = vmatmul.bf16.gmra.mxu0 %v776
  %v2354 = vpop.f32.mrf.mxu0
  %v2355 = vadd.f32 %v2186, %v2354
  %v2356 = vpop.f32.mrf.mxu0
  %v2357 = vadd.f32 %v2188, %v2356
  %2358 = vmatmul.bf16.gmra.mxu0 %v780
  %v2359 = vpop.f32.mrf.mxu0
  %v2360 = vadd.f32 %v2191, %v2359
  %v2361 = vpop.f32.mrf.mxu0
  %v2362 = vadd.f32 %v2193, %v2361
  %2363 = vmatmul.bf16.gmra.mxu0 %v784
  %v2364 = vpop.f32.mrf.mxu0
  %v2365 = vadd.f32 %v2196, %v2364
  %v2366 = vpop.f32.mrf.mxu0
  %v2367 = vadd.f32 %v2198, %v2366
  %2368 = vmatmul.bf16.gmra.mxu0 %v788
  %v2369 = vpop.f32.mrf.mxu0
  %v2370 = vadd.f32 %v2201, %v2369
  %v2371 = vpop.f32.mrf.mxu0
  %v2372 = vadd.f32 %v2203, %v2371
  %2373 = vmatmul.bf16.gmra.mxu0 %v792
  %v2374 = vpop.f32.mrf.mxu0
  %v2375 = vadd.f32 %v2206, %v2374
  %v2376 = vpop.f32.mrf.mxu0
  %v2377 = vadd.f32 %v2208, %v2376
  %2378 = vmatmul.bf16.gmra.mxu0 %v796
  %v2379 = vpop.f32.mrf.mxu0
  %v2380 = vadd.f32 %v2211, %v2379
  %v2381 = vpop.f32.mrf.mxu0
  %v2382 = vadd.f32 %v2213, %v2381
  %2383 = vmatmul.bf16.gmra.mxu0 %v800
  %v2384 = vpop.f32.mrf.mxu0
  %v2385 = vadd.f32 %v2216, %v2384
  %v2386 = vpop.f32.mrf.mxu0
  %v2387 = vadd.f32 %v2218, %v2386
  %2388 = vmatmul.bf16.gmra.mxu0 %v804
  %v2389 = vpop.f32.mrf.mxu0
  %v2390 = vadd.f32 %v2221, %v2389
  %v2391 = vpop.f32.mrf.mxu0
  %v2392 = vadd.f32 %v2223, %v2391
  %2393 = vmatmul.bf16.gmra.mxu0 %v808
  %v2394 = vpop.f32.mrf.mxu0
  %v2395 = vadd.f32 %v2226, %v2394
  %v2396 = vpop.f32.mrf.mxu0
  %v2397 = vadd.f32 %v2228, %v2396
  %2398 = vmatmul.bf16.gmra.mxu0 %v812
  %v2399 = vpop.f32.mrf.mxu0
  %v2400 = vadd.f32 %v2231, %v2399
  %v2401 = vpop.f32.mrf.mxu0
  %v2402 = vadd.f32 %v2233, %v2401
  %2403 = vmatmul.bf16.gmra.mxu0 %v816
  %v2404 = vpop.f32.mrf.mxu0
  %v2405 = vadd.f32 %v2236, %v2404
  %v2406 = vpop.f32.mrf.mxu0
  %v2407 = vadd.f32 %v2238, %v2406
  %2408 = vmatmul.bf16.gmra.mxu0 %v820
  %v2409 = vpop.f32.mrf.mxu0
  %v2410 = vadd.f32 %v2241, %v2409
  %v2411 = vpop.f32.mrf.mxu0
  %v2412 = vadd.f32 %v2243, %v2411
  %2413 = vmatmul.bf16.gmra.mxu0 %v824
  %v2414 = vpop.f32.mrf.mxu0
  %v2415 = vadd.f32 %v2246, %v2414
  %v2416 = vpop.f32.mrf.mxu0
  %v2417 = vadd.f32 %v2248, %v2416
  %2418 = vmatmul.bf16.gmra.mxu0 %v828
  %v2419 = vpop.f32.mrf.mxu0
  %v2420 = vadd.f32 %v2251, %v2419
  %v2421 = vpop.f32.mrf.mxu0
  %v2422 = vadd.f32 %v2253, %v2421
  %2423 = vmatmul.bf16.gmra.mxu0 %v832
  %v2424 = vpop.f32.mrf.mxu0
  %v2425 = vadd.f32 %v2256, %v2424
  %v2426 = vpop.f32.mrf.mxu0
  %v2427 = vadd.f32 %v2258, %v2426
  %2428 = vmatmul.bf16.gmra.mxu0 %v836
  %v2429 = vpop.f32.mrf.mxu0
  %v2430 = vadd.f32 %v2261, %v2429
  %v2431 = vpop.f32.mrf.mxu0
  %v2432 = vadd.f32 %v2263, %v2431
  %2433 = vmatmul.bf16.gmra.mxu0 %v840
  %v2434 = vpop.f32.mrf.mxu0
  %v2435 = vadd.f32 %v2266, %v2434
  %v2436 = vpop.f32.mrf.mxu0
  %v2437 = vadd.f32 %v2268, %v2436
  %2438 = vmatmul.bf16.gmra.mxu0 %v844
  %v2439 = vpop.f32.mrf.mxu0
  %v2440 = vadd.f32 %v2271, %v2439
  %v2441 = vpop.f32.mrf.mxu0
  %v2442 = vadd.f32 %v2273, %v2441
  %2443 = vmatmul.bf16.gmra.mxu0 %v848
  %v2444 = vpop.f32.mrf.mxu0
  %v2445 = vadd.f32 %v2276, %v2444
  %v2446 = vpop.f32.mrf.mxu0
  %v2447 = vadd.f32 %v2278, %v2446
  %2448 = vmatmul.bf16.gmra.mxu0 %v852
  %v2449 = vpop.f32.mrf.mxu0
  %v2450 = vadd.f32 %v2281, %v2449
  %v2451 = vpop.f32.mrf.mxu0
  %v2452 = vadd.f32 %v2283, %v2451
  %2453 = vmatmul.bf16.gmra.mxu0 %v856
  %v2454 = vpop.f32.mrf.mxu0
  %v2455 = vadd.f32 %v2286, %v2454
  %v2456 = vpop.f32.mrf.mxu0
  %v2457 = vadd.f32 %v2288, %v2456
  %2458 = vdwg.mxu0
  %2459 = vmatpush.bf16.msra.mxu0 %v1919
  %2460 = vmatpush.bf16.msra.mxu0 %v1918
  %2461 = vmatpush.bf16.msra.mxu0 %v1917
  %2462 = vmatpush.bf16.msra.mxu0 %v1916
  %2463 = vmatpush.bf16.msra.mxu0 %v1915
  %2464 = vmatpush.bf16.msra.mxu0 %v1914
  %2465 = vmatpush.bf16.msra.mxu0 %v1913
  %2466 = vmatpush.bf16.msra.mxu0 %v1912
  %2467 = vmatmul.bf16.gmra.mxu0 %v733
  %v2468 = vpop.f32.mrf.mxu0
  %v2469 = vadd.f32 %v2300, %v2468
  %v2470 = vpop.f32.mrf.mxu0
  %v2471 = vadd.f32 %v2302, %v2470
  %2472 = vmatmul.bf16.gmra.mxu0 %v737
  %v2473 = vpop.f32.mrf.mxu0
  %v2474 = vadd.f32 %v2305, %v2473
  %v2475 = vpop.f32.mrf.mxu0
  %v2476 = vadd.f32 %v2307, %v2475
  %2477 = vmatmul.bf16.gmra.mxu0 %v741
  %v2478 = vpop.f32.mrf.mxu0
  %v2479 = vadd.f32 %v2310, %v2478
  %v2480 = vpop.f32.mrf.mxu0
  %v2481 = vadd.f32 %v2312, %v2480
  %2482 = vmatmul.bf16.gmra.mxu0 %v745
  %v2483 = vpop.f32.mrf.mxu0
  %v2484 = vadd.f32 %v2315, %v2483
  %v2485 = vpop.f32.mrf.mxu0
  %v2486 = vadd.f32 %v2317, %v2485
  %2487 = vmatmul.bf16.gmra.mxu0 %v749
  %v2488 = vpop.f32.mrf.mxu0
  %v2489 = vadd.f32 %v2320, %v2488
  %v2490 = vpop.f32.mrf.mxu0
  %v2491 = vadd.f32 %v2322, %v2490
  %2492 = vmatmul.bf16.gmra.mxu0 %v753
  %v2493 = vpop.f32.mrf.mxu0
  %v2494 = vadd.f32 %v2325, %v2493
  %v2495 = vpop.f32.mrf.mxu0
  %v2496 = vadd.f32 %v2327, %v2495
  %2497 = vmatmul.bf16.gmra.mxu0 %v757
  %v2498 = vpop.f32.mrf.mxu0
  %v2499 = vadd.f32 %v2330, %v2498
  %v2500 = vpop.f32.mrf.mxu0
  %v2501 = vadd.f32 %v2332, %v2500
  %2502 = vmatmul.bf16.gmra.mxu0 %v761
  %v2503 = vpop.f32.mrf.mxu0
  %v2504 = vadd.f32 %v2335, %v2503
  %v2505 = vpop.f32.mrf.mxu0
  %v2506 = vadd.f32 %v2337, %v2505
  %2507 = vmatmul.bf16.gmra.mxu0 %v765
  %v2508 = vpop.f32.mrf.mxu0
  %v2509 = vadd.f32 %v2340, %v2508
  %v2510 = vpop.f32.mrf.mxu0
  %v2511 = vadd.f32 %v2342, %v2510
  %2512 = vmatmul.bf16.gmra.mxu0 %v769
  %v2513 = vpop.f32.mrf.mxu0
  %v2514 = vadd.f32 %v2345, %v2513
  %v2515 = vpop.f32.mrf.mxu0
  %v2516 = vadd.f32 %v2347, %v2515
  %2517 = vmatmul.bf16.gmra.mxu0 %v773
  %v2518 = vpop.f32.mrf.mxu0
  %v2519 = vadd.f32 %v2350, %v2518
  %v2520 = vpop.f32.mrf.mxu0
  %v2521 = vadd.f32 %v2352, %v2520
  %2522 = vmatmul.bf16.gmra.mxu0 %v777
  %v2523 = vpop.f32.mrf.mxu0
  %v2524 = vadd.f32 %v2355, %v2523
  %v2525 = vpop.f32.mrf.mxu0
  %v2526 = vadd.f32 %v2357, %v2525
  %2527 = vmatmul.bf16.gmra.mxu0 %v781
  %v2528 = vpop.f32.mrf.mxu0
  %v2529 = vadd.f32 %v2360, %v2528
  %v2530 = vpop.f32.mrf.mxu0
  %v2531 = vadd.f32 %v2362, %v2530
  %2532 = vmatmul.bf16.gmra.mxu0 %v785
  %v2533 = vpop.f32.mrf.mxu0
  %v2534 = vadd.f32 %v2365, %v2533
  %v2535 = vpop.f32.mrf.mxu0
  %v2536 = vadd.f32 %v2367, %v2535
  %2537 = vmatmul.bf16.gmra.mxu0 %v789
  %v2538 = vpop.f32.mrf.mxu0
  %v2539 = vadd.f32 %v2370, %v2538
  %v2540 = vpop.f32.mrf.mxu0
  %v2541 = vadd.f32 %v2372, %v2540
  %2542 = vmatmul.bf16.gmra.mxu0 %v793
  %v2543 = vpop.f32.mrf.mxu0
  %v2544 = vadd.f32 %v2375, %v2543
  %v2545 = vpop.f32.mrf.mxu0
  %v2546 = vadd.f32 %v2377, %v2545
  %2547 = vmatmul.bf16.gmra.mxu0 %v797
  %v2548 = vpop.f32.mrf.mxu0
  %v2549 = vadd.f32 %v2380, %v2548
  %v2550 = vpop.f32.mrf.mxu0
  %v2551 = vadd.f32 %v2382, %v2550
  %2552 = vmatmul.bf16.gmra.mxu0 %v801
  %v2553 = vpop.f32.mrf.mxu0
  %v2554 = vadd.f32 %v2385, %v2553
  %v2555 = vpop.f32.mrf.mxu0
  %v2556 = vadd.f32 %v2387, %v2555
  %2557 = vmatmul.bf16.gmra.mxu0 %v805
  %v2558 = vpop.f32.mrf.mxu0
  %v2559 = vadd.f32 %v2390, %v2558
  %v2560 = vpop.f32.mrf.mxu0
  %v2561 = vadd.f32 %v2392, %v2560
  %2562 = vmatmul.bf16.gmra.mxu0 %v809
  %v2563 = vpop.f32.mrf.mxu0
  %v2564 = vadd.f32 %v2395, %v2563
  %v2565 = vpop.f32.mrf.mxu0
  %v2566 = vadd.f32 %v2397, %v2565
  %2567 = vmatmul.bf16.gmra.mxu0 %v813
  %v2568 = vpop.f32.mrf.mxu0
  %v2569 = vadd.f32 %v2400, %v2568
  %v2570 = vpop.f32.mrf.mxu0
  %v2571 = vadd.f32 %v2402, %v2570
  %2572 = vmatmul.bf16.gmra.mxu0 %v817
  %v2573 = vpop.f32.mrf.mxu0
  %v2574 = vadd.f32 %v2405, %v2573
  %v2575 = vpop.f32.mrf.mxu0
  %v2576 = vadd.f32 %v2407, %v2575
  %2577 = vmatmul.bf16.gmra.mxu0 %v821
  %v2578 = vpop.f32.mrf.mxu0
  %v2579 = vadd.f32 %v2410, %v2578
  %v2580 = vpop.f32.mrf.mxu0
  %v2581 = vadd.f32 %v2412, %v2580
  %2582 = vmatmul.bf16.gmra.mxu0 %v825
  %v2583 = vpop.f32.mrf.mxu0
  %v2584 = vadd.f32 %v2415, %v2583
  %v2585 = vpop.f32.mrf.mxu0
  %v2586 = vadd.f32 %v2417, %v2585
  %2587 = vmatmul.bf16.gmra.mxu0 %v829
  %v2588 = vpop.f32.mrf.mxu0
  %v2589 = vadd.f32 %v2420, %v2588
  %v2590 = vpop.f32.mrf.mxu0
  %v2591 = vadd.f32 %v2422, %v2590
  %2592 = vmatmul.bf16.gmra.mxu0 %v833
  %v2593 = vpop.f32.mrf.mxu0
  %v2594 = vadd.f32 %v2425, %v2593
  %v2595 = vpop.f32.mrf.mxu0
  %v2596 = vadd.f32 %v2427, %v2595
  %2597 = vmatmul.bf16.gmra.mxu0 %v837
  %v2598 = vpop.f32.mrf.mxu0
  %v2599 = vadd.f32 %v2430, %v2598
  %v2600 = vpop.f32.mrf.mxu0
  %v2601 = vadd.f32 %v2432, %v2600
  %2602 = vmatmul.bf16.gmra.mxu0 %v841
  %v2603 = vpop.f32.mrf.mxu0
  %v2604 = vadd.f32 %v2435, %v2603
  %v2605 = vpop.f32.mrf.mxu0
  %v2606 = vadd.f32 %v2437, %v2605
  %2607 = vmatmul.bf16.gmra.mxu0 %v845
  %v2608 = vpop.f32.mrf.mxu0
  %v2609 = vadd.f32 %v2440, %v2608
  %v2610 = vpop.f32.mrf.mxu0
  %v2611 = vadd.f32 %v2442, %v2610
  %2612 = vmatmul.bf16.gmra.mxu0 %v849
  %v2613 = vpop.f32.mrf.mxu0
  %v2614 = vadd.f32 %v2445, %v2613
  %v2615 = vpop.f32.mrf.mxu0
  %v2616 = vadd.f32 %v2447, %v2615
  %2617 = vmatmul.bf16.gmra.mxu0 %v853
  %v2618 = vpop.f32.mrf.mxu0
  %v2619 = vadd.f32 %v2450, %v2618
  %v2620 = vpop.f32.mrf.mxu0
  %v2621 = vadd.f32 %v2452, %v2620
  %2622 = vmatmul.bf16.gmra.mxu0 %v857
  %v2623 = vpop.f32.mrf.mxu0
  %v2624 = vadd.f32 %v2455, %v2623
  %v2625 = vpop.f32.mrf.mxu0
  %v2626 = vadd.f32 %v2457, %v2625
  %2627 = vdwg.mxu0
  %v2628 = vadd.f32 %v1696, %v2469
  %v2629 = vadd.f32 %v1697, %v2471
  %v2630 = vadd.f32 %v1698, %v2474
  %v2631 = vadd.f32 %v1699, %v2476
  %v2632 = vadd.f32 %v1700, %v2479
  %v2633 = vadd.f32 %v1701, %v2481
  %v2634 = vadd.f32 %v1702, %v2484
  %v2635 = vadd.f32 %v1703, %v2486
  %v2636 = vadd.f32 %v1704, %v2489
  %v2637 = vadd.f32 %v1705, %v2491
  %v2638 = vadd.f32 %v1706, %v2494
  %v2639 = vadd.f32 %v1707, %v2496
  %v2640 = vadd.f32 %v1708, %v2499
  %v2641 = vadd.f32 %v1709, %v2501
  %v2642 = vadd.f32 %v1710, %v2504
  %v2643 = vadd.f32 %v1711, %v2506
  %v2644 = vadd.f32 %v1712, %v2509
  %v2645 = vadd.f32 %v1713, %v2511
  %v2646 = vadd.f32 %v1714, %v2514
  %v2647 = vadd.f32 %v1715, %v2516
  %v2648 = vadd.f32 %v1716, %v2519
  %v2649 = vadd.f32 %v1717, %v2521
  %v2650 = vadd.f32 %v1718, %v2524
  %v2651 = vadd.f32 %v1719, %v2526
  %v2652 = vadd.f32 %v1720, %v2529
  %v2653 = vadd.f32 %v1721, %v2531
  %v2654 = vadd.f32 %v1722, %v2534
  %v2655 = vadd.f32 %v1723, %v2536
  %v2656 = vadd.f32 %v1724, %v2539
  %v2657 = vadd.f32 %v1725, %v2541
  %v2658 = vadd.f32 %v1726, %v2544
  %v2659 = vadd.f32 %v1727, %v2546
  %v2660 = vadd.f32 %v1728, %v2549
  %v2661 = vadd.f32 %v1729, %v2551
  %v2662 = vadd.f32 %v1730, %v2554
  %v2663 = vadd.f32 %v1731, %v2556
  %v2664 = vadd.f32 %v1732, %v2559
  %v2665 = vadd.f32 %v1733, %v2561
  %v2666 = vadd.f32 %v1734, %v2564
  %v2667 = vadd.f32 %v1735, %v2566
  %v2668 = vadd.f32 %v1736, %v2569
  %v2669 = vadd.f32 %v1737, %v2571
  %v2670 = vadd.f32 %v1738, %v2574
  %v2671 = vadd.f32 %v1739, %v2576
  %v2672 = vadd.f32 %v1740, %v2579
  %v2673 = vadd.f32 %v1741, %v2581
  %v2674 = vadd.f32 %v1742, %v2584
  %v2675 = vadd.f32 %v1743, %v2586
  %v2676 = vadd.f32 %v1744, %v2589
  %v2677 = vadd.f32 %v1745, %v2591
  %v2678 = vadd.f32 %v1746, %v2594
  %v2679 = vadd.f32 %v1747, %v2596
  %v2680 = vadd.f32 %v1748, %v2599
  %v2681 = vadd.f32 %v1749, %v2601
  %v2682 = vadd.f32 %v1750, %v2604
  %v2683 = vadd.f32 %v1751, %v2606
  %v2684 = vadd.f32 %v1752, %v2609
  %v2685 = vadd.f32 %v1753, %v2611
  %v2686 = vadd.f32 %v1754, %v2614
  %v2687 = vadd.f32 %v1755, %v2616
  %v2688 = vadd.f32 %v1756, %v2619
  %v2689 = vadd.f32 %v1757, %v2621
  %v2690 = vadd.f32 %v1758, %v2624
  %v2691 = vadd.f32 %v1759, %v2626
  %vm2692 = vcmask 261120
  %2693 = vst.msk [vmem:[#allocation2] sm:$0xff] %vm2692, %v2628
  %2694 = vst.msk [vmem:[#allocation2 + $0x8] sm:$0xff] %vm2692, %v2629
  %2695 = vst.msk [vmem:[#allocation2 + $0x10] sm:$0xff] %vm2692, %v2630
  %2696 = vst.msk [vmem:[#allocation2 + $0x18] sm:$0xff] %vm2692, %v2631
  %2697 = vst.msk [vmem:[#allocation2 + $0x20] sm:$0xff] %vm2692, %v2632
  %2698 = vst.msk [vmem:[#allocation2 + $0x28] sm:$0xff] %vm2692, %v2633
  %2699 = vst.msk [vmem:[#allocation2 + $0x30] sm:$0xff] %vm2692, %v2634
  %2700 = vst.msk [vmem:[#allocation2 + $0x38] sm:$0xff] %vm2692, %v2635
  %2701 = vst.msk [vmem:[#allocation2 + $0x40] sm:$0xff] %vm2692, %v2636
  %2702 = vst.msk [vmem:[#allocation2 + $0x48] sm:$0xff] %vm2692, %v2637
  %2703 = vst.msk [vmem:[#allocation2 + $0x50] sm:$0xff] %vm2692, %v2638
  %2704 = vst.msk [vmem:[#allocation2 + $0x58] sm:$0xff] %vm2692, %v2639
  %2705 = vst.msk [vmem:[#allocation2 + $0x60] sm:$0xff] %vm2692, %v2640
  %2706 = vst.msk [vmem:[#allocation2 + $0x68] sm:$0xff] %vm2692, %v2641
  %2707 = vst.msk [vmem:[#allocation2 + $0x70] sm:$0xff] %vm2692, %v2642
  %2708 = vst.msk [vmem:[#allocation2 + $0x78] sm:$0xff] %vm2692, %v2643
  %2709 = vst.msk [vmem:[#allocation2 + $0x80] sm:$0xff] %vm2692, %v2644
  %2710 = vst.msk [vmem:[#allocation2 + $0x88] sm:$0xff] %vm2692, %v2645
  %2711 = vst.msk [vmem:[#allocation2 + $0x90] sm:$0xff] %vm2692, %v2646
  %2712 = vst.msk [vmem:[#allocation2 + $0x98] sm:$0xff] %vm2692, %v2647
  %2713 = vst.msk [vmem:[#allocation2 + $0xa0] sm:$0xff] %vm2692, %v2648
  %2714 = vst.msk [vmem:[#allocation2 + $0xa8] sm:$0xff] %vm2692, %v2649
  %2715 = vst.msk [vmem:[#allocation2 + $0xb0] sm:$0xff] %vm2692, %v2650
  %2716 = vst.msk [vmem:[#allocation2 + $0xb8] sm:$0xff] %vm2692, %v2651
  %2717 = vst.msk [vmem:[#allocation2 + $0xc0] sm:$0xff] %vm2692, %v2652
  %2718 = vst.msk [vmem:[#allocation2 + $0xc8] sm:$0xff] %vm2692, %v2653
  %2719 = vst.msk [vmem:[#allocation2 + $0xd0] sm:$0xff] %vm2692, %v2654
  %2720 = vst.msk [vmem:[#allocation2 + $0xd8] sm:$0xff] %vm2692, %v2655
  %2721 = vst.msk [vmem:[#allocation2 + $0xe0] sm:$0xff] %vm2692, %v2656
  %2722 = vst.msk [vmem:[#allocation2 + $0xe8] sm:$0xff] %vm2692, %v2657
  %2723 = vst.msk [vmem:[#allocation2 + $0xf0] sm:$0xff] %vm2692, %v2658
  %2724 = vst.msk [vmem:[#allocation2 + $0xf8] sm:$0xff] %vm2692, %v2659
  %2725 = vst.msk [vmem:[#allocation2 + $0x100] sm:$0xff] %vm2692, %v2660
  %2726 = vst.msk [vmem:[#allocation2 + $0x108] sm:$0xff] %vm2692, %v2661
  %2727 = vst.msk [vmem:[#allocation2 + $0x110] sm:$0xff] %vm2692, %v2662
  %2728 = vst.msk [vmem:[#allocation2 + $0x118] sm:$0xff] %vm2692, %v2663
  %2729 = vst.msk [vmem:[#allocation2 + $0x120] sm:$0xff] %vm2692, %v2664
  %2730 = vst.msk [vmem:[#allocation2 + $0x128] sm:$0xff] %vm2692, %v2665
  %2731 = vst.msk [vmem:[#allocation2 + $0x130] sm:$0xff] %vm2692, %v2666
  %2732 = vst.msk [vmem:[#allocation2 + $0x138] sm:$0xff] %vm2692, %v2667
  %2733 = vst.msk [vmem:[#allocation2 + $0x140] sm:$0xff] %vm2692, %v2668
  %2734 = vst.msk [vmem:[#allocation2 + $0x148] sm:$0xff] %vm2692, %v2669
  %2735 = vst.msk [vmem:[#allocation2 + $0x150] sm:$0xff] %vm2692, %v2670
  %2736 = vst.msk [vmem:[#allocation2 + $0x158] sm:$0xff] %vm2692, %v2671
  %2737 = vst.msk [vmem:[#allocation2 + $0x160] sm:$0xff] %vm2692, %v2672
  %2738 = vst.msk [vmem:[#allocation2 + $0x168] sm:$0xff] %vm2692, %v2673
  %2739 = vst.msk [vmem:[#allocation2 + $0x170] sm:$0xff] %vm2692, %v2674
  %2740 = vst.msk [vmem:[#allocation2 + $0x178] sm:$0xff] %vm2692, %v2675
  %2741 = vst.msk [vmem:[#allocation2 + $0x180] sm:$0xff] %vm2692, %v2676
  %2742 = vst.msk [vmem:[#allocation2 + $0x188] sm:$0xff] %vm2692, %v2677
  %2743 = vst.msk [vmem:[#allocation2 + $0x190] sm:$0xff] %vm2692, %v2678
  %2744 = vst.msk [vmem:[#allocation2 + $0x198] sm:$0xff] %vm2692, %v2679
  %2745 = vst.msk [vmem:[#allocation2 + $0x1a0] sm:$0xff] %vm2692, %v2680
  %2746 = vst.msk [vmem:[#allocation2 + $0x1a8] sm:$0xff] %vm2692, %v2681
  %2747 = vst.msk [vmem:[#allocation2 + $0x1b0] sm:$0xff] %vm2692, %v2682
  %2748 = vst.msk [vmem:[#allocation2 + $0x1b8] sm:$0xff] %vm2692, %v2683
  %2749 = vst.msk [vmem:[#allocation2 + $0x1c0] sm:$0xff] %vm2692, %v2684
  %2750 = vst.msk [vmem:[#allocation2 + $0x1c8] sm:$0xff] %vm2692, %v2685
  %2751 = vst.msk [vmem:[#allocation2 + $0x1d0] sm:$0xff] %vm2692, %v2686
  %2752 = vst.msk [vmem:[#allocation2 + $0x1d8] sm:$0xff] %vm2692, %v2687
  %2753 = vst.msk [vmem:[#allocation2 + $0x1e0] sm:$0xff] %vm2692, %v2688
  %2754 = vst.msk [vmem:[#allocation2 + $0x1e8] sm:$0xff] %vm2692, %v2689
  %2755 = vst.msk [vmem:[#allocation2 + $0x1f0] sm:$0xff] %vm2692, %v2690
  %2756 = vst.msk [vmem:[#allocation2 + $0x1f8] sm:$0xff] %vm2692, %v2691
  // Predicated region
  $region22: #{adaptor_forward.2} parent=0 // pred_check
    %p2757 = pneg %p20
  $region23: #{adaptor_forward.2} parent=0 // pred_check_branch
    %2759 = sbr.rel (%p2757) target = $region25
  $region24: #{adaptor_forward.2} parent=0 // pred_region
    %v2760 = vld [vmem:[#allocation3] sm:$0xff]
    %v2761 = vld [vmem:[#allocation3 + $0x8] sm:$0xff]
    %v2762 = vld [vmem:[#allocation3 + $0x10] sm:$0xff]
    %v2763 = vld [vmem:[#allocation3 + $0x18] sm:$0xff]
    %v2764 = vld [vmem:[#allocation3 + $0x20] sm:$0xff]
    %v2765 = vld [vmem:[#allocation3 + $0x28] sm:$0xff]
    %v2766 = vld [vmem:[#allocation3 + $0x30] sm:$0xff]
    %v2767 = vld [vmem:[#allocation3 + $0x38] sm:$0xff]
    %v2768 = vld [vmem:[#allocation3 + $0x40] sm:$0xff]
    %v2769 = vld [vmem:[#allocation3 + $0x48] sm:$0xff]
    %v2770 = vld [vmem:[#allocation3 + $0x50] sm:$0xff]
    %v2771 = vld [vmem:[#allocation3 + $0x58] sm:$0xff]
    %v2772 = vld [vmem:[#allocation3 + $0x60] sm:$0xff]
    %v2773 = vld [vmem:[#allocation3 + $0x68] sm:$0xff]
    %v2774 = vld [vmem:[#allocation3 + $0x70] sm:$0xff]
    %v2775 = vld [vmem:[#allocation3 + $0x78] sm:$0xff]
    %v2776 = vld [vmem:[#allocation3 + $0x80] sm:$0xff]
    %v2777 = vld [vmem:[#allocation3 + $0x88] sm:$0xff]
    %v2778 = vld [vmem:[#allocation3 + $0x90] sm:$0xff]
    %v2779 = vld [vmem:[#allocation3 + $0x98] sm:$0xff]
    %v2780 = vld [vmem:[#allocation3 + $0xa0] sm:$0xff]
    %v2781 = vld [vmem:[#allocation3 + $0xa8] sm:$0xff]
    %v2782 = vld [vmem:[#allocation3 + $0xb0] sm:$0xff]
    %v2783 = vld [vmem:[#allocation3 + $0xb8] sm:$0xff]
    %v2784 = vld [vmem:[#allocation3 + $0xc0] sm:$0xff]
    %v2785 = vld [vmem:[#allocation3 + $0xc8] sm:$0xff]
    %v2786 = vld [vmem:[#allocation3 + $0xd0] sm:$0xff]
    %v2787 = vld [vmem:[#allocation3 + $0xd8] sm:$0xff]
    %v2788 = vld [vmem:[#allocation3 + $0xe0] sm:$0xff]
    %v2789 = vld [vmem:[#allocation3 + $0xe8] sm:$0xff]
    %v2790 = vld [vmem:[#allocation3 + $0xf0] sm:$0xff]
    %v2791 = vld [vmem:[#allocation3 + $0xf8] sm:$0xff]
    %v2792 = vld [vmem:[#allocation3 + $0x100] sm:$0xff]
    %v2793 = vld [vmem:[#allocation3 + $0x108] sm:$0xff]
    %v2794 = vld [vmem:[#allocation3 + $0x110] sm:$0xff]
    %v2795 = vld [vmem:[#allocation3 + $0x118] sm:$0xff]
    %v2796 = vld [vmem:[#allocation3 + $0x120] sm:$0xff]
    %v2797 = vld [vmem:[#allocation3 + $0x128] sm:$0xff]
    %v2798 = vld [vmem:[#allocation3 + $0x130] sm:$0xff]
    %v2799 = vld [vmem:[#allocation3 + $0x138] sm:$0xff]
    %v2800 = vld [vmem:[#allocation3 + $0x140] sm:$0xff]
    %v2801 = vld [vmem:[#allocation3 + $0x148] sm:$0xff]
    %v2802 = vld [vmem:[#allocation3 + $0x150] sm:$0xff]
    %v2803 = vld [vmem:[#allocation3 + $0x158] sm:$0xff]
    %v2804 = vld [vmem:[#allocation3 + $0x160] sm:$0xff]
    %v2805 = vld [vmem:[#allocation3 + $0x168] sm:$0xff]
    %v2806 = vld [vmem:[#allocation3 + $0x170] sm:$0xff]
    %v2807 = vld [vmem:[#allocation3 + $0x178] sm:$0xff]
    %v2808 = vld [vmem:[#allocation3 + $0x180] sm:$0xff]
    %v2809 = vld [vmem:[#allocation3 + $0x188] sm:$0xff]
    %v2810 = vld [vmem:[#allocation3 + $0x190] sm:$0xff]
    %v2811 = vld [vmem:[#allocation3 + $0x198] sm:$0xff]
    %v2812 = vld [vmem:[#allocation3 + $0x1a0] sm:$0xff]
    %v2813 = vld [vmem:[#allocation3 + $0x1a8] sm:$0xff]
    %v2814 = vld [vmem:[#allocation3 + $0x1b0] sm:$0xff]
    %v2815 = vld [vmem:[#allocation3 + $0x1b8] sm:$0xff]
    %v2816 = vld [vmem:[#allocation3 + $0x1c0] sm:$0xff]
    %v2817 = vld [vmem:[#allocation3 + $0x1c8] sm:$0xff]
    %v2818 = vld [vmem:[#allocation3 + $0x1d0] sm:$0xff]
    %v2819 = vld [vmem:[#allocation3 + $0x1d8] sm:$0xff]
    %v2820 = vld [vmem:[#allocation3 + $0x1e0] sm:$0xff]
    %v2821 = vld [vmem:[#allocation3 + $0x1e8] sm:$0xff]
    %v2822 = vld [vmem:[#allocation3 + $0x1f0] sm:$0xff]
    %v2823 = vld [vmem:[#allocation3 + $0x1f8] sm:$0xff]
    %vm2824 = vcmp.gt.f32.partialorder %v2760, 0.0
    %vm2825 = vcmp.gt.f32.partialorder %v2761, 0.0
    %vm2826 = vcmp.gt.f32.partialorder %v2762, 0.0
    %vm2827 = vcmp.gt.f32.partialorder %v2763, 0.0
    %vm2828 = vcmp.gt.f32.partialorder %v2764, 0.0
    %vm2829 = vcmp.gt.f32.partialorder %v2765, 0.0
    %vm2830 = vcmp.gt.f32.partialorder %v2766, 0.0
    %vm2831 = vcmp.gt.f32.partialorder %v2767, 0.0
    %vm2832 = vcmp.gt.f32.partialorder %v2768, 0.0
    %vm2833 = vcmp.gt.f32.partialorder %v2769, 0.0
    %vm2834 = vcmp.gt.f32.partialorder %v2770, 0.0
    %vm2835 = vcmp.gt.f32.partialorder %v2771, 0.0
    %vm2836 = vcmp.gt.f32.partialorder %v2772, 0.0
    %vm2837 = vcmp.gt.f32.partialorder %v2773, 0.0
    %vm2838 = vcmp.gt.f32.partialorder %v2774, 0.0
    %vm2839 = vcmp.gt.f32.partialorder %v2775, 0.0
    %vm2840 = vcmp.gt.f32.partialorder %v2776, 0.0
    %vm2841 = vcmp.gt.f32.partialorder %v2777, 0.0
    %vm2842 = vcmp.gt.f32.partialorder %v2778, 0.0
    %vm2843 = vcmp.gt.f32.partialorder %v2779, 0.0
    %vm2844 = vcmp.gt.f32.partialorder %v2780, 0.0
    %vm2845 = vcmp.gt.f32.partialorder %v2781, 0.0
    %vm2846 = vcmp.gt.f32.partialorder %v2782, 0.0
    %vm2847 = vcmp.gt.f32.partialorder %v2783, 0.0
    %vm2848 = vcmp.gt.f32.partialorder %v2784, 0.0
    %vm2849 = vcmp.gt.f32.partialorder %v2785, 0.0
    %vm2850 = vcmp.gt.f32.partialorder %v2786, 0.0
    %vm2851 = vcmp.gt.f32.partialorder %v2787, 0.0
    %vm2852 = vcmp.gt.f32.partialorder %v2788, 0.0
    %vm2853 = vcmp.gt.f32.partialorder %v2789, 0.0
    %vm2854 = vcmp.gt.f32.partialorder %v2790, 0.0
    %vm2855 = vcmp.gt.f32.partialorder %v2791, 0.0
    %vm2856 = vcmp.gt.f32.partialorder %v2792, 0.0
    %vm2857 = vcmp.gt.f32.partialorder %v2793, 0.0
    %vm2858 = vcmp.gt.f32.partialorder %v2794, 0.0
    %vm2859 = vcmp.gt.f32.partialorder %v2795, 0.0
    %vm2860 = vcmp.gt.f32.partialorder %v2796, 0.0
    %vm2861 = vcmp.gt.f32.partialorder %v2797, 0.0
    %vm2862 = vcmp.gt.f32.partialorder %v2798, 0.0
    %vm2863 = vcmp.gt.f32.partialorder %v2799, 0.0
    %vm2864 = vcmp.gt.f32.partialorder %v2800, 0.0
    %vm2865 = vcmp.gt.f32.partialorder %v2801, 0.0
    %vm2866 = vcmp.gt.f32.partialorder %v2802, 0.0
    %vm2867 = vcmp.gt.f32.partialorder %v2803, 0.0
    %vm2868 = vcmp.gt.f32.partialorder %v2804, 0.0
    %vm2869 = vcmp.gt.f32.partialorder %v2805, 0.0
    %vm2870 = vcmp.gt.f32.partialorder %v2806, 0.0
    %vm2871 = vcmp.gt.f32.partialorder %v2807, 0.0
    %vm2872 = vcmp.gt.f32.partialorder %v2808, 0.0
    %vm2873 = vcmp.gt.f32.partialorder %v2809, 0.0
    %vm2874 = vcmp.gt.f32.partialorder %v2810, 0.0
    %vm2875 = vcmp.gt.f32.partialorder %v2811, 0.0
    %vm2876 = vcmp.gt.f32.partialorder %v2812, 0.0
    %vm2877 = vcmp.gt.f32.partialorder %v2813, 0.0
    %vm2878 = vcmp.gt.f32.partialorder %v2814, 0.0
    %vm2879 = vcmp.gt.f32.partialorder %v2815, 0.0
    %vm2880 = vcmp.gt.f32.partialorder %v2816, 0.0
    %vm2881 = vcmp.gt.f32.partialorder %v2817, 0.0
    %vm2882 = vcmp.gt.f32.partialorder %v2818, 0.0
    %vm2883 = vcmp.gt.f32.partialorder %v2819, 0.0
    %vm2884 = vcmp.gt.f32.partialorder %v2820, 0.0
    %vm2885 = vcmp.gt.f32.partialorder %v2821, 0.0
    %vm2886 = vcmp.gt.f32.partialorder %v2822, 0.0
    %vm2887 = vcmp.gt.f32.partialorder %v2823, 0.0
    %v2888 = vmax.f32 %v2760, 1.0
    %v2889 = vmax.f32 %v2761, 1.0
    %v2890 = vmax.f32 %v2762, 1.0
    %v2891 = vmax.f32 %v2763, 1.0
    %v2892 = vmax.f32 %v2764, 1.0
    %v2893 = vmax.f32 %v2765, 1.0
    %v2894 = vmax.f32 %v2766, 1.0
    %v2895 = vmax.f32 %v2767, 1.0
    %v2896 = vmax.f32 %v2768, 1.0
    %v2897 = vmax.f32 %v2769, 1.0
    %v2898 = vmax.f32 %v2770, 1.0
    %v2899 = vmax.f32 %v2771, 1.0
    %v2900 = vmax.f32 %v2772, 1.0
    %v2901 = vmax.f32 %v2773, 1.0
    %v2902 = vmax.f32 %v2774, 1.0
    %v2903 = vmax.f32 %v2775, 1.0
    %v2904 = vmax.f32 %v2776, 1.0
    %v2905 = vmax.f32 %v2777, 1.0
    %v2906 = vmax.f32 %v2778, 1.0
    %v2907 = vmax.f32 %v2779, 1.0
    %v2908 = vmax.f32 %v2780, 1.0
    %v2909 = vmax.f32 %v2781, 1.0
    %v2910 = vmax.f32 %v2782, 1.0
    %v2911 = vmax.f32 %v2783, 1.0
    %v2912 = vmax.f32 %v2784, 1.0
    %v2913 = vmax.f32 %v2785, 1.0
    %v2914 = vmax.f32 %v2786, 1.0
    %v2915 = vmax.f32 %v2787, 1.0
    %v2916 = vmax.f32 %v2788, 1.0
    %v2917 = vmax.f32 %v2789, 1.0
    %v2918 = vmax.f32 %v2790, 1.0
    %v2919 = vmax.f32 %v2791, 1.0
    %v2920 = vmax.f32 %v2792, 1.0
    %v2921 = vmax.f32 %v2793, 1.0
    %v2922 = vmax.f32 %v2794, 1.0
    %v2923 = vmax.f32 %v2795, 1.0
    %v2924 = vmax.f32 %v2796, 1.0
    %v2925 = vmax.f32 %v2797, 1.0
    %v2926 = vmax.f32 %v2798, 1.0
    %v2927 = vmax.f32 %v2799, 1.0
    %v2928 = vmax.f32 %v2800, 1.0
    %v2929 = vmax.f32 %v2801, 1.0
    %v2930 = vmax.f32 %v2802, 1.0
    %v2931 = vmax.f32 %v2803, 1.0
    %v2932 = vmax.f32 %v2804, 1.0
    %v2933 = vmax.f32 %v2805, 1.0
    %v2934 = vmax.f32 %v2806, 1.0
    %v2935 = vmax.f32 %v2807, 1.0
    %v2936 = vmax.f32 %v2808, 1.0
    %v2937 = vmax.f32 %v2809, 1.0
    %v2938 = vmax.f32 %v2810, 1.0
    %v2939 = vmax.f32 %v2811, 1.0
    %v2940 = vmax.f32 %v2812, 1.0
    %v2941 = vmax.f32 %v2813, 1.0
    %v2942 = vmax.f32 %v2814, 1.0
    %v2943 = vmax.f32 %v2815, 1.0
    %v2944 = vmax.f32 %v2816, 1.0
    %v2945 = vmax.f32 %v2817, 1.0
    %v2946 = vmax.f32 %v2818, 1.0
    %v2947 = vmax.f32 %v2819, 1.0
    %v2948 = vmax.f32 %v2820, 1.0
    %v2949 = vmax.f32 %v2821, 1.0
    %v2950 = vmax.f32 %v2822, 1.0
    %v2951 = vmax.f32 %v2823, 1.0
    %v2952 = vrcp.pop %v2888
    %v2953 = vmul.f32 %v2888, %v2952
    %v2954 = vsub.f32 1.0, %v2953
    %v2955 = vmul.f32 %v2952, %v2954
    %v2956 = vadd.f32 %v2952, %v2955
    %vm2957 = vweird.f32 %v2888
    %vm2958 = vweird.f32 %v2952
    %vm2959 = vmor %vm2957, %vm2958
    %v2960 = vsel %vm2959, %v2952, %v2956
    %v2961 = vand.u32 2147483647, %v2888
    %vm2962 = vcmp.eq.f32.partialorder %v2961, 8.507059e+37
    %v2963 = vand.u32 %v2888, 2147483648
    %v2964 = vor.u32 1.1754944e-38, %v2963
    %v2965 = vsel %vm2962, %v2964, %v2960
    %v2966 = vmul.f32 1.0, %v2965
    %v2967 = vrcp.pop %v2889
    %v2968 = vmul.f32 %v2889, %v2967
    %v2969 = vsub.f32 1.0, %v2968
    %v2970 = vmul.f32 %v2967, %v2969
    %v2971 = vadd.f32 %v2967, %v2970
    %vm2972 = vweird.f32 %v2889
    %vm2973 = vweird.f32 %v2967
    %vm2974 = vmor %vm2972, %vm2973
    %v2975 = vsel %vm2974, %v2967, %v2971
    %v2976 = vand.u32 2147483647, %v2889
    %vm2977 = vcmp.eq.f32.partialorder %v2976, 8.507059e+37
    %v2978 = vand.u32 %v2889, 2147483648
    %v2979 = vor.u32 1.1754944e-38, %v2978
    %v2980 = vsel %vm2977, %v2979, %v2975
    %v2981 = vmul.f32 1.0, %v2980
    %v2982 = vrcp.pop %v2890
    %v2983 = vmul.f32 %v2890, %v2982
    %v2984 = vsub.f32 1.0, %v2983
    %v2985 = vmul.f32 %v2982, %v2984
    %v2986 = vadd.f32 %v2982, %v2985
    %vm2987 = vweird.f32 %v2890
    %vm2988 = vweird.f32 %v2982
    %vm2989 = vmor %vm2987, %vm2988
    %v2990 = vsel %vm2989, %v2982, %v2986
    %v2991 = vand.u32 2147483647, %v2890
    %vm2992 = vcmp.eq.f32.partialorder %v2991, 8.507059e+37
    %v2993 = vand.u32 %v2890, 2147483648
    %v2994 = vor.u32 1.1754944e-38, %v2993
    %v2995 = vsel %vm2992, %v2994, %v2990
    %v2996 = vmul.f32 1.0, %v2995
    %v2997 = vrcp.pop %v2891
    %v2998 = vmul.f32 %v2891, %v2997
    %v2999 = vsub.f32 1.0, %v2998
    %v3000 = vmul.f32 %v2997, %v2999
    %v3001 = vadd.f32 %v2997, %v3000
    %vm3002 = vweird.f32 %v2891
    %vm3003 = vweird.f32 %v2997
    %vm3004 = vmor %vm3002, %vm3003
    %v3005 = vsel %vm3004, %v2997, %v3001
    %v3006 = vand.u32 2147483647, %v2891
    %vm3007 = vcmp.eq.f32.partialorder %v3006, 8.507059e+37
    %v3008 = vand.u32 %v2891, 2147483648
    %v3009 = vor.u32 1.1754944e-38, %v3008
    %v3010 = vsel %vm3007, %v3009, %v3005
    %v3011 = vmul.f32 1.0, %v3010
    %v3012 = vrcp.pop %v2892
    %v3013 = vmul.f32 %v2892, %v3012
    %v3014 = vsub.f32 1.0, %v3013
    %v3015 = vmul.f32 %v3012, %v3014
    %v3016 = vadd.f32 %v3012, %v3015
    %vm3017 = vweird.f32 %v2892
    %vm3018 = vweird.f32 %v3012
    %vm3019 = vmor %vm3017, %vm3018
    %v3020 = vsel %vm3019, %v3012, %v3016
    %v3021 = vand.u32 2147483647, %v2892
    %vm3022 = vcmp.eq.f32.partialorder %v3021, 8.507059e+37
    %v3023 = vand.u32 %v2892, 2147483648
    %v3024 = vor.u32 1.1754944e-38, %v3023
    %v3025 = vsel %vm3022, %v3024, %v3020
    %v3026 = vmul.f32 1.0, %v3025
    %v3027 = vrcp.pop %v2893
    %v3028 = vmul.f32 %v2893, %v3027
    %v3029 = vsub.f32 1.0, %v3028
    %v3030 = vmul.f32 %v3027, %v3029
    %v3031 = vadd.f32 %v3027, %v3030
    %vm3032 = vweird.f32 %v2893
    %vm3033 = vweird.f32 %v3027
    %vm3034 = vmor %vm3032, %vm3033
    %v3035 = vsel %vm3034, %v3027, %v3031
    %v3036 = vand.u32 2147483647, %v2893
    %vm3037 = vcmp.eq.f32.partialorder %v3036, 8.507059e+37
    %v3038 = vand.u32 %v2893, 2147483648
    %v3039 = vor.u32 1.1754944e-38, %v3038
    %v3040 = vsel %vm3037, %v3039, %v3035
    %v3041 = vmul.f32 1.0, %v3040
    %v3042 = vrcp.pop %v2894
    %v3043 = vmul.f32 %v2894, %v3042
    %v3044 = vsub.f32 1.0, %v3043
    %v3045 = vmul.f32 %v3042, %v3044
    %v3046 = vadd.f32 %v3042, %v3045
    %vm3047 = vweird.f32 %v2894
    %vm3048 = vweird.f32 %v3042
    %vm3049 = vmor %vm3047, %vm3048
    %v3050 = vsel %vm3049, %v3042, %v3046
    %v3051 = vand.u32 2147483647, %v2894
    %vm3052 = vcmp.eq.f32.partialorder %v3051, 8.507059e+37
    %v3053 = vand.u32 %v2894, 2147483648
    %v3054 = vor.u32 1.1754944e-38, %v3053
    %v3055 = vsel %vm3052, %v3054, %v3050
    %v3056 = vmul.f32 1.0, %v3055
    %v3057 = vrcp.pop %v2895
    %v3058 = vmul.f32 %v2895, %v3057
    %v3059 = vsub.f32 1.0, %v3058
    %v3060 = vmul.f32 %v3057, %v3059
    %v3061 = vadd.f32 %v3057, %v3060
    %vm3062 = vweird.f32 %v2895
    %vm3063 = vweird.f32 %v3057
    %vm3064 = vmor %vm3062, %vm3063
    %v3065 = vsel %vm3064, %v3057, %v3061
    %v3066 = vand.u32 2147483647, %v2895
    %vm3067 = vcmp.eq.f32.partialorder %v3066, 8.507059e+37
    %v3068 = vand.u32 %v2895, 2147483648
    %v3069 = vor.u32 1.1754944e-38, %v3068
    %v3070 = vsel %vm3067, %v3069, %v3065
    %v3071 = vmul.f32 1.0, %v3070
    %v3072 = vrcp.pop %v2896
    %v3073 = vmul.f32 %v2896, %v3072
    %v3074 = vsub.f32 1.0, %v3073
    %v3075 = vmul.f32 %v3072, %v3074
    %v3076 = vadd.f32 %v3072, %v3075
    %vm3077 = vweird.f32 %v2896
    %vm3078 = vweird.f32 %v3072
    %vm3079 = vmor %vm3077, %vm3078
    %v3080 = vsel %vm3079, %v3072, %v3076
    %v3081 = vand.u32 2147483647, %v2896
    %vm3082 = vcmp.eq.f32.partialorder %v3081, 8.507059e+37
    %v3083 = vand.u32 %v2896, 2147483648
    %v3084 = vor.u32 1.1754944e-38, %v3083
    %v3085 = vsel %vm3082, %v3084, %v3080
    %v3086 = vmul.f32 1.0, %v3085
    %v3087 = vrcp.pop %v2897
    %v3088 = vmul.f32 %v2897, %v3087
    %v3089 = vsub.f32 1.0, %v3088
    %v3090 = vmul.f32 %v3087, %v3089
    %v3091 = vadd.f32 %v3087, %v3090
    %vm3092 = vweird.f32 %v2897
    %vm3093 = vweird.f32 %v3087
    %vm3094 = vmor %vm3092, %vm3093
    %v3095 = vsel %vm3094, %v3087, %v3091
    %v3096 = vand.u32 2147483647, %v2897
    %vm3097 = vcmp.eq.f32.partialorder %v3096, 8.507059e+37
    %v3098 = vand.u32 %v2897, 2147483648
    %v3099 = vor.u32 1.1754944e-38, %v3098
    %v3100 = vsel %vm3097, %v3099, %v3095
    %v3101 = vmul.f32 1.0, %v3100
    %v3102 = vrcp.pop %v2898
    %v3103 = vmul.f32 %v2898, %v3102
    %v3104 = vsub.f32 1.0, %v3103
    %v3105 = vmul.f32 %v3102, %v3104
    %v3106 = vadd.f32 %v3102, %v3105
    %vm3107 = vweird.f32 %v2898
    %vm3108 = vweird.f32 %v3102
    %vm3109 = vmor %vm3107, %vm3108
    %v3110 = vsel %vm3109, %v3102, %v3106
    %v3111 = vand.u32 2147483647, %v2898
    %vm3112 = vcmp.eq.f32.partialorder %v3111, 8.507059e+37
    %v3113 = vand.u32 %v2898, 2147483648
    %v3114 = vor.u32 1.1754944e-38, %v3113
    %v3115 = vsel %vm3112, %v3114, %v3110
    %v3116 = vmul.f32 1.0, %v3115
    %v3117 = vrcp.pop %v2899
    %v3118 = vmul.f32 %v2899, %v3117
    %v3119 = vsub.f32 1.0, %v3118
    %v3120 = vmul.f32 %v3117, %v3119
    %v3121 = vadd.f32 %v3117, %v3120
    %vm3122 = vweird.f32 %v2899
    %vm3123 = vweird.f32 %v3117
    %vm3124 = vmor %vm3122, %vm3123
    %v3125 = vsel %vm3124, %v3117, %v3121
    %v3126 = vand.u32 2147483647, %v2899
    %vm3127 = vcmp.eq.f32.partialorder %v3126, 8.507059e+37
    %v3128 = vand.u32 %v2899, 2147483648
    %v3129 = vor.u32 1.1754944e-38, %v3128
    %v3130 = vsel %vm3127, %v3129, %v3125
    %v3131 = vmul.f32 1.0, %v3130
    %v3132 = vrcp.pop %v2900
    %v3133 = vmul.f32 %v2900, %v3132
    %v3134 = vsub.f32 1.0, %v3133
    %v3135 = vmul.f32 %v3132, %v3134
    %v3136 = vadd.f32 %v3132, %v3135
    %vm3137 = vweird.f32 %v2900
    %vm3138 = vweird.f32 %v3132
    %vm3139 = vmor %vm3137, %vm3138
    %v3140 = vsel %vm3139, %v3132, %v3136
    %v3141 = vand.u32 2147483647, %v2900
    %vm3142 = vcmp.eq.f32.partialorder %v3141, 8.507059e+37
    %v3143 = vand.u32 %v2900, 2147483648
    %v3144 = vor.u32 1.1754944e-38, %v3143
    %v3145 = vsel %vm3142, %v3144, %v3140
    %v3146 = vmul.f32 1.0, %v3145
    %v3147 = vrcp.pop %v2901
    %v3148 = vmul.f32 %v2901, %v3147
    %v3149 = vsub.f32 1.0, %v3148
    %v3150 = vmul.f32 %v3147, %v3149
    %v3151 = vadd.f32 %v3147, %v3150
    %vm3152 = vweird.f32 %v2901
    %vm3153 = vweird.f32 %v3147
    %vm3154 = vmor %vm3152, %vm3153
    %v3155 = vsel %vm3154, %v3147, %v3151
    %v3156 = vand.u32 2147483647, %v2901
    %vm3157 = vcmp.eq.f32.partialorder %v3156, 8.507059e+37
    %v3158 = vand.u32 %v2901, 2147483648
    %v3159 = vor.u32 1.1754944e-38, %v3158
    %v3160 = vsel %vm3157, %v3159, %v3155
    %v3161 = vmul.f32 1.0, %v3160
    %v3162 = vrcp.pop %v2902
    %v3163 = vmul.f32 %v2902, %v3162
    %v3164 = vsub.f32 1.0, %v3163
    %v3165 = vmul.f32 %v3162, %v3164
    %v3166 = vadd.f32 %v3162, %v3165
    %vm3167 = vweird.f32 %v2902
    %vm3168 = vweird.f32 %v3162
    %vm3169 = vmor %vm3167, %vm3168
    %v3170 = vsel %vm3169, %v3162, %v3166
    %v3171 = vand.u32 2147483647, %v2902
    %vm3172 = vcmp.eq.f32.partialorder %v3171, 8.507059e+37
    %v3173 = vand.u32 %v2902, 2147483648
    %v3174 = vor.u32 1.1754944e-38, %v3173
    %v3175 = vsel %vm3172, %v3174, %v3170
    %v3176 = vmul.f32 1.0, %v3175
    %v3177 = vrcp.pop %v2903
    %v3178 = vmul.f32 %v2903, %v3177
    %v3179 = vsub.f32 1.0, %v3178
    %v3180 = vmul.f32 %v3177, %v3179
    %v3181 = vadd.f32 %v3177, %v3180
    %vm3182 = vweird.f32 %v2903
    %vm3183 = vweird.f32 %v3177
    %vm3184 = vmor %vm3182, %vm3183
    %v3185 = vsel %vm3184, %v3177, %v3181
    %v3186 = vand.u32 2147483647, %v2903
    %vm3187 = vcmp.eq.f32.partialorder %v3186, 8.507059e+37
    %v3188 = vand.u32 %v2903, 2147483648
    %v3189 = vor.u32 1.1754944e-38, %v3188
    %v3190 = vsel %vm3187, %v3189, %v3185
    %v3191 = vmul.f32 1.0, %v3190
    %v3192 = vrcp.pop %v2904
    %v3193 = vmul.f32 %v2904, %v3192
    %v3194 = vsub.f32 1.0, %v3193
    %v3195 = vmul.f32 %v3192, %v3194
    %v3196 = vadd.f32 %v3192, %v3195
    %vm3197 = vweird.f32 %v2904
    %vm3198 = vweird.f32 %v3192
    %vm3199 = vmor %vm3197, %vm3198
    %v3200 = vsel %vm3199, %v3192, %v3196
    %v3201 = vand.u32 2147483647, %v2904
    %vm3202 = vcmp.eq.f32.partialorder %v3201, 8.507059e+37
    %v3203 = vand.u32 %v2904, 2147483648
    %v3204 = vor.u32 1.1754944e-38, %v3203
    %v3205 = vsel %vm3202, %v3204, %v3200
    %v3206 = vmul.f32 1.0, %v3205
    %v3207 = vrcp.pop %v2905
    %v3208 = vmul.f32 %v2905, %v3207
    %v3209 = vsub.f32 1.0, %v3208
    %v3210 = vmul.f32 %v3207, %v3209
    %v3211 = vadd.f32 %v3207, %v3210
    %vm3212 = vweird.f32 %v2905
    %vm3213 = vweird.f32 %v3207
    %vm3214 = vmor %vm3212, %vm3213
    %v3215 = vsel %vm3214, %v3207, %v3211
    %v3216 = vand.u32 2147483647, %v2905
    %vm3217 = vcmp.eq.f32.partialorder %v3216, 8.507059e+37
    %v3218 = vand.u32 %v2905, 2147483648
    %v3219 = vor.u32 1.1754944e-38, %v3218
    %v3220 = vsel %vm3217, %v3219, %v3215
    %v3221 = vmul.f32 1.0, %v3220
    %v3222 = vrcp.pop %v2906
    %v3223 = vmul.f32 %v2906, %v3222
    %v3224 = vsub.f32 1.0, %v3223
    %v3225 = vmul.f32 %v3222, %v3224
    %v3226 = vadd.f32 %v3222, %v3225
    %vm3227 = vweird.f32 %v2906
    %vm3228 = vweird.f32 %v3222
    %vm3229 = vmor %vm3227, %vm3228
    %v3230 = vsel %vm3229, %v3222, %v3226
    %v3231 = vand.u32 2147483647, %v2906
    %vm3232 = vcmp.eq.f32.partialorder %v3231, 8.507059e+37
    %v3233 = vand.u32 %v2906, 2147483648
    %v3234 = vor.u32 1.1754944e-38, %v3233
    %v3235 = vsel %vm3232, %v3234, %v3230
    %v3236 = vmul.f32 1.0, %v3235
    %v3237 = vrcp.pop %v2907
    %v3238 = vmul.f32 %v2907, %v3237
    %v3239 = vsub.f32 1.0, %v3238
    %v3240 = vmul.f32 %v3237, %v3239
    %v3241 = vadd.f32 %v3237, %v3240
    %vm3242 = vweird.f32 %v2907
    %vm3243 = vweird.f32 %v3237
    %vm3244 = vmor %vm3242, %vm3243
    %v3245 = vsel %vm3244, %v3237, %v3241
    %v3246 = vand.u32 2147483647, %v2907
    %vm3247 = vcmp.eq.f32.partialorder %v3246, 8.507059e+37
    %v3248 = vand.u32 %v2907, 2147483648
    %v3249 = vor.u32 1.1754944e-38, %v3248
    %v3250 = vsel %vm3247, %v3249, %v3245
    %v3251 = vmul.f32 1.0, %v3250
    %v3252 = vrcp.pop %v2908
    %v3253 = vmul.f32 %v2908, %v3252
    %v3254 = vsub.f32 1.0, %v3253
    %v3255 = vmul.f32 %v3252, %v3254
    %v3256 = vadd.f32 %v3252, %v3255
    %vm3257 = vweird.f32 %v2908
    %vm3258 = vweird.f32 %v3252
    %vm3259 = vmor %vm3257, %vm3258
    %v3260 = vsel %vm3259, %v3252, %v3256
    %v3261 = vand.u32 2147483647, %v2908
    %vm3262 = vcmp.eq.f32.partialorder %v3261, 8.507059e+37
    %v3263 = vand.u32 %v2908, 2147483648
    %v3264 = vor.u32 1.1754944e-38, %v3263
    %v3265 = vsel %vm3262, %v3264, %v3260
    %v3266 = vmul.f32 1.0, %v3265
    %v3267 = vrcp.pop %v2909
    %v3268 = vmul.f32 %v2909, %v3267
    %v3269 = vsub.f32 1.0, %v3268
    %v3270 = vmul.f32 %v3267, %v3269
    %v3271 = vadd.f32 %v3267, %v3270
    %vm3272 = vweird.f32 %v2909
    %vm3273 = vweird.f32 %v3267
    %vm3274 = vmor %vm3272, %vm3273
    %v3275 = vsel %vm3274, %v3267, %v3271
    %v3276 = vand.u32 2147483647, %v2909
    %vm3277 = vcmp.eq.f32.partialorder %v3276, 8.507059e+37
    %v3278 = vand.u32 %v2909, 2147483648
    %v3279 = vor.u32 1.1754944e-38, %v3278
    %v3280 = vsel %vm3277, %v3279, %v3275
    %v3281 = vmul.f32 1.0, %v3280
    %v3282 = vrcp.pop %v2910
    %v3283 = vmul.f32 %v2910, %v3282
    %v3284 = vsub.f32 1.0, %v3283
    %v3285 = vmul.f32 %v3282, %v3284
    %v3286 = vadd.f32 %v3282, %v3285
    %vm3287 = vweird.f32 %v2910
    %vm3288 = vweird.f32 %v3282
    %vm3289 = vmor %vm3287, %vm3288
    %v3290 = vsel %vm3289, %v3282, %v3286
    %v3291 = vand.u32 2147483647, %v2910
    %vm3292 = vcmp.eq.f32.partialorder %v3291, 8.507059e+37
    %v3293 = vand.u32 %v2910, 2147483648
    %v3294 = vor.u32 1.1754944e-38, %v3293
    %v3295 = vsel %vm3292, %v3294, %v3290
    %v3296 = vmul.f32 1.0, %v3295
    %v3297 = vrcp.pop %v2911
    %v3298 = vmul.f32 %v2911, %v3297
    %v3299 = vsub.f32 1.0, %v3298
    %v3300 = vmul.f32 %v3297, %v3299
    %v3301 = vadd.f32 %v3297, %v3300
    %vm3302 = vweird.f32 %v2911
    %vm3303 = vweird.f32 %v3297
    %vm3304 = vmor %vm3302, %vm3303
    %v3305 = vsel %vm3304, %v3297, %v3301
    %v3306 = vand.u32 2147483647, %v2911
    %vm3307 = vcmp.eq.f32.partialorder %v3306, 8.507059e+37
    %v3308 = vand.u32 %v2911, 2147483648
    %v3309 = vor.u32 1.1754944e-38, %v3308
    %v3310 = vsel %vm3307, %v3309, %v3305
    %v3311 = vmul.f32 1.0, %v3310
    %v3312 = vrcp.pop %v2912
    %v3313 = vmul.f32 %v2912, %v3312
    %v3314 = vsub.f32 1.0, %v3313
    %v3315 = vmul.f32 %v3312, %v3314
    %v3316 = vadd.f32 %v3312, %v3315
    %vm3317 = vweird.f32 %v2912
    %vm3318 = vweird.f32 %v3312
    %vm3319 = vmor %vm3317, %vm3318
    %v3320 = vsel %vm3319, %v3312, %v3316
    %v3321 = vand.u32 2147483647, %v2912
    %vm3322 = vcmp.eq.f32.partialorder %v3321, 8.507059e+37
    %v3323 = vand.u32 %v2912, 2147483648
    %v3324 = vor.u32 1.1754944e-38, %v3323
    %v3325 = vsel %vm3322, %v3324, %v3320
    %v3326 = vmul.f32 1.0, %v3325
    %v3327 = vrcp.pop %v2913
    %v3328 = vmul.f32 %v2913, %v3327
    %v3329 = vsub.f32 1.0, %v3328
    %v3330 = vmul.f32 %v3327, %v3329
    %v3331 = vadd.f32 %v3327, %v3330
    %vm3332 = vweird.f32 %v2913
    %vm3333 = vweird.f32 %v3327
    %vm3334 = vmor %vm3332, %vm3333
    %v3335 = vsel %vm3334, %v3327, %v3331
    %v3336 = vand.u32 2147483647, %v2913
    %vm3337 = vcmp.eq.f32.partialorder %v3336, 8.507059e+37
    %v3338 = vand.u32 %v2913, 2147483648
    %v3339 = vor.u32 1.1754944e-38, %v3338
    %v3340 = vsel %vm3337, %v3339, %v3335
    %v3341 = vmul.f32 1.0, %v3340
    %v3342 = vrcp.pop %v2914
    %v3343 = vmul.f32 %v2914, %v3342
    %v3344 = vsub.f32 1.0, %v3343
    %v3345 = vmul.f32 %v3342, %v3344
    %v3346 = vadd.f32 %v3342, %v3345
    %vm3347 = vweird.f32 %v2914
    %vm3348 = vweird.f32 %v3342
    %vm3349 = vmor %vm3347, %vm3348
    %v3350 = vsel %vm3349, %v3342, %v3346
    %v3351 = vand.u32 2147483647, %v2914
    %vm3352 = vcmp.eq.f32.partialorder %v3351, 8.507059e+37
    %v3353 = vand.u32 %v2914, 2147483648
    %v3354 = vor.u32 1.1754944e-38, %v3353
    %v3355 = vsel %vm3352, %v3354, %v3350
    %v3356 = vmul.f32 1.0, %v3355
    %v3357 = vrcp.pop %v2915
    %v3358 = vmul.f32 %v2915, %v3357
    %v3359 = vsub.f32 1.0, %v3358
    %v3360 = vmul.f32 %v3357, %v3359
    %v3361 = vadd.f32 %v3357, %v3360
    %vm3362 = vweird.f32 %v2915
    %vm3363 = vweird.f32 %v3357
    %vm3364 = vmor %vm3362, %vm3363
    %v3365 = vsel %vm3364, %v3357, %v3361
    %v3366 = vand.u32 2147483647, %v2915
    %vm3367 = vcmp.eq.f32.partialorder %v3366, 8.507059e+37
    %v3368 = vand.u32 %v2915, 2147483648
    %v3369 = vor.u32 1.1754944e-38, %v3368
    %v3370 = vsel %vm3367, %v3369, %v3365
    %v3371 = vmul.f32 1.0, %v3370
    %v3372 = vrcp.pop %v2916
    %v3373 = vmul.f32 %v2916, %v3372
    %v3374 = vsub.f32 1.0, %v3373
    %v3375 = vmul.f32 %v3372, %v3374
    %v3376 = vadd.f32 %v3372, %v3375
    %vm3377 = vweird.f32 %v2916
    %vm3378 = vweird.f32 %v3372
    %vm3379 = vmor %vm3377, %vm3378
    %v3380 = vsel %vm3379, %v3372, %v3376
    %v3381 = vand.u32 2147483647, %v2916
    %vm3382 = vcmp.eq.f32.partialorder %v3381, 8.507059e+37
    %v3383 = vand.u32 %v2916, 2147483648
    %v3384 = vor.u32 1.1754944e-38, %v3383
    %v3385 = vsel %vm3382, %v3384, %v3380
    %v3386 = vmul.f32 1.0, %v3385
    %v3387 = vrcp.pop %v2917
    %v3388 = vmul.f32 %v2917, %v3387
    %v3389 = vsub.f32 1.0, %v3388
    %v3390 = vmul.f32 %v3387, %v3389
    %v3391 = vadd.f32 %v3387, %v3390
    %vm3392 = vweird.f32 %v2917
    %vm3393 = vweird.f32 %v3387
    %vm3394 = vmor %vm3392, %vm3393
    %v3395 = vsel %vm3394, %v3387, %v3391
    %v3396 = vand.u32 2147483647, %v2917
    %vm3397 = vcmp.eq.f32.partialorder %v3396, 8.507059e+37
    %v3398 = vand.u32 %v2917, 2147483648
    %v3399 = vor.u32 1.1754944e-38, %v3398
    %v3400 = vsel %vm3397, %v3399, %v3395
    %v3401 = vmul.f32 1.0, %v3400
    %v3402 = vrcp.pop %v2918
    %v3403 = vmul.f32 %v2918, %v3402
    %v3404 = vsub.f32 1.0, %v3403
    %v3405 = vmul.f32 %v3402, %v3404
    %v3406 = vadd.f32 %v3402, %v3405
    %vm3407 = vweird.f32 %v2918
    %vm3408 = vweird.f32 %v3402
    %vm3409 = vmor %vm3407, %vm3408
    %v3410 = vsel %vm3409, %v3402, %v3406
    %v3411 = vand.u32 2147483647, %v2918
    %vm3412 = vcmp.eq.f32.partialorder %v3411, 8.507059e+37
    %v3413 = vand.u32 %v2918, 2147483648
    %v3414 = vor.u32 1.1754944e-38, %v3413
    %v3415 = vsel %vm3412, %v3414, %v3410
    %v3416 = vmul.f32 1.0, %v3415
    %v3417 = vrcp.pop %v2919
    %v3418 = vmul.f32 %v2919, %v3417
    %v3419 = vsub.f32 1.0, %v3418
    %v3420 = vmul.f32 %v3417, %v3419
    %v3421 = vadd.f32 %v3417, %v3420
    %vm3422 = vweird.f32 %v2919
    %vm3423 = vweird.f32 %v3417
    %vm3424 = vmor %vm3422, %vm3423
    %v3425 = vsel %vm3424, %v3417, %v3421
    %v3426 = vand.u32 2147483647, %v2919
    %vm3427 = vcmp.eq.f32.partialorder %v3426, 8.507059e+37
    %v3428 = vand.u32 %v2919, 2147483648
    %v3429 = vor.u32 1.1754944e-38, %v3428
    %v3430 = vsel %vm3427, %v3429, %v3425
    %v3431 = vmul.f32 1.0, %v3430
    %v3432 = vrcp.pop %v2920
    %v3433 = vmul.f32 %v2920, %v3432
    %v3434 = vsub.f32 1.0, %v3433
    %v3435 = vmul.f32 %v3432, %v3434
    %v3436 = vadd.f32 %v3432, %v3435
    %vm3437 = vweird.f32 %v2920
    %vm3438 = vweird.f32 %v3432
    %vm3439 = vmor %vm3437, %vm3438
    %v3440 = vsel %vm3439, %v3432, %v3436
    %v3441 = vand.u32 2147483647, %v2920
    %vm3442 = vcmp.eq.f32.partialorder %v3441, 8.507059e+37
    %v3443 = vand.u32 %v2920, 2147483648
    %v3444 = vor.u32 1.1754944e-38, %v3443
    %v3445 = vsel %vm3442, %v3444, %v3440
    %v3446 = vmul.f32 1.0, %v3445
    %v3447 = vrcp.pop %v2921
    %v3448 = vmul.f32 %v2921, %v3447
    %v3449 = vsub.f32 1.0, %v3448
    %v3450 = vmul.f32 %v3447, %v3449
    %v3451 = vadd.f32 %v3447, %v3450
    %vm3452 = vweird.f32 %v2921
    %vm3453 = vweird.f32 %v3447
    %vm3454 = vmor %vm3452, %vm3453
    %v3455 = vsel %vm3454, %v3447, %v3451
    %v3456 = vand.u32 2147483647, %v2921
    %vm3457 = vcmp.eq.f32.partialorder %v3456, 8.507059e+37
    %v3458 = vand.u32 %v2921, 2147483648
    %v3459 = vor.u32 1.1754944e-38, %v3458
    %v3460 = vsel %vm3457, %v3459, %v3455
    %v3461 = vmul.f32 1.0, %v3460
    %v3462 = vrcp.pop %v2922
    %v3463 = vmul.f32 %v2922, %v3462
    %v3464 = vsub.f32 1.0, %v3463
    %v3465 = vmul.f32 %v3462, %v3464
    %v3466 = vadd.f32 %v3462, %v3465
    %vm3467 = vweird.f32 %v2922
    %vm3468 = vweird.f32 %v3462
    %vm3469 = vmor %vm3467, %vm3468
    %v3470 = vsel %vm3469, %v3462, %v3466
    %v3471 = vand.u32 2147483647, %v2922
    %vm3472 = vcmp.eq.f32.partialorder %v3471, 8.507059e+37
    %v3473 = vand.u32 %v2922, 2147483648
    %v3474 = vor.u32 1.1754944e-38, %v3473
    %v3475 = vsel %vm3472, %v3474, %v3470
    %v3476 = vmul.f32 1.0, %v3475
    %v3477 = vrcp.pop %v2923
    %v3478 = vmul.f32 %v2923, %v3477
    %v3479 = vsub.f32 1.0, %v3478
    %v3480 = vmul.f32 %v3477, %v3479
    %v3481 = vadd.f32 %v3477, %v3480
    %vm3482 = vweird.f32 %v2923
    %vm3483 = vweird.f32 %v3477
    %vm3484 = vmor %vm3482, %vm3483
    %v3485 = vsel %vm3484, %v3477, %v3481
    %v3486 = vand.u32 2147483647, %v2923
    %vm3487 = vcmp.eq.f32.partialorder %v3486, 8.507059e+37
    %v3488 = vand.u32 %v2923, 2147483648
    %v3489 = vor.u32 1.1754944e-38, %v3488
    %v3490 = vsel %vm3487, %v3489, %v3485
    %v3491 = vmul.f32 1.0, %v3490
    %v3492 = vrcp.pop %v2924
    %v3493 = vmul.f32 %v2924, %v3492
    %v3494 = vsub.f32 1.0, %v3493
    %v3495 = vmul.f32 %v3492, %v3494
    %v3496 = vadd.f32 %v3492, %v3495
    %vm3497 = vweird.f32 %v2924
    %vm3498 = vweird.f32 %v3492
    %vm3499 = vmor %vm3497, %vm3498
    %v3500 = vsel %vm3499, %v3492, %v3496
    %v3501 = vand.u32 2147483647, %v2924
    %vm3502 = vcmp.eq.f32.partialorder %v3501, 8.507059e+37
    %v3503 = vand.u32 %v2924, 2147483648
    %v3504 = vor.u32 1.1754944e-38, %v3503
    %v3505 = vsel %vm3502, %v3504, %v3500
    %v3506 = vmul.f32 1.0, %v3505
    %v3507 = vrcp.pop %v2925
    %v3508 = vmul.f32 %v2925, %v3507
    %v3509 = vsub.f32 1.0, %v3508
    %v3510 = vmul.f32 %v3507, %v3509
    %v3511 = vadd.f32 %v3507, %v3510
    %vm3512 = vweird.f32 %v2925
    %vm3513 = vweird.f32 %v3507
    %vm3514 = vmor %vm3512, %vm3513
    %v3515 = vsel %vm3514, %v3507, %v3511
    %v3516 = vand.u32 2147483647, %v2925
    %vm3517 = vcmp.eq.f32.partialorder %v3516, 8.507059e+37
    %v3518 = vand.u32 %v2925, 2147483648
    %v3519 = vor.u32 1.1754944e-38, %v3518
    %v3520 = vsel %vm3517, %v3519, %v3515
    %v3521 = vmul.f32 1.0, %v3520
    %v3522 = vrcp.pop %v2926
    %v3523 = vmul.f32 %v2926, %v3522
    %v3524 = vsub.f32 1.0, %v3523
    %v3525 = vmul.f32 %v3522, %v3524
    %v3526 = vadd.f32 %v3522, %v3525
    %vm3527 = vweird.f32 %v2926
    %vm3528 = vweird.f32 %v3522
    %vm3529 = vmor %vm3527, %vm3528
    %v3530 = vsel %vm3529, %v3522, %v3526
    %v3531 = vand.u32 2147483647, %v2926
    %vm3532 = vcmp.eq.f32.partialorder %v3531, 8.507059e+37
    %v3533 = vand.u32 %v2926, 2147483648
    %v3534 = vor.u32 1.1754944e-38, %v3533
    %v3535 = vsel %vm3532, %v3534, %v3530
    %v3536 = vmul.f32 1.0, %v3535
    %v3537 = vrcp.pop %v2927
    %v3538 = vmul.f32 %v2927, %v3537
    %v3539 = vsub.f32 1.0, %v3538
    %v3540 = vmul.f32 %v3537, %v3539
    %v3541 = vadd.f32 %v3537, %v3540
    %vm3542 = vweird.f32 %v2927
    %vm3543 = vweird.f32 %v3537
    %vm3544 = vmor %vm3542, %vm3543
    %v3545 = vsel %vm3544, %v3537, %v3541
    %v3546 = vand.u32 2147483647, %v2927
    %vm3547 = vcmp.eq.f32.partialorder %v3546, 8.507059e+37
    %v3548 = vand.u32 %v2927, 2147483648
    %v3549 = vor.u32 1.1754944e-38, %v3548
    %v3550 = vsel %vm3547, %v3549, %v3545
    %v3551 = vmul.f32 1.0, %v3550
    %v3552 = vrcp.pop %v2928
    %v3553 = vmul.f32 %v2928, %v3552
    %v3554 = vsub.f32 1.0, %v3553
    %v3555 = vmul.f32 %v3552, %v3554
    %v3556 = vadd.f32 %v3552, %v3555
    %vm3557 = vweird.f32 %v2928
    %vm3558 = vweird.f32 %v3552
    %vm3559 = vmor %vm3557, %vm3558
    %v3560 = vsel %vm3559, %v3552, %v3556
    %v3561 = vand.u32 2147483647, %v2928
    %vm3562 = vcmp.eq.f32.partialorder %v3561, 8.507059e+37
    %v3563 = vand.u32 %v2928, 2147483648
    %v3564 = vor.u32 1.1754944e-38, %v3563
    %v3565 = vsel %vm3562, %v3564, %v3560
    %v3566 = vmul.f32 1.0, %v3565
    %v3567 = vrcp.pop %v2929
    %v3568 = vmul.f32 %v2929, %v3567
    %v3569 = vsub.f32 1.0, %v3568
    %v3570 = vmul.f32 %v3567, %v3569
    %v3571 = vadd.f32 %v3567, %v3570
    %vm3572 = vweird.f32 %v2929
    %vm3573 = vweird.f32 %v3567
    %vm3574 = vmor %vm3572, %vm3573
    %v3575 = vsel %vm3574, %v3567, %v3571
    %v3576 = vand.u32 2147483647, %v2929
    %vm3577 = vcmp.eq.f32.partialorder %v3576, 8.507059e+37
    %v3578 = vand.u32 %v2929, 2147483648
    %v3579 = vor.u32 1.1754944e-38, %v3578
    %v3580 = vsel %vm3577, %v3579, %v3575
    %v3581 = vmul.f32 1.0, %v3580
    %v3582 = vrcp.pop %v2930
    %v3583 = vmul.f32 %v2930, %v3582
    %v3584 = vsub.f32 1.0, %v3583
    %v3585 = vmul.f32 %v3582, %v3584
    %v3586 = vadd.f32 %v3582, %v3585
    %vm3587 = vweird.f32 %v2930
    %vm3588 = vweird.f32 %v3582
    %vm3589 = vmor %vm3587, %vm3588
    %v3590 = vsel %vm3589, %v3582, %v3586
    %v3591 = vand.u32 2147483647, %v2930
    %vm3592 = vcmp.eq.f32.partialorder %v3591, 8.507059e+37
    %v3593 = vand.u32 %v2930, 2147483648
    %v3594 = vor.u32 1.1754944e-38, %v3593
    %v3595 = vsel %vm3592, %v3594, %v3590
    %v3596 = vmul.f32 1.0, %v3595
    %v3597 = vrcp.pop %v2931
    %v3598 = vmul.f32 %v2931, %v3597
    %v3599 = vsub.f32 1.0, %v3598
    %v3600 = vmul.f32 %v3597, %v3599
    %v3601 = vadd.f32 %v3597, %v3600
    %vm3602 = vweird.f32 %v2931
    %vm3603 = vweird.f32 %v3597
    %vm3604 = vmor %vm3602, %vm3603
    %v3605 = vsel %vm3604, %v3597, %v3601
    %v3606 = vand.u32 2147483647, %v2931
    %vm3607 = vcmp.eq.f32.partialorder %v3606, 8.507059e+37
    %v3608 = vand.u32 %v2931, 2147483648
    %v3609 = vor.u32 1.1754944e-38, %v3608
    %v3610 = vsel %vm3607, %v3609, %v3605
    %v3611 = vmul.f32 1.0, %v3610
    %v3612 = vrcp.pop %v2932
    %v3613 = vmul.f32 %v2932, %v3612
    %v3614 = vsub.f32 1.0, %v3613
    %v3615 = vmul.f32 %v3612, %v3614
    %v3616 = vadd.f32 %v3612, %v3615
    %vm3617 = vweird.f32 %v2932
    %vm3618 = vweird.f32 %v3612
    %vm3619 = vmor %vm3617, %vm3618
    %v3620 = vsel %vm3619, %v3612, %v3616
    %v3621 = vand.u32 2147483647, %v2932
    %vm3622 = vcmp.eq.f32.partialorder %v3621, 8.507059e+37
    %v3623 = vand.u32 %v2932, 2147483648
    %v3624 = vor.u32 1.1754944e-38, %v3623
    %v3625 = vsel %vm3622, %v3624, %v3620
    %v3626 = vmul.f32 1.0, %v3625
    %v3627 = vrcp.pop %v2933
    %v3628 = vmul.f32 %v2933, %v3627
    %v3629 = vsub.f32 1.0, %v3628
    %v3630 = vmul.f32 %v3627, %v3629
    %v3631 = vadd.f32 %v3627, %v3630
    %vm3632 = vweird.f32 %v2933
    %vm3633 = vweird.f32 %v3627
    %vm3634 = vmor %vm3632, %vm3633
    %v3635 = vsel %vm3634, %v3627, %v3631
    %v3636 = vand.u32 2147483647, %v2933
    %vm3637 = vcmp.eq.f32.partialorder %v3636, 8.507059e+37
    %v3638 = vand.u32 %v2933, 2147483648
    %v3639 = vor.u32 1.1754944e-38, %v3638
    %v3640 = vsel %vm3637, %v3639, %v3635
    %v3641 = vmul.f32 1.0, %v3640
    %v3642 = vrcp.pop %v2934
    %v3643 = vmul.f32 %v2934, %v3642
    %v3644 = vsub.f32 1.0, %v3643
    %v3645 = vmul.f32 %v3642, %v3644
    %v3646 = vadd.f32 %v3642, %v3645
    %vm3647 = vweird.f32 %v2934
    %vm3648 = vweird.f32 %v3642
    %vm3649 = vmor %vm3647, %vm3648
    %v3650 = vsel %vm3649, %v3642, %v3646
    %v3651 = vand.u32 2147483647, %v2934
    %vm3652 = vcmp.eq.f32.partialorder %v3651, 8.507059e+37
    %v3653 = vand.u32 %v2934, 2147483648
    %v3654 = vor.u32 1.1754944e-38, %v3653
    %v3655 = vsel %vm3652, %v3654, %v3650
    %v3656 = vmul.f32 1.0, %v3655
    %v3657 = vrcp.pop %v2935
    %v3658 = vmul.f32 %v2935, %v3657
    %v3659 = vsub.f32 1.0, %v3658
    %v3660 = vmul.f32 %v3657, %v3659
    %v3661 = vadd.f32 %v3657, %v3660
    %vm3662 = vweird.f32 %v2935
    %vm3663 = vweird.f32 %v3657
    %vm3664 = vmor %vm3662, %vm3663
    %v3665 = vsel %vm3664, %v3657, %v3661
    %v3666 = vand.u32 2147483647, %v2935
    %vm3667 = vcmp.eq.f32.partialorder %v3666, 8.507059e+37
    %v3668 = vand.u32 %v2935, 2147483648
    %v3669 = vor.u32 1.1754944e-38, %v3668
    %v3670 = vsel %vm3667, %v3669, %v3665
    %v3671 = vmul.f32 1.0, %v3670
    %v3672 = vrcp.pop %v2936
    %v3673 = vmul.f32 %v2936, %v3672
    %v3674 = vsub.f32 1.0, %v3673
    %v3675 = vmul.f32 %v3672, %v3674
    %v3676 = vadd.f32 %v3672, %v3675
    %vm3677 = vweird.f32 %v2936
    %vm3678 = vweird.f32 %v3672
    %vm3679 = vmor %vm3677, %vm3678
    %v3680 = vsel %vm3679, %v3672, %v3676
    %v3681 = vand.u32 2147483647, %v2936
    %vm3682 = vcmp.eq.f32.partialorder %v3681, 8.507059e+37
    %v3683 = vand.u32 %v2936, 2147483648
    %v3684 = vor.u32 1.1754944e-38, %v3683
    %v3685 = vsel %vm3682, %v3684, %v3680
    %v3686 = vmul.f32 1.0, %v3685
    %v3687 = vrcp.pop %v2937
    %v3688 = vmul.f32 %v2937, %v3687
    %v3689 = vsub.f32 1.0, %v3688
    %v3690 = vmul.f32 %v3687, %v3689
    %v3691 = vadd.f32 %v3687, %v3690
    %vm3692 = vweird.f32 %v2937
    %vm3693 = vweird.f32 %v3687
    %vm3694 = vmor %vm3692, %vm3693
    %v3695 = vsel %vm3694, %v3687, %v3691
    %v3696 = vand.u32 2147483647, %v2937
    %vm3697 = vcmp.eq.f32.partialorder %v3696, 8.507059e+37
    %v3698 = vand.u32 %v2937, 2147483648
    %v3699 = vor.u32 1.1754944e-38, %v3698
    %v3700 = vsel %vm3697, %v3699, %v3695
    %v3701 = vmul.f32 1.0, %v3700
    %v3702 = vrcp.pop %v2938
    %v3703 = vmul.f32 %v2938, %v3702
    %v3704 = vsub.f32 1.0, %v3703
    %v3705 = vmul.f32 %v3702, %v3704
    %v3706 = vadd.f32 %v3702, %v3705
    %vm3707 = vweird.f32 %v2938
    %vm3708 = vweird.f32 %v3702
    %vm3709 = vmor %vm3707, %vm3708
    %v3710 = vsel %vm3709, %v3702, %v3706
    %v3711 = vand.u32 2147483647, %v2938
    %vm3712 = vcmp.eq.f32.partialorder %v3711, 8.507059e+37
    %v3713 = vand.u32 %v2938, 2147483648
    %v3714 = vor.u32 1.1754944e-38, %v3713
    %v3715 = vsel %vm3712, %v3714, %v3710
    %v3716 = vmul.f32 1.0, %v3715
    %v3717 = vrcp.pop %v2939
    %v3718 = vmul.f32 %v2939, %v3717
    %v3719 = vsub.f32 1.0, %v3718
    %v3720 = vmul.f32 %v3717, %v3719
    %v3721 = vadd.f32 %v3717, %v3720
    %vm3722 = vweird.f32 %v2939
    %vm3723 = vweird.f32 %v3717
    %vm3724 = vmor %vm3722, %vm3723
    %v3725 = vsel %vm3724, %v3717, %v3721
    %v3726 = vand.u32 2147483647, %v2939
    %vm3727 = vcmp.eq.f32.partialorder %v3726, 8.507059e+37
    %v3728 = vand.u32 %v2939, 2147483648
    %v3729 = vor.u32 1.1754944e-38, %v3728
    %v3730 = vsel %vm3727, %v3729, %v3725
    %v3731 = vmul.f32 1.0, %v3730
    %v3732 = vrcp.pop %v2940
    %v3733 = vmul.f32 %v2940, %v3732
    %v3734 = vsub.f32 1.0, %v3733
    %v3735 = vmul.f32 %v3732, %v3734
    %v3736 = vadd.f32 %v3732, %v3735
    %vm3737 = vweird.f32 %v2940
    %vm3738 = vweird.f32 %v3732
    %vm3739 = vmor %vm3737, %vm3738
    %v3740 = vsel %vm3739, %v3732, %v3736
    %v3741 = vand.u32 2147483647, %v2940
    %vm3742 = vcmp.eq.f32.partialorder %v3741, 8.507059e+37
    %v3743 = vand.u32 %v2940, 2147483648
    %v3744 = vor.u32 1.1754944e-38, %v3743
    %v3745 = vsel %vm3742, %v3744, %v3740
    %v3746 = vmul.f32 1.0, %v3745
    %v3747 = vrcp.pop %v2941
    %v3748 = vmul.f32 %v2941, %v3747
    %v3749 = vsub.f32 1.0, %v3748
    %v3750 = vmul.f32 %v3747, %v3749
    %v3751 = vadd.f32 %v3747, %v3750
    %vm3752 = vweird.f32 %v2941
    %vm3753 = vweird.f32 %v3747
    %vm3754 = vmor %vm3752, %vm3753
    %v3755 = vsel %vm3754, %v3747, %v3751
    %v3756 = vand.u32 2147483647, %v2941
    %vm3757 = vcmp.eq.f32.partialorder %v3756, 8.507059e+37
    %v3758 = vand.u32 %v2941, 2147483648
    %v3759 = vor.u32 1.1754944e-38, %v3758
    %v3760 = vsel %vm3757, %v3759, %v3755
    %v3761 = vmul.f32 1.0, %v3760
    %v3762 = vrcp.pop %v2942
    %v3763 = vmul.f32 %v2942, %v3762
    %v3764 = vsub.f32 1.0, %v3763
    %v3765 = vmul.f32 %v3762, %v3764
    %v3766 = vadd.f32 %v3762, %v3765
    %vm3767 = vweird.f32 %v2942
    %vm3768 = vweird.f32 %v3762
    %vm3769 = vmor %vm3767, %vm3768
    %v3770 = vsel %vm3769, %v3762, %v3766
    %v3771 = vand.u32 2147483647, %v2942
    %vm3772 = vcmp.eq.f32.partialorder %v3771, 8.507059e+37
    %v3773 = vand.u32 %v2942, 2147483648
    %v3774 = vor.u32 1.1754944e-38, %v3773
    %v3775 = vsel %vm3772, %v3774, %v3770
    %v3776 = vmul.f32 1.0, %v3775
    %v3777 = vrcp.pop %v2943
    %v3778 = vmul.f32 %v2943, %v3777
    %v3779 = vsub.f32 1.0, %v3778
    %v3780 = vmul.f32 %v3777, %v3779
    %v3781 = vadd.f32 %v3777, %v3780
    %vm3782 = vweird.f32 %v2943
    %vm3783 = vweird.f32 %v3777
    %vm3784 = vmor %vm3782, %vm3783
    %v3785 = vsel %vm3784, %v3777, %v3781
    %v3786 = vand.u32 2147483647, %v2943
    %vm3787 = vcmp.eq.f32.partialorder %v3786, 8.507059e+37
    %v3788 = vand.u32 %v2943, 2147483648
    %v3789 = vor.u32 1.1754944e-38, %v3788
    %v3790 = vsel %vm3787, %v3789, %v3785
    %v3791 = vmul.f32 1.0, %v3790
    %v3792 = vrcp.pop %v2944
    %v3793 = vmul.f32 %v2944, %v3792
    %v3794 = vsub.f32 1.0, %v3793
    %v3795 = vmul.f32 %v3792, %v3794
    %v3796 = vadd.f32 %v3792, %v3795
    %vm3797 = vweird.f32 %v2944
    %vm3798 = vweird.f32 %v3792
    %vm3799 = vmor %vm3797, %vm3798
    %v3800 = vsel %vm3799, %v3792, %v3796
    %v3801 = vand.u32 2147483647, %v2944
    %vm3802 = vcmp.eq.f32.partialorder %v3801, 8.507059e+37
    %v3803 = vand.u32 %v2944, 2147483648
    %v3804 = vor.u32 1.1754944e-38, %v3803
    %v3805 = vsel %vm3802, %v3804, %v3800
    %v3806 = vmul.f32 1.0, %v3805
    %v3807 = vrcp.pop %v2945
    %v3808 = vmul.f32 %v2945, %v3807
    %v3809 = vsub.f32 1.0, %v3808
    %v3810 = vmul.f32 %v3807, %v3809
    %v3811 = vadd.f32 %v3807, %v3810
    %vm3812 = vweird.f32 %v2945
    %vm3813 = vweird.f32 %v3807
    %vm3814 = vmor %vm3812, %vm3813
    %v3815 = vsel %vm3814, %v3807, %v3811
    %v3816 = vand.u32 2147483647, %v2945
    %vm3817 = vcmp.eq.f32.partialorder %v3816, 8.507059e+37
    %v3818 = vand.u32 %v2945, 2147483648
    %v3819 = vor.u32 1.1754944e-38, %v3818
    %v3820 = vsel %vm3817, %v3819, %v3815
    %v3821 = vmul.f32 1.0, %v3820
    %v3822 = vrcp.pop %v2946
    %v3823 = vmul.f32 %v2946, %v3822
    %v3824 = vsub.f32 1.0, %v3823
    %v3825 = vmul.f32 %v3822, %v3824
    %v3826 = vadd.f32 %v3822, %v3825
    %vm3827 = vweird.f32 %v2946
    %vm3828 = vweird.f32 %v3822
    %vm3829 = vmor %vm3827, %vm3828
    %v3830 = vsel %vm3829, %v3822, %v3826
    %v3831 = vand.u32 2147483647, %v2946
    %vm3832 = vcmp.eq.f32.partialorder %v3831, 8.507059e+37
    %v3833 = vand.u32 %v2946, 2147483648
    %v3834 = vor.u32 1.1754944e-38, %v3833
    %v3835 = vsel %vm3832, %v3834, %v3830
    %v3836 = vmul.f32 1.0, %v3835
    %v3837 = vrcp.pop %v2947
    %v3838 = vmul.f32 %v2947, %v3837
    %v3839 = vsub.f32 1.0, %v3838
    %v3840 = vmul.f32 %v3837, %v3839
    %v3841 = vadd.f32 %v3837, %v3840
    %vm3842 = vweird.f32 %v2947
    %vm3843 = vweird.f32 %v3837
    %vm3844 = vmor %vm3842, %vm3843
    %v3845 = vsel %vm3844, %v3837, %v3841
    %v3846 = vand.u32 2147483647, %v2947
    %vm3847 = vcmp.eq.f32.partialorder %v3846, 8.507059e+37
    %v3848 = vand.u32 %v2947, 2147483648
    %v3849 = vor.u32 1.1754944e-38, %v3848
    %v3850 = vsel %vm3847, %v3849, %v3845
    %v3851 = vmul.f32 1.0, %v3850
    %v3852 = vrcp.pop %v2948
    %v3853 = vmul.f32 %v2948, %v3852
    %v3854 = vsub.f32 1.0, %v3853
    %v3855 = vmul.f32 %v3852, %v3854
    %v3856 = vadd.f32 %v3852, %v3855
    %vm3857 = vweird.f32 %v2948
    %vm3858 = vweird.f32 %v3852
    %vm3859 = vmor %vm3857, %vm3858
    %v3860 = vsel %vm3859, %v3852, %v3856
    %v3861 = vand.u32 2147483647, %v2948
    %vm3862 = vcmp.eq.f32.partialorder %v3861, 8.507059e+37
    %v3863 = vand.u32 %v2948, 2147483648
    %v3864 = vor.u32 1.1754944e-38, %v3863
    %v3865 = vsel %vm3862, %v3864, %v3860
    %v3866 = vmul.f32 1.0, %v3865
    %v3867 = vrcp.pop %v2949
    %v3868 = vmul.f32 %v2949, %v3867
    %v3869 = vsub.f32 1.0, %v3868
    %v3870 = vmul.f32 %v3867, %v3869
    %v3871 = vadd.f32 %v3867, %v3870
    %vm3872 = vweird.f32 %v2949
    %vm3873 = vweird.f32 %v3867
    %vm3874 = vmor %vm3872, %vm3873
    %v3875 = vsel %vm3874, %v3867, %v3871
    %v3876 = vand.u32 2147483647, %v2949
    %vm3877 = vcmp.eq.f32.partialorder %v3876, 8.507059e+37
    %v3878 = vand.u32 %v2949, 2147483648
    %v3879 = vor.u32 1.1754944e-38, %v3878
    %v3880 = vsel %vm3877, %v3879, %v3875
    %v3881 = vmul.f32 1.0, %v3880
    %v3882 = vrcp.pop %v2950
    %v3883 = vmul.f32 %v2950, %v3882
    %v3884 = vsub.f32 1.0, %v3883
    %v3885 = vmul.f32 %v3882, %v3884
    %v3886 = vadd.f32 %v3882, %v3885
    %vm3887 = vweird.f32 %v2950
    %vm3888 = vweird.f32 %v3882
    %vm3889 = vmor %vm3887, %vm3888
    %v3890 = vsel %vm3889, %v3882, %v3886
    %v3891 = vand.u32 2147483647, %v2950
    %vm3892 = vcmp.eq.f32.partialorder %v3891, 8.507059e+37
    %v3893 = vand.u32 %v2950, 2147483648
    %v3894 = vor.u32 1.1754944e-38, %v3893
    %v3895 = vsel %vm3892, %v3894, %v3890
    %v3896 = vmul.f32 1.0, %v3895
    %v3897 = vrcp.pop %v2951
    %v3898 = vmul.f32 %v2951, %v3897
    %v3899 = vsub.f32 1.0, %v3898
    %v3900 = vmul.f32 %v3897, %v3899
    %v3901 = vadd.f32 %v3897, %v3900
    %vm3902 = vweird.f32 %v2951
    %vm3903 = vweird.f32 %v3897
    %vm3904 = vmor %vm3902, %vm3903
    %v3905 = vsel %vm3904, %v3897, %v3901
    %v3906 = vand.u32 2147483647, %v2951
    %vm3907 = vcmp.eq.f32.partialorder %v3906, 8.507059e+37
    %v3908 = vand.u32 %v2951, 2147483648
    %v3909 = vor.u32 1.1754944e-38, %v3908
    %v3910 = vsel %vm3907, %v3909, %v3905
    %v3911 = vmul.f32 1.0, %v3910
    %v3912 = vsel %vm2824, %v2966, 0.0
    %v3913 = vsel %vm2825, %v2981, 0.0
    %v3914 = vsel %vm2826, %v2996, 0.0
    %v3915 = vsel %vm2827, %v3011, 0.0
    %v3916 = vsel %vm2828, %v3026, 0.0
    %v3917 = vsel %vm2829, %v3041, 0.0
    %v3918 = vsel %vm2830, %v3056, 0.0
    %v3919 = vsel %vm2831, %v3071, 0.0
    %v3920 = vsel %vm2832, %v3086, 0.0
    %v3921 = vsel %vm2833, %v3101, 0.0
    %v3922 = vsel %vm2834, %v3116, 0.0
    %v3923 = vsel %vm2835, %v3131, 0.0
    %v3924 = vsel %vm2836, %v3146, 0.0
    %v3925 = vsel %vm2837, %v3161, 0.0
    %v3926 = vsel %vm2838, %v3176, 0.0
    %v3927 = vsel %vm2839, %v3191, 0.0
    %v3928 = vsel %vm2840, %v3206, 0.0
    %v3929 = vsel %vm2841, %v3221, 0.0
    %v3930 = vsel %vm2842, %v3236, 0.0
    %v3931 = vsel %vm2843, %v3251, 0.0
    %v3932 = vsel %vm2844, %v3266, 0.0
    %v3933 = vsel %vm2845, %v3281, 0.0
    %v3934 = vsel %vm2846, %v3296, 0.0
    %v3935 = vsel %vm2847, %v3311, 0.0
    %v3936 = vsel %vm2848, %v3326, 0.0
    %v3937 = vsel %vm2849, %v3341, 0.0
    %v3938 = vsel %vm2850, %v3356, 0.0
    %v3939 = vsel %vm2851, %v3371, 0.0
    %v3940 = vsel %vm2852, %v3386, 0.0
    %v3941 = vsel %vm2853, %v3401, 0.0
    %v3942 = vsel %vm2854, %v3416, 0.0
    %v3943 = vsel %vm2855, %v3431, 0.0
    %v3944 = vsel %vm2856, %v3446, 0.0
    %v3945 = vsel %vm2857, %v3461, 0.0
    %v3946 = vsel %vm2858, %v3476, 0.0
    %v3947 = vsel %vm2859, %v3491, 0.0
    %v3948 = vsel %vm2860, %v3506, 0.0
    %v3949 = vsel %vm2861, %v3521, 0.0
    %v3950 = vsel %vm2862, %v3536, 0.0
    %v3951 = vsel %vm2863, %v3551, 0.0
    %v3952 = vsel %vm2864, %v3566, 0.0
    %v3953 = vsel %vm2865, %v3581, 0.0
    %v3954 = vsel %vm2866, %v3596, 0.0
    %v3955 = vsel %vm2867, %v3611, 0.0
    %v3956 = vsel %vm2868, %v3626, 0.0
    %v3957 = vsel %vm2869, %v3641, 0.0
    %v3958 = vsel %vm2870, %v3656, 0.0
    %v3959 = vsel %vm2871, %v3671, 0.0
    %v3960 = vsel %vm2872, %v3686, 0.0
    %v3961 = vsel %vm2873, %v3701, 0.0
    %v3962 = vsel %vm2874, %v3716, 0.0
    %v3963 = vsel %vm2875, %v3731, 0.0
    %v3964 = vsel %vm2876, %v3746, 0.0
    %v3965 = vsel %vm2877, %v3761, 0.0
    %v3966 = vsel %vm2878, %v3776, 0.0
    %v3967 = vsel %vm2879, %v3791, 0.0
    %v3968 = vsel %vm2880, %v3806, 0.0
    %v3969 = vsel %vm2881, %v3821, 0.0
    %v3970 = vsel %vm2882, %v3836, 0.0
    %v3971 = vsel %vm2883, %v3851, 0.0
    %v3972 = vsel %vm2884, %v3866, 0.0
    %v3973 = vsel %vm2885, %v3881, 0.0
    %v3974 = vsel %vm2886, %v3896, 0.0
    %v3975 = vsel %vm2887, %v3911, 0.0
    %v3976 = vld [vmem:[#allocation2] sm:$0xff]
    %v3977 = vld [vmem:[#allocation2 + $0x8] sm:$0xff]
    %v3978 = vld [vmem:[#allocation2 + $0x10] sm:$0xff]
    %v3979 = vld [vmem:[#allocation2 + $0x18] sm:$0xff]
    %v3980 = vld [vmem:[#allocation2 + $0x20] sm:$0xff]
    %v3981 = vld [vmem:[#allocation2 + $0x28] sm:$0xff]
    %v3982 = vld [vmem:[#allocation2 + $0x30] sm:$0xff]
    %v3983 = vld [vmem:[#allocation2 + $0x38] sm:$0xff]
    %v3984 = vld [vmem:[#allocation2 + $0x40] sm:$0xff]
    %v3985 = vld [vmem:[#allocation2 + $0x48] sm:$0xff]
    %v3986 = vld [vmem:[#allocation2 + $0x50] sm:$0xff]
    %v3987 = vld [vmem:[#allocation2 + $0x58] sm:$0xff]
    %v3988 = vld [vmem:[#allocation2 + $0x60] sm:$0xff]
    %v3989 = vld [vmem:[#allocation2 + $0x68] sm:$0xff]
    %v3990 = vld [vmem:[#allocation2 + $0x70] sm:$0xff]
    %v3991 = vld [vmem:[#allocation2 + $0x78] sm:$0xff]
    %v3992 = vld [vmem:[#allocation2 + $0x80] sm:$0xff]
    %v3993 = vld [vmem:[#allocation2 + $0x88] sm:$0xff]
    %v3994 = vld [vmem:[#allocation2 + $0x90] sm:$0xff]
    %v3995 = vld [vmem:[#allocation2 + $0x98] sm:$0xff]
    %v3996 = vld [vmem:[#allocation2 + $0xa0] sm:$0xff]
    %v3997 = vld [vmem:[#allocation2 + $0xa8] sm:$0xff]
    %v3998 = vld [vmem:[#allocation2 + $0xb0] sm:$0xff]
    %v3999 = vld [vmem:[#allocation2 + $0xb8] sm:$0xff]
    %v4000 = vld [vmem:[#allocation2 + $0xc0] sm:$0xff]
    %v4001 = vld [vmem:[#allocation2 + $0xc8] sm:$0xff]
    %v4002 = vld [vmem:[#allocation2 + $0xd0] sm:$0xff]
    %v4003 = vld [vmem:[#allocation2 + $0xd8] sm:$0xff]
    %v4004 = vld [vmem:[#allocation2 + $0xe0] sm:$0xff]
    %v4005 = vld [vmem:[#allocation2 + $0xe8] sm:$0xff]
    %v4006 = vld [vmem:[#allocation2 + $0xf0] sm:$0xff]
    %v4007 = vld [vmem:[#allocation2 + $0xf8] sm:$0xff]
    %v4008 = vld [vmem:[#allocation2 + $0x100] sm:$0xff]
    %v4009 = vld [vmem:[#allocation2 + $0x108] sm:$0xff]
    %v4010 = vld [vmem:[#allocation2 + $0x110] sm:$0xff]
    %v4011 = vld [vmem:[#allocation2 + $0x118] sm:$0xff]
    %v4012 = vld [vmem:[#allocation2 + $0x120] sm:$0xff]
    %v4013 = vld [vmem:[#allocation2 + $0x128] sm:$0xff]
    %v4014 = vld [vmem:[#allocation2 + $0x130] sm:$0xff]
    %v4015 = vld [vmem:[#allocation2 + $0x138] sm:$0xff]
    %v4016 = vld [vmem:[#allocation2 + $0x140] sm:$0xff]
    %v4017 = vld [vmem:[#allocation2 + $0x148] sm:$0xff]
    %v4018 = vld [vmem:[#allocation2 + $0x150] sm:$0xff]
    %v4019 = vld [vmem:[#allocation2 + $0x158] sm:$0xff]
    %v4020 = vld [vmem:[#allocation2 + $0x160] sm:$0xff]
    %v4021 = vld [vmem:[#allocation2 + $0x168] sm:$0xff]
    %v4022 = vld [vmem:[#allocation2 + $0x170] sm:$0xff]
    %v4023 = vld [vmem:[#allocation2 + $0x178] sm:$0xff]
    %v4024 = vld [vmem:[#allocation2 + $0x180] sm:$0xff]
    %v4025 = vld [vmem:[#allocation2 + $0x188] sm:$0xff]
    %v4026 = vld [vmem:[#allocation2 + $0x190] sm:$0xff]
    %v4027 = vld [vmem:[#allocation2 + $0x198] sm:$0xff]
    %v4028 = vld [vmem:[#allocation2 + $0x1a0] sm:$0xff]
    %v4029 = vld [vmem:[#allocation2 + $0x1a8] sm:$0xff]
    %v4030 = vld [vmem:[#allocation2 + $0x1b0] sm:$0xff]
    %v4031 = vld [vmem:[#allocation2 + $0x1b8] sm:$0xff]
    %v4032 = vld [vmem:[#allocation2 + $0x1c0] sm:$0xff]
    %v4033 = vld [vmem:[#allocation2 + $0x1c8] sm:$0xff]
    %v4034 = vld [vmem:[#allocation2 + $0x1d0] sm:$0xff]
    %v4035 = vld [vmem:[#allocation2 + $0x1d8] sm:$0xff]
    %v4036 = vld [vmem:[#allocation2 + $0x1e0] sm:$0xff]
    %v4037 = vld [vmem:[#allocation2 + $0x1e8] sm:$0xff]
    %v4038 = vld [vmem:[#allocation2 + $0x1f0] sm:$0xff]
    %v4039 = vld [vmem:[#allocation2 + $0x1f8] sm:$0xff]
    %4041 = vset.pattern.permute.xlu0 0
    %4042 = vperm.xlu0 %4041, %v3912
    %v4043 = vpop.permute.xlu0 %4042
    %4046 = vset.pattern.permute.xlu0 0
    %4047 = vperm.xlu0 %4046, %v3913
    %v4048 = vpop.permute.xlu0 %4047
    %4051 = vset.pattern.permute.xlu0 0
    %4052 = vperm.xlu0 %4051, %v3914
    %v4053 = vpop.permute.xlu0 %4052
    %4056 = vset.pattern.permute.xlu0 0
    %4057 = vperm.xlu0 %4056, %v3915
    %v4058 = vpop.permute.xlu0 %4057
    %4061 = vset.pattern.permute.xlu0 0
    %4062 = vperm.xlu0 %4061, %v3916
    %v4063 = vpop.permute.xlu0 %4062
    %4066 = vset.pattern.permute.xlu0 0
    %4067 = vperm.xlu0 %4066, %v3917
    %v4068 = vpop.permute.xlu0 %4067
    %4071 = vset.pattern.permute.xlu0 0
    %4072 = vperm.xlu0 %4071, %v3918
    %v4073 = vpop.permute.xlu0 %4072
    %4076 = vset.pattern.permute.xlu0 0
    %4077 = vperm.xlu0 %4076, %v3919
    %v4078 = vpop.permute.xlu0 %4077
    %4081 = vset.pattern.permute.xlu0 0
    %4082 = vperm.xlu0 %4081, %v3920
    %v4083 = vpop.permute.xlu0 %4082
    %4086 = vset.pattern.permute.xlu0 0
    %4087 = vperm.xlu0 %4086, %v3921
    %v4088 = vpop.permute.xlu0 %4087
    %4091 = vset.pattern.permute.xlu0 0
    %4092 = vperm.xlu0 %4091, %v3922
    %v4093 = vpop.permute.xlu0 %4092
    %4096 = vset.pattern.permute.xlu0 0
    %4097 = vperm.xlu0 %4096, %v3923
    %v4098 = vpop.permute.xlu0 %4097
    %4101 = vset.pattern.permute.xlu0 0
    %4102 = vperm.xlu0 %4101, %v3924
    %v4103 = vpop.permute.xlu0 %4102
    %4106 = vset.pattern.permute.xlu0 0
    %4107 = vperm.xlu0 %4106, %v3925
    %v4108 = vpop.permute.xlu0 %4107
    %4111 = vset.pattern.permute.xlu0 0
    %4112 = vperm.xlu0 %4111, %v3926
    %v4113 = vpop.permute.xlu0 %4112
    %4116 = vset.pattern.permute.xlu0 0
    %4117 = vperm.xlu0 %4116, %v3927
    %v4118 = vpop.permute.xlu0 %4117
    %4121 = vset.pattern.permute.xlu0 0
    %4122 = vperm.xlu0 %4121, %v3928
    %v4123 = vpop.permute.xlu0 %4122
    %4126 = vset.pattern.permute.xlu0 0
    %4127 = vperm.xlu0 %4126, %v3929
    %v4128 = vpop.permute.xlu0 %4127
    %4131 = vset.pattern.permute.xlu0 0
    %4132 = vperm.xlu0 %4131, %v3930
    %v4133 = vpop.permute.xlu0 %4132
    %4136 = vset.pattern.permute.xlu0 0
    %4137 = vperm.xlu0 %4136, %v3931
    %v4138 = vpop.permute.xlu0 %4137
    %4141 = vset.pattern.permute.xlu0 0
    %4142 = vperm.xlu0 %4141, %v3932
    %v4143 = vpop.permute.xlu0 %4142
    %4146 = vset.pattern.permute.xlu0 0
    %4147 = vperm.xlu0 %4146, %v3933
    %v4148 = vpop.permute.xlu0 %4147
    %4151 = vset.pattern.permute.xlu0 0
    %4152 = vperm.xlu0 %4151, %v3934
    %v4153 = vpop.permute.xlu0 %4152
    %4156 = vset.pattern.permute.xlu0 0
    %4157 = vperm.xlu0 %4156, %v3935
    %v4158 = vpop.permute.xlu0 %4157
    %4161 = vset.pattern.permute.xlu0 0
    %4162 = vperm.xlu0 %4161, %v3936
    %v4163 = vpop.permute.xlu0 %4162
    %4166 = vset.pattern.permute.xlu0 0
    %4167 = vperm.xlu0 %4166, %v3937
    %v4168 = vpop.permute.xlu0 %4167
    %4171 = vset.pattern.permute.xlu0 0
    %4172 = vperm.xlu0 %4171, %v3938
    %v4173 = vpop.permute.xlu0 %4172
    %4176 = vset.pattern.permute.xlu0 0
    %4177 = vperm.xlu0 %4176, %v3939
    %v4178 = vpop.permute.xlu0 %4177
    %4181 = vset.pattern.permute.xlu0 0
    %4182 = vperm.xlu0 %4181, %v3940
    %v4183 = vpop.permute.xlu0 %4182
    %4186 = vset.pattern.permute.xlu0 0
    %4187 = vperm.xlu0 %4186, %v3941
    %v4188 = vpop.permute.xlu0 %4187
    %4191 = vset.pattern.permute.xlu0 0
    %4192 = vperm.xlu0 %4191, %v3942
    %v4193 = vpop.permute.xlu0 %4192
    %4196 = vset.pattern.permute.xlu0 0
    %4197 = vperm.xlu0 %4196, %v3943
    %v4198 = vpop.permute.xlu0 %4197
    %4201 = vset.pattern.permute.xlu0 0
    %4202 = vperm.xlu0 %4201, %v3944
    %v4203 = vpop.permute.xlu0 %4202
    %4206 = vset.pattern.permute.xlu0 0
    %4207 = vperm.xlu0 %4206, %v3945
    %v4208 = vpop.permute.xlu0 %4207
    %4211 = vset.pattern.permute.xlu0 0
    %4212 = vperm.xlu0 %4211, %v3946
    %v4213 = vpop.permute.xlu0 %4212
    %4216 = vset.pattern.permute.xlu0 0
    %4217 = vperm.xlu0 %4216, %v3947
    %v4218 = vpop.permute.xlu0 %4217
    %4221 = vset.pattern.permute.xlu0 0
    %4222 = vperm.xlu0 %4221, %v3948
    %v4223 = vpop.permute.xlu0 %4222
    %4226 = vset.pattern.permute.xlu0 0
    %4227 = vperm.xlu0 %4226, %v3949
    %v4228 = vpop.permute.xlu0 %4227
    %4231 = vset.pattern.permute.xlu0 0
    %4232 = vperm.xlu0 %4231, %v3950
    %v4233 = vpop.permute.xlu0 %4232
    %4236 = vset.pattern.permute.xlu0 0
    %4237 = vperm.xlu0 %4236, %v3951
    %v4238 = vpop.permute.xlu0 %4237
    %4241 = vset.pattern.permute.xlu0 0
    %4242 = vperm.xlu0 %4241, %v3952
    %v4243 = vpop.permute.xlu0 %4242
    %4246 = vset.pattern.permute.xlu0 0
    %4247 = vperm.xlu0 %4246, %v3953
    %v4248 = vpop.permute.xlu0 %4247
    %4251 = vset.pattern.permute.xlu0 0
    %4252 = vperm.xlu0 %4251, %v3954
    %v4253 = vpop.permute.xlu0 %4252
    %4256 = vset.pattern.permute.xlu0 0
    %4257 = vperm.xlu0 %4256, %v3955
    %v4258 = vpop.permute.xlu0 %4257
    %4261 = vset.pattern.permute.xlu0 0
    %4262 = vperm.xlu0 %4261, %v3956
    %v4263 = vpop.permute.xlu0 %4262
    %4266 = vset.pattern.permute.xlu0 0
    %4267 = vperm.xlu0 %4266, %v3957
    %v4268 = vpop.permute.xlu0 %4267
    %4271 = vset.pattern.permute.xlu0 0
    %4272 = vperm.xlu0 %4271, %v3958
    %v4273 = vpop.permute.xlu0 %4272
    %4276 = vset.pattern.permute.xlu0 0
    %4277 = vperm.xlu0 %4276, %v3959
    %v4278 = vpop.permute.xlu0 %4277
    %4281 = vset.pattern.permute.xlu0 0
    %4282 = vperm.xlu0 %4281, %v3960
    %v4283 = vpop.permute.xlu0 %4282
    %4286 = vset.pattern.permute.xlu0 0
    %4287 = vperm.xlu0 %4286, %v3961
    %v4288 = vpop.permute.xlu0 %4287
    %4291 = vset.pattern.permute.xlu0 0
    %4292 = vperm.xlu0 %4291, %v3962
    %v4293 = vpop.permute.xlu0 %4292
    %4296 = vset.pattern.permute.xlu0 0
    %4297 = vperm.xlu0 %4296, %v3963
    %v4298 = vpop.permute.xlu0 %4297
    %4301 = vset.pattern.permute.xlu0 0
    %4302 = vperm.xlu0 %4301, %v3964
    %v4303 = vpop.permute.xlu0 %4302
    %4306 = vset.pattern.permute.xlu0 0
    %4307 = vperm.xlu0 %4306, %v3965
    %v4308 = vpop.permute.xlu0 %4307
    %4311 = vset.pattern.permute.xlu0 0
    %4312 = vperm.xlu0 %4311, %v3966
    %v4313 = vpop.permute.xlu0 %4312
    %4316 = vset.pattern.permute.xlu0 0
    %4317 = vperm.xlu0 %4316, %v3967
    %v4318 = vpop.permute.xlu0 %4317
    %4321 = vset.pattern.permute.xlu0 0
    %4322 = vperm.xlu0 %4321, %v3968
    %v4323 = vpop.permute.xlu0 %4322
    %4326 = vset.pattern.permute.xlu0 0
    %4327 = vperm.xlu0 %4326, %v3969
    %v4328 = vpop.permute.xlu0 %4327
    %4331 = vset.pattern.permute.xlu0 0
    %4332 = vperm.xlu0 %4331, %v3970
    %v4333 = vpop.permute.xlu0 %4332
    %4336 = vset.pattern.permute.xlu0 0
    %4337 = vperm.xlu0 %4336, %v3971
    %v4338 = vpop.permute.xlu0 %4337
    %4341 = vset.pattern.permute.xlu0 0
    %4342 = vperm.xlu0 %4341, %v3972
    %v4343 = vpop.permute.xlu0 %4342
    %4346 = vset.pattern.permute.xlu0 0
    %4347 = vperm.xlu0 %4346, %v3973
    %v4348 = vpop.permute.xlu0 %4347
    %4351 = vset.pattern.permute.xlu0 0
    %4352 = vperm.xlu0 %4351, %v3974
    %v4353 = vpop.permute.xlu0 %4352
    %4356 = vset.pattern.permute.xlu0 0
    %4357 = vperm.xlu0 %4356, %v3975
    %v4358 = vpop.permute.xlu0 %4357
    %v4360 = vmul.f32 %v3976, %v4043
    %v4361 = vmul.f32 %v3977, %v4048
    %v4362 = vmul.f32 %v3978, %v4053
    %v4363 = vmul.f32 %v3979, %v4058
    %v4364 = vmul.f32 %v3980, %v4063
    %v4365 = vmul.f32 %v3981, %v4068
    %v4366 = vmul.f32 %v3982, %v4073
    %v4367 = vmul.f32 %v3983, %v4078
    %v4368 = vmul.f32 %v3984, %v4083
    %v4369 = vmul.f32 %v3985, %v4088
    %v4370 = vmul.f32 %v3986, %v4093
    %v4371 = vmul.f32 %v3987, %v4098
    %v4372 = vmul.f32 %v3988, %v4103
    %v4373 = vmul.f32 %v3989, %v4108
    %v4374 = vmul.f32 %v3990, %v4113
    %v4375 = vmul.f32 %v3991, %v4118
    %v4376 = vmul.f32 %v3992, %v4123
    %v4377 = vmul.f32 %v3993, %v4128
    %v4378 = vmul.f32 %v3994, %v4133
    %v4379 = vmul.f32 %v3995, %v4138
    %v4380 = vmul.f32 %v3996, %v4143
    %v4381 = vmul.f32 %v3997, %v4148
    %v4382 = vmul.f32 %v3998, %v4153
    %v4383 = vmul.f32 %v3999, %v4158
    %v4384 = vmul.f32 %v4000, %v4163
    %v4385 = vmul.f32 %v4001, %v4168
    %v4386 = vmul.f32 %v4002, %v4173
    %v4387 = vmul.f32 %v4003, %v4178
    %v4388 = vmul.f32 %v4004, %v4183
    %v4389 = vmul.f32 %v4005, %v4188
    %v4390 = vmul.f32 %v4006, %v4193
    %v4391 = vmul.f32 %v4007, %v4198
    %v4392 = vmul.f32 %v4008, %v4203
    %v4393 = vmul.f32 %v4009, %v4208
    %v4394 = vmul.f32 %v4010, %v4213
    %v4395 = vmul.f32 %v4011, %v4218
    %v4396 = vmul.f32 %v4012, %v4223
    %v4397 = vmul.f32 %v4013, %v4228
    %v4398 = vmul.f32 %v4014, %v4233
    %v4399 = vmul.f32 %v4015, %v4238
    %v4400 = vmul.f32 %v4016, %v4243
    %v4401 = vmul.f32 %v4017, %v4248
    %v4402 = vmul.f32 %v4018, %v4253
    %v4403 = vmul.f32 %v4019, %v4258
    %v4404 = vmul.f32 %v4020, %v4263
    %v4405 = vmul.f32 %v4021, %v4268
    %v4406 = vmul.f32 %v4022, %v4273
    %v4407 = vmul.f32 %v4023, %v4278
    %v4408 = vmul.f32 %v4024, %v4283
    %v4409 = vmul.f32 %v4025, %v4288
    %v4410 = vmul.f32 %v4026, %v4293
    %v4411 = vmul.f32 %v4027, %v4298
    %v4412 = vmul.f32 %v4028, %v4303
    %v4413 = vmul.f32 %v4029, %v4308
    %v4414 = vmul.f32 %v4030, %v4313
    %v4415 = vmul.f32 %v4031, %v4318
    %v4416 = vmul.f32 %v4032, %v4323
    %v4417 = vmul.f32 %v4033, %v4328
    %v4418 = vmul.f32 %v4034, %v4333
    %v4419 = vmul.f32 %v4035, %v4338
    %v4420 = vmul.f32 %v4036, %v4343
    %v4421 = vmul.f32 %v4037, %v4348
    %v4422 = vmul.f32 %v4038, %v4353
    %v4423 = vmul.f32 %v4039, %v4358
    %v4424 = vpack.c.bf16 %v4361, %v4360
    %v4425 = vpack.c.bf16 %v4363, %v4362
    %v4426 = vpack.c.bf16 %v4365, %v4364
    %v4427 = vpack.c.bf16 %v4367, %v4366
    %v4428 = vpack.c.bf16 %v4369, %v4368
    %v4429 = vpack.c.bf16 %v4371, %v4370
    %v4430 = vpack.c.bf16 %v4373, %v4372
    %v4431 = vpack.c.bf16 %v4375, %v4374
    %v4432 = vpack.c.bf16 %v4377, %v4376
    %v4433 = vpack.c.bf16 %v4379, %v4378
    %v4434 = vpack.c.bf16 %v4381, %v4380
    %v4435 = vpack.c.bf16 %v4383, %v4382
    %v4436 = vpack.c.bf16 %v4385, %v4384
    %v4437 = vpack.c.bf16 %v4387, %v4386
    %v4438 = vpack.c.bf16 %v4389, %v4388
    %v4439 = vpack.c.bf16 %v4391, %v4390
    %v4440 = vpack.c.bf16 %v4393, %v4392
    %v4441 = vpack.c.bf16 %v4395, %v4394
    %v4442 = vpack.c.bf16 %v4397, %v4396
    %v4443 = vpack.c.bf16 %v4399, %v4398
    %v4444 = vpack.c.bf16 %v4401, %v4400
    %v4445 = vpack.c.bf16 %v4403, %v4402
    %v4446 = vpack.c.bf16 %v4405, %v4404
    %v4447 = vpack.c.bf16 %v4407, %v4406
    %v4448 = vpack.c.bf16 %v4409, %v4408
    %v4449 = vpack.c.bf16 %v4411, %v4410
    %v4450 = vpack.c.bf16 %v4413, %v4412
    %v4451 = vpack.c.bf16 %v4415, %v4414
    %v4452 = vpack.c.bf16 %v4417, %v4416
    %v4453 = vpack.c.bf16 %v4419, %v4418
    %v4454 = vpack.c.bf16 %v4421, %v4420
    %v4455 = vpack.c.bf16 %v4423, %v4422
    %v4456 = vld [vmem:[%s2] sm:$0xf]
    %v4457 = vld [vmem:[%s2 + $0x4] sm:$0xf]
    %v4458 = vld [vmem:[%s2 + $0x8] sm:$0xf]
    %v4459 = vld [vmem:[%s2 + $0xc] sm:$0xf]
    %v4464 = vunpack.c.l.b16 %v4456
    %v4465 = vunpack.c.l.b16 %v4457
    %v4466 = vunpack.c.l.b16 %v4458
    %v4467 = vunpack.c.l.b16 %v4459
    %v4468 = vpack.c.b16 %v4465, %v4464
    %v4469 = vpack.c.b16 %v4467, %v4466
    %v4473 = vsel %vm2692, %v4424, 0
    %v4476 = vsel %vm2692, %v4425, 0
    %v4479 = vsel %vm2692, %v4426, 0
    %v4482 = vsel %vm2692, %v4427, 0
    %v4485 = vsel %vm2692, %v4428, 0
    %v4488 = vsel %vm2692, %v4429, 0
    %v4491 = vsel %vm2692, %v4430, 0
    %v4494 = vsel %vm2692, %v4431, 0
    %v4497 = vsel %vm2692, %v4432, 0
    %v4500 = vsel %vm2692, %v4433, 0
    %v4503 = vsel %vm2692, %v4434, 0
    %v4506 = vsel %vm2692, %v4435, 0
    %v4509 = vsel %vm2692, %v4436, 0
    %v4512 = vsel %vm2692, %v4437, 0
    %v4515 = vsel %vm2692, %v4438, 0
    %v4518 = vsel %vm2692, %v4439, 0
    %v4521 = vsel %vm2692, %v4440, 0
    %v4524 = vsel %vm2692, %v4441, 0
    %v4527 = vsel %vm2692, %v4442, 0
    %v4530 = vsel %vm2692, %v4443, 0
    %v4533 = vsel %vm2692, %v4444, 0
    %v4536 = vsel %vm2692, %v4445, 0
    %v4539 = vsel %vm2692, %v4446, 0
    %v4542 = vsel %vm2692, %v4447, 0
    %v4545 = vsel %vm2692, %v4448, 0
    %v4548 = vsel %vm2692, %v4449, 0
    %v4551 = vsel %vm2692, %v4450, 0
    %v4554 = vsel %vm2692, %v4451, 0
    %v4557 = vsel %vm2692, %v4452, 0
    %v4560 = vsel %vm2692, %v4453, 0
    %v4563 = vsel %vm2692, %v4454, 0
    %v4566 = vsel %vm2692, %v4455, 0
    %4568 = vmatpush.bf16.msra.mxu0 0
    %4569 = vmatpush.bf16.msra.mxu0 0
    %4570 = vmatpush.bf16.msra.mxu0 0
    %4571 = vmatpush.bf16.msra.mxu0 0
    %4572 = vmatpush.bf16.msra.mxu0 0
    %4573 = vmatpush.bf16.msra.mxu0 0
    %4574 = vmatpush.bf16.msra.mxu0 %v4469
    %4575 = vmatpush.bf16.msra.mxu0 %v4468
    %4576 = vmatmul.bf16.gmra.mxu0 %v4473
    %v4577 = vpop.f32.mrf.mxu0
    %v4578 = vadd.f32 0.0, %v4577
    %v4579 = vpop.f32.mrf.mxu0
    %v4580 = vadd.f32 0.0, %v4579
    %4581 = vmatmul.bf16.gmra.mxu0 %v4476
    %v4582 = vpop.f32.mrf.mxu0
    %v4583 = vadd.f32 0.0, %v4582
    %v4584 = vpop.f32.mrf.mxu0
    %v4585 = vadd.f32 0.0, %v4584
    %4586 = vmatmul.bf16.gmra.mxu0 %v4479
    %v4587 = vpop.f32.mrf.mxu0
    %v4588 = vadd.f32 0.0, %v4587
    %v4589 = vpop.f32.mrf.mxu0
    %v4590 = vadd.f32 0.0, %v4589
    %4591 = vmatmul.bf16.gmra.mxu0 %v4482
    %v4592 = vpop.f32.mrf.mxu0
    %v4593 = vadd.f32 0.0, %v4592
    %v4594 = vpop.f32.mrf.mxu0
    %v4595 = vadd.f32 0.0, %v4594
    %4596 = vmatmul.bf16.gmra.mxu0 %v4485
    %v4597 = vpop.f32.mrf.mxu0
    %v4598 = vadd.f32 0.0, %v4597
    %v4599 = vpop.f32.mrf.mxu0
    %v4600 = vadd.f32 0.0, %v4599
    %4601 = vmatmul.bf16.gmra.mxu0 %v4488
    %v4602 = vpop.f32.mrf.mxu0
    %v4603 = vadd.f32 0.0, %v4602
    %v4604 = vpop.f32.mrf.mxu0
    %v4605 = vadd.f32 0.0, %v4604
    %4606 = vmatmul.bf16.gmra.mxu0 %v4491
    %v4607 = vpop.f32.mrf.mxu0
    %v4608 = vadd.f32 0.0, %v4607
    %v4609 = vpop.f32.mrf.mxu0
    %v4610 = vadd.f32 0.0, %v4609
    %4611 = vmatmul.bf16.gmra.mxu0 %v4494
    %v4612 = vpop.f32.mrf.mxu0
    %v4613 = vadd.f32 0.0, %v4612
    %v4614 = vpop.f32.mrf.mxu0
    %v4615 = vadd.f32 0.0, %v4614
    %4616 = vmatmul.bf16.gmra.mxu0 %v4497
    %v4617 = vpop.f32.mrf.mxu0
    %v4618 = vadd.f32 0.0, %v4617
    %v4619 = vpop.f32.mrf.mxu0
    %v4620 = vadd.f32 0.0, %v4619
    %4621 = vmatmul.bf16.gmra.mxu0 %v4500
    %v4622 = vpop.f32.mrf.mxu0
    %v4623 = vadd.f32 0.0, %v4622
    %v4624 = vpop.f32.mrf.mxu0
    %v4625 = vadd.f32 0.0, %v4624
    %4626 = vmatmul.bf16.gmra.mxu0 %v4503
    %v4627 = vpop.f32.mrf.mxu0
    %v4628 = vadd.f32 0.0, %v4627
    %v4629 = vpop.f32.mrf.mxu0
    %v4630 = vadd.f32 0.0, %v4629
    %4631 = vmatmul.bf16.gmra.mxu0 %v4506
    %v4632 = vpop.f32.mrf.mxu0
    %v4633 = vadd.f32 0.0, %v4632
    %v4634 = vpop.f32.mrf.mxu0
    %v4635 = vadd.f32 0.0, %v4634
    %4636 = vmatmul.bf16.gmra.mxu0 %v4509
    %v4637 = vpop.f32.mrf.mxu0
    %v4638 = vadd.f32 0.0, %v4637
    %v4639 = vpop.f32.mrf.mxu0
    %v4640 = vadd.f32 0.0, %v4639
    %4641 = vmatmul.bf16.gmra.mxu0 %v4512
    %v4642 = vpop.f32.mrf.mxu0
    %v4643 = vadd.f32 0.0, %v4642
    %v4644 = vpop.f32.mrf.mxu0
    %v4645 = vadd.f32 0.0, %v4644
    %4646 = vmatmul.bf16.gmra.mxu0 %v4515
    %v4647 = vpop.f32.mrf.mxu0
    %v4648 = vadd.f32 0.0, %v4647
    %v4649 = vpop.f32.mrf.mxu0
    %v4650 = vadd.f32 0.0, %v4649
    %4651 = vmatmul.bf16.gmra.mxu0 %v4518
    %v4652 = vpop.f32.mrf.mxu0
    %v4653 = vadd.f32 0.0, %v4652
    %v4654 = vpop.f32.mrf.mxu0
    %v4655 = vadd.f32 0.0, %v4654
    %4656 = vmatmul.bf16.gmra.mxu0 %v4521
    %v4657 = vpop.f32.mrf.mxu0
    %v4658 = vadd.f32 0.0, %v4657
    %v4659 = vpop.f32.mrf.mxu0
    %v4660 = vadd.f32 0.0, %v4659
    %4661 = vmatmul.bf16.gmra.mxu0 %v4524
    %v4662 = vpop.f32.mrf.mxu0
    %v4663 = vadd.f32 0.0, %v4662
    %v4664 = vpop.f32.mrf.mxu0
    %v4665 = vadd.f32 0.0, %v4664
    %4666 = vmatmul.bf16.gmra.mxu0 %v4527
    %v4667 = vpop.f32.mrf.mxu0
    %v4668 = vadd.f32 0.0, %v4667
    %v4669 = vpop.f32.mrf.mxu0
    %v4670 = vadd.f32 0.0, %v4669
    %4671 = vmatmul.bf16.gmra.mxu0 %v4530
    %v4672 = vpop.f32.mrf.mxu0
    %v4673 = vadd.f32 0.0, %v4672
    %v4674 = vpop.f32.mrf.mxu0
    %v4675 = vadd.f32 0.0, %v4674
    %4676 = vmatmul.bf16.gmra.mxu0 %v4533
    %v4677 = vpop.f32.mrf.mxu0
    %v4678 = vadd.f32 0.0, %v4677
    %v4679 = vpop.f32.mrf.mxu0
    %v4680 = vadd.f32 0.0, %v4679
    %4681 = vmatmul.bf16.gmra.mxu0 %v4536
    %v4682 = vpop.f32.mrf.mxu0
    %v4683 = vadd.f32 0.0, %v4682
    %v4684 = vpop.f32.mrf.mxu0
    %v4685 = vadd.f32 0.0, %v4684
    %4686 = vmatmul.bf16.gmra.mxu0 %v4539
    %v4687 = vpop.f32.mrf.mxu0
    %v4688 = vadd.f32 0.0, %v4687
    %v4689 = vpop.f32.mrf.mxu0
    %v4690 = vadd.f32 0.0, %v4689
    %4691 = vmatmul.bf16.gmra.mxu0 %v4542
    %v4692 = vpop.f32.mrf.mxu0
    %v4693 = vadd.f32 0.0, %v4692
    %v4694 = vpop.f32.mrf.mxu0
    %v4695 = vadd.f32 0.0, %v4694
    %4696 = vmatmul.bf16.gmra.mxu0 %v4545
    %v4697 = vpop.f32.mrf.mxu0
    %v4698 = vadd.f32 0.0, %v4697
    %v4699 = vpop.f32.mrf.mxu0
    %v4700 = vadd.f32 0.0, %v4699
    %4701 = vmatmul.bf16.gmra.mxu0 %v4548
    %v4702 = vpop.f32.mrf.mxu0
    %v4703 = vadd.f32 0.0, %v4702
    %v4704 = vpop.f32.mrf.mxu0
    %v4705 = vadd.f32 0.0, %v4704
    %4706 = vmatmul.bf16.gmra.mxu0 %v4551
    %v4707 = vpop.f32.mrf.mxu0
    %v4708 = vadd.f32 0.0, %v4707
    %v4709 = vpop.f32.mrf.mxu0
    %v4710 = vadd.f32 0.0, %v4709
    %4711 = vmatmul.bf16.gmra.mxu0 %v4554
    %v4712 = vpop.f32.mrf.mxu0
    %v4713 = vadd.f32 0.0, %v4712
    %v4714 = vpop.f32.mrf.mxu0
    %v4715 = vadd.f32 0.0, %v4714
    %4716 = vmatmul.bf16.gmra.mxu0 %v4557
    %v4717 = vpop.f32.mrf.mxu0
    %v4718 = vadd.f32 0.0, %v4717
    %v4719 = vpop.f32.mrf.mxu0
    %v4720 = vadd.f32 0.0, %v4719
    %4721 = vmatmul.bf16.gmra.mxu0 %v4560
    %v4722 = vpop.f32.mrf.mxu0
    %v4723 = vadd.f32 0.0, %v4722
    %v4724 = vpop.f32.mrf.mxu0
    %v4725 = vadd.f32 0.0, %v4724
    %4726 = vmatmul.bf16.gmra.mxu0 %v4563
    %v4727 = vpop.f32.mrf.mxu0
    %v4728 = vadd.f32 0.0, %v4727
    %v4729 = vpop.f32.mrf.mxu0
    %v4730 = vadd.f32 0.0, %v4729
    %4731 = vmatmul.bf16.gmra.mxu0 %v4566
    %v4732 = vpop.f32.mrf.mxu0
    %v4733 = vadd.f32 0.0, %v4732
    %v4734 = vpop.f32.mrf.mxu0
    %v4735 = vadd.f32 0.0, %v4734
    %4736 = vdwg.mxu0
    %v4737 = vld [vmem:[%s3] sm:$0xf]
    %v4738 = vld [vmem:[%s3 + $0x4] sm:$0xf]
    %v4739 = vld [vmem:[%s3 + $0x8] sm:$0xf]
    %v4740 = vld [vmem:[%s3 + $0xc] sm:$0xf]
    %v4745 = vunpack.c.l.b16 %v4737
    %v4746 = vunpack.c.l.b16 %v4738
    %v4747 = vunpack.c.l.b16 %v4739
    %v4748 = vunpack.c.l.b16 %v4740
    %v4749 = vpack.c.b16 %v4746, %v4745
    %v4750 = vpack.c.b16 %v4748, %v4747
    %4753 = vmatpush.bf16.msra.mxu0 0
    %4754 = vmatpush.bf16.msra.mxu0 0
    %4755 = vmatpush.bf16.msra.mxu0 0
    %4756 = vmatpush.bf16.msra.mxu0 0
    %4757 = vmatpush.bf16.msra.mxu0 0
    %4758 = vmatpush.bf16.msra.mxu0 0
    %4759 = vmatpush.bf16.msra.mxu0 %v4750
    %4760 = vmatpush.bf16.msra.mxu0 %v4749
    %4761 = vmatmul.bf16.gmra.mxu0 %v4473
    %v4762 = vpop.f32.mrf.mxu0
    %v4763 = vadd.f32 0.0, %v4762
    %v4764 = vpop.f32.mrf.mxu0
    %v4765 = vadd.f32 0.0, %v4764
    %4766 = vmatmul.bf16.gmra.mxu0 %v4476
    %v4767 = vpop.f32.mrf.mxu0
    %v4768 = vadd.f32 0.0, %v4767
    %v4769 = vpop.f32.mrf.mxu0
    %v4770 = vadd.f32 0.0, %v4769
    %4771 = vmatmul.bf16.gmra.mxu0 %v4479
    %v4772 = vpop.f32.mrf.mxu0
    %v4773 = vadd.f32 0.0, %v4772
    %v4774 = vpop.f32.mrf.mxu0
    %v4775 = vadd.f32 0.0, %v4774
    %4776 = vmatmul.bf16.gmra.mxu0 %v4482
    %v4777 = vpop.f32.mrf.mxu0
    %v4778 = vadd.f32 0.0, %v4777
    %v4779 = vpop.f32.mrf.mxu0
    %v4780 = vadd.f32 0.0, %v4779
    %4781 = vmatmul.bf16.gmra.mxu0 %v4485
    %v4782 = vpop.f32.mrf.mxu0
    %v4783 = vadd.f32 0.0, %v4782
    %v4784 = vpop.f32.mrf.mxu0
    %v4785 = vadd.f32 0.0, %v4784
    %4786 = vmatmul.bf16.gmra.mxu0 %v4488
    %v4787 = vpop.f32.mrf.mxu0
    %v4788 = vadd.f32 0.0, %v4787
    %v4789 = vpop.f32.mrf.mxu0
    %v4790 = vadd.f32 0.0, %v4789
    %4791 = vmatmul.bf16.gmra.mxu0 %v4491
    %v4792 = vpop.f32.mrf.mxu0
    %v4793 = vadd.f32 0.0, %v4792
    %v4794 = vpop.f32.mrf.mxu0
    %v4795 = vadd.f32 0.0, %v4794
    %4796 = vmatmul.bf16.gmra.mxu0 %v4494
    %v4797 = vpop.f32.mrf.mxu0
    %v4798 = vadd.f32 0.0, %v4797
    %v4799 = vpop.f32.mrf.mxu0
    %v4800 = vadd.f32 0.0, %v4799
    %4801 = vmatmul.bf16.gmra.mxu0 %v4497
    %v4802 = vpop.f32.mrf.mxu0
    %v4803 = vadd.f32 0.0, %v4802
    %v4804 = vpop.f32.mrf.mxu0
    %v4805 = vadd.f32 0.0, %v4804
    %4806 = vmatmul.bf16.gmra.mxu0 %v4500
    %v4807 = vpop.f32.mrf.mxu0
    %v4808 = vadd.f32 0.0, %v4807
    %v4809 = vpop.f32.mrf.mxu0
    %v4810 = vadd.f32 0.0, %v4809
    %4811 = vmatmul.bf16.gmra.mxu0 %v4503
    %v4812 = vpop.f32.mrf.mxu0
    %v4813 = vadd.f32 0.0, %v4812
    %v4814 = vpop.f32.mrf.mxu0
    %v4815 = vadd.f32 0.0, %v4814
    %4816 = vmatmul.bf16.gmra.mxu0 %v4506
    %v4817 = vpop.f32.mrf.mxu0
    %v4818 = vadd.f32 0.0, %v4817
    %v4819 = vpop.f32.mrf.mxu0
    %v4820 = vadd.f32 0.0, %v4819
    %4821 = vmatmul.bf16.gmra.mxu0 %v4509
    %v4822 = vpop.f32.mrf.mxu0
    %v4823 = vadd.f32 0.0, %v4822
    %v4824 = vpop.f32.mrf.mxu0
    %v4825 = vadd.f32 0.0, %v4824
    %4826 = vmatmul.bf16.gmra.mxu0 %v4512
    %v4827 = vpop.f32.mrf.mxu0
    %v4828 = vadd.f32 0.0, %v4827
    %v4829 = vpop.f32.mrf.mxu0
    %v4830 = vadd.f32 0.0, %v4829
    %4831 = vmatmul.bf16.gmra.mxu0 %v4515
    %v4832 = vpop.f32.mrf.mxu0
    %v4833 = vadd.f32 0.0, %v4832
    %v4834 = vpop.f32.mrf.mxu0
    %v4835 = vadd.f32 0.0, %v4834
    %4836 = vmatmul.bf16.gmra.mxu0 %v4518
    %v4837 = vpop.f32.mrf.mxu0
    %v4838 = vadd.f32 0.0, %v4837
    %v4839 = vpop.f32.mrf.mxu0
    %v4840 = vadd.f32 0.0, %v4839
    %4841 = vmatmul.bf16.gmra.mxu0 %v4521
    %v4842 = vpop.f32.mrf.mxu0
    %v4843 = vadd.f32 0.0, %v4842
    %v4844 = vpop.f32.mrf.mxu0
    %v4845 = vadd.f32 0.0, %v4844
    %4846 = vmatmul.bf16.gmra.mxu0 %v4524
    %v4847 = vpop.f32.mrf.mxu0
    %v4848 = vadd.f32 0.0, %v4847
    %v4849 = vpop.f32.mrf.mxu0
    %v4850 = vadd.f32 0.0, %v4849
    %4851 = vmatmul.bf16.gmra.mxu0 %v4527
    %v4852 = vpop.f32.mrf.mxu0
    %v4853 = vadd.f32 0.0, %v4852
    %v4854 = vpop.f32.mrf.mxu0
    %v4855 = vadd.f32 0.0, %v4854
    %4856 = vmatmul.bf16.gmra.mxu0 %v4530
    %v4857 = vpop.f32.mrf.mxu0
    %v4858 = vadd.f32 0.0, %v4857
    %v4859 = vpop.f32.mrf.mxu0
    %v4860 = vadd.f32 0.0, %v4859
    %4861 = vmatmul.bf16.gmra.mxu0 %v4533
    %v4862 = vpop.f32.mrf.mxu0
    %v4863 = vadd.f32 0.0, %v4862
    %v4864 = vpop.f32.mrf.mxu0
    %v4865 = vadd.f32 0.0, %v4864
    %4866 = vmatmul.bf16.gmra.mxu0 %v4536
    %v4867 = vpop.f32.mrf.mxu0
    %v4868 = vadd.f32 0.0, %v4867
    %v4869 = vpop.f32.mrf.mxu0
    %v4870 = vadd.f32 0.0, %v4869
    %4871 = vmatmul.bf16.gmra.mxu0 %v4539
    %v4872 = vpop.f32.mrf.mxu0
    %v4873 = vadd.f32 0.0, %v4872
    %v4874 = vpop.f32.mrf.mxu0
    %v4875 = vadd.f32 0.0, %v4874
    %4876 = vmatmul.bf16.gmra.mxu0 %v4542
    %v4877 = vpop.f32.mrf.mxu0
    %v4878 = vadd.f32 0.0, %v4877
    %v4879 = vpop.f32.mrf.mxu0
    %v4880 = vadd.f32 0.0, %v4879
    %4881 = vmatmul.bf16.gmra.mxu0 %v4545
    %v4882 = vpop.f32.mrf.mxu0
    %v4883 = vadd.f32 0.0, %v4882
    %v4884 = vpop.f32.mrf.mxu0
    %v4885 = vadd.f32 0.0, %v4884
    %4886 = vmatmul.bf16.gmra.mxu0 %v4548
    %v4887 = vpop.f32.mrf.mxu0
    %v4888 = vadd.f32 0.0, %v4887
    %v4889 = vpop.f32.mrf.mxu0
    %v4890 = vadd.f32 0.0, %v4889
    %4891 = vmatmul.bf16.gmra.mxu0 %v4551
    %v4892 = vpop.f32.mrf.mxu0
    %v4893 = vadd.f32 0.0, %v4892
    %v4894 = vpop.f32.mrf.mxu0
    %v4895 = vadd.f32 0.0, %v4894
    %4896 = vmatmul.bf16.gmra.mxu0 %v4554
    %v4897 = vpop.f32.mrf.mxu0
    %v4898 = vadd.f32 0.0, %v4897
    %v4899 = vpop.f32.mrf.mxu0
    %v4900 = vadd.f32 0.0, %v4899
    %4901 = vmatmul.bf16.gmra.mxu0 %v4557
    %v4902 = vpop.f32.mrf.mxu0
    %v4903 = vadd.f32 0.0, %v4902
    %v4904 = vpop.f32.mrf.mxu0
    %v4905 = vadd.f32 0.0, %v4904
    %4906 = vmatmul.bf16.gmra.mxu0 %v4560
    %v4907 = vpop.f32.mrf.mxu0
    %v4908 = vadd.f32 0.0, %v4907
    %v4909 = vpop.f32.mrf.mxu0
    %v4910 = vadd.f32 0.0, %v4909
    %4911 = vmatmul.bf16.gmra.mxu0 %v4563
    %v4912 = vpop.f32.mrf.mxu0
    %v4913 = vadd.f32 0.0, %v4912
    %v4914 = vpop.f32.mrf.mxu0
    %v4915 = vadd.f32 0.0, %v4914
    %4916 = vmatmul.bf16.gmra.mxu0 %v4566
    %v4917 = vpop.f32.mrf.mxu0
    %v4918 = vadd.f32 0.0, %v4917
    %v4919 = vpop.f32.mrf.mxu0
    %v4920 = vadd.f32 0.0, %v4919
    %4921 = vdwg.mxu0
    %v4922 = vpack.c.bf16 %v4578, %v4578
    %v4923 = vpack.c.bf16 %v4580, %v4580
    %v4924 = vpack.c.bf16 %v4583, %v4583
    %v4925 = vpack.c.bf16 %v4585, %v4585
    %v4926 = vpack.c.bf16 %v4588, %v4588
    %v4927 = vpack.c.bf16 %v4590, %v4590
    %v4928 = vpack.c.bf16 %v4593, %v4593
    %v4929 = vpack.c.bf16 %v4595, %v4595
    %v4930 = vpack.c.bf16 %v4598, %v4598
    %v4931 = vpack.c.bf16 %v4600, %v4600
    %v4932 = vpack.c.bf16 %v4603, %v4603
    %v4933 = vpack.c.bf16 %v4605, %v4605
    %v4934 = vpack.c.bf16 %v4608, %v4608
    %v4935 = vpack.c.bf16 %v4610, %v4610
    %v4936 = vpack.c.bf16 %v4613, %v4613
    %v4937 = vpack.c.bf16 %v4615, %v4615
    %v4938 = vpack.c.bf16 %v4618, %v4618
    %v4939 = vpack.c.bf16 %v4620, %v4620
    %v4940 = vpack.c.bf16 %v4623, %v4623
    %v4941 = vpack.c.bf16 %v4625, %v4625
    %v4942 = vpack.c.bf16 %v4628, %v4628
    %v4943 = vpack.c.bf16 %v4630, %v4630
    %v4944 = vpack.c.bf16 %v4633, %v4633
    %v4945 = vpack.c.bf16 %v4635, %v4635
    %v4946 = vpack.c.bf16 %v4638, %v4638
    %v4947 = vpack.c.bf16 %v4640, %v4640
    %v4948 = vpack.c.bf16 %v4643, %v4643
    %v4949 = vpack.c.bf16 %v4645, %v4645
    %v4950 = vpack.c.bf16 %v4648, %v4648
    %v4951 = vpack.c.bf16 %v4650, %v4650
    %v4952 = vpack.c.bf16 %v4653, %v4653
    %v4953 = vpack.c.bf16 %v4655, %v4655
    %v4954 = vpack.c.bf16 %v4658, %v4658
    %v4955 = vpack.c.bf16 %v4660, %v4660
    %v4956 = vpack.c.bf16 %v4663, %v4663
    %v4957 = vpack.c.bf16 %v4665, %v4665
    %v4958 = vpack.c.bf16 %v4668, %v4668
    %v4959 = vpack.c.bf16 %v4670, %v4670
    %v4960 = vpack.c.bf16 %v4673, %v4673
    %v4961 = vpack.c.bf16 %v4675, %v4675
    %v4962 = vpack.c.bf16 %v4678, %v4678
    %v4963 = vpack.c.bf16 %v4680, %v4680
    %v4964 = vpack.c.bf16 %v4683, %v4683
    %v4965 = vpack.c.bf16 %v4685, %v4685
    %v4966 = vpack.c.bf16 %v4688, %v4688
    %v4967 = vpack.c.bf16 %v4690, %v4690
    %v4968 = vpack.c.bf16 %v4693, %v4693
    %v4969 = vpack.c.bf16 %v4695, %v4695
    %v4970 = vpack.c.bf16 %v4698, %v4698
    %v4971 = vpack.c.bf16 %v4700, %v4700
    %v4972 = vpack.c.bf16 %v4703, %v4703
    %v4973 = vpack.c.bf16 %v4705, %v4705
    %v4974 = vpack.c.bf16 %v4708, %v4708
    %v4975 = vpack.c.bf16 %v4710, %v4710
    %v4976 = vpack.c.bf16 %v4713, %v4713
    %v4977 = vpack.c.bf16 %v4715, %v4715
    %v4978 = vpack.c.bf16 %v4718, %v4718
    %v4979 = vpack.c.bf16 %v4720, %v4720
    %v4980 = vpack.c.bf16 %v4723, %v4723
    %v4981 = vpack.c.bf16 %v4725, %v4725
    %v4982 = vpack.c.bf16 %v4728, %v4728
    %v4983 = vpack.c.bf16 %v4730, %v4730
    %v4984 = vpack.c.bf16 %v4733, %v4733
    %v4985 = vpack.c.bf16 %v4735, %v4735
    %vm4986 = vcmask 257024
    %4987 = vst.msk [vmem:[%s4] sm:$0xf] %vm4986, %v4922
    %4988 = vst.msk [vmem:[%s4 + $0x4] sm:$0xf] %vm4986, %v4923
    %4989 = vst.msk [vmem:[%s4 + $0x8] sm:$0xf] %vm4986, %v4924
    %4990 = vst.msk [vmem:[%s4 + $0xc] sm:$0xf] %vm4986, %v4925
    %4991 = vst.msk [vmem:[%s4 + $0x10] sm:$0xf] %vm4986, %v4926
    %4992 = vst.msk [vmem:[%s4 + $0x14] sm:$0xf] %vm4986, %v4927
    %4993 = vst.msk [vmem:[%s4 + $0x18] sm:$0xf] %vm4986, %v4928
    %4994 = vst.msk [vmem:[%s4 + $0x1c] sm:$0xf] %vm4986, %v4929
    %4995 = vst.msk [vmem:[%s4 + $0x20] sm:$0xf] %vm4986, %v4930
    %4996 = vst.msk [vmem:[%s4 + $0x24] sm:$0xf] %vm4986, %v4931
    %4997 = vst.msk [vmem:[%s4 + $0x28] sm:$0xf] %vm4986, %v4932
    %4998 = vst.msk [vmem:[%s4 + $0x2c] sm:$0xf] %vm4986, %v4933
    %4999 = vst.msk [vmem:[%s4 + $0x30] sm:$0xf] %vm4986, %v4934
    %5000 = vst.msk [vmem:[%s4 + $0x34] sm:$0xf] %vm4986, %v4935
    %5001 = vst.msk [vmem:[%s4 + $0x38] sm:$0xf] %vm4986, %v4936
    %5002 = vst.msk [vmem:[%s4 + $0x3c] sm:$0xf] %vm4986, %v4937
    %5003 = vst.msk [vmem:[%s4 + $0x40] sm:$0xf] %vm4986, %v4938
    %5004 = vst.msk [vmem:[%s4 + $0x44] sm:$0xf] %vm4986, %v4939
    %5005 = vst.msk [vmem:[%s4 + $0x48] sm:$0xf] %vm4986, %v4940
    %5006 = vst.msk [vmem:[%s4 + $0x4c] sm:$0xf] %vm4986, %v4941
    %5007 = vst.msk [vmem:[%s4 + $0x50] sm:$0xf] %vm4986, %v4942
    %5008 = vst.msk [vmem:[%s4 + $0x54] sm:$0xf] %vm4986, %v4943
    %5009 = vst.msk [vmem:[%s4 + $0x58] sm:$0xf] %vm4986, %v4944
    %5010 = vst.msk [vmem:[%s4 + $0x5c] sm:$0xf] %vm4986, %v4945
    %5011 = vst.msk [vmem:[%s4 + $0x60] sm:$0xf] %vm4986, %v4946
    %5012 = vst.msk [vmem:[%s4 + $0x64] sm:$0xf] %vm4986, %v4947
    %5013 = vst.msk [vmem:[%s4 + $0x68] sm:$0xf] %vm4986, %v4948
    %5014 = vst.msk [vmem:[%s4 + $0x6c] sm:$0xf] %vm4986, %v4949
    %5015 = vst.msk [vmem:[%s4 + $0x70] sm:$0xf] %vm4986, %v4950
    %5016 = vst.msk [vmem:[%s4 + $0x74] sm:$0xf] %vm4986, %v4951
    %5017 = vst.msk [vmem:[%s4 + $0x78] sm:$0xf] %vm4986, %v4952
    %5018 = vst.msk [vmem:[%s4 + $0x7c] sm:$0xf] %vm4986, %v4953
    %5019 = vst.msk [vmem:[%s4 + $0x80] sm:$0xf] %vm4986, %v4954
    %5020 = vst.msk [vmem:[%s4 + $0x84] sm:$0xf] %vm4986, %v4955
    %5021 = vst.msk [vmem:[%s4 + $0x88] sm:$0xf] %vm4986, %v4956
    %5022 = vst.msk [vmem:[%s4 + $0x8c] sm:$0xf] %vm4986, %v4957
    %5023 = vst.msk [vmem:[%s4 + $0x90] sm:$0xf] %vm4986, %v4958
    %5024 = vst.msk [vmem:[%s4 + $0x94] sm:$0xf] %vm4986, %v4959
    %5025 = vst.msk [vmem:[%s4 + $0x98] sm:$0xf] %vm4986, %v4960
    %5026 = vst.msk [vmem:[%s4 + $0x9c] sm:$0xf] %vm4986, %v4961
    %5027 = vst.msk [vmem:[%s4 + $0xa0] sm:$0xf] %vm4986, %v4962
    %5028 = vst.msk [vmem:[%s4 + $0xa4] sm:$0xf] %vm4986, %v4963
    %5029 = vst.msk [vmem:[%s4 + $0xa8] sm:$0xf] %vm4986, %v4964
    %5030 = vst.msk [vmem:[%s4 + $0xac] sm:$0xf] %vm4986, %v4965
    %5031 = vst.msk [vmem:[%s4 + $0xb0] sm:$0xf] %vm4986, %v4966
    %5032 = vst.msk [vmem:[%s4 + $0xb4] sm:$0xf] %vm4986, %v4967
    %5033 = vst.msk [vmem:[%s4 + $0xb8] sm:$0xf] %vm4986, %v4968
    %5034 = vst.msk [vmem:[%s4 + $0xbc] sm:$0xf] %vm4986, %v4969
    %5035 = vst.msk [vmem:[%s4 + $0xc0] sm:$0xf] %vm4986, %v4970
    %5036 = vst.msk [vmem:[%s4 + $0xc4] sm:$0xf] %vm4986, %v4971
    %5037 = vst.msk [vmem:[%s4 + $0xc8] sm:$0xf] %vm4986, %v4972
    %5038 = vst.msk [vmem:[%s4 + $0xcc] sm:$0xf] %vm4986, %v4973
    %5039 = vst.msk [vmem:[%s4 + $0xd0] sm:$0xf] %vm4986, %v4974
    %5040 = vst.msk [vmem:[%s4 + $0xd4] sm:$0xf] %vm4986, %v4975
    %5041 = vst.msk [vmem:[%s4 + $0xd8] sm:$0xf] %vm4986, %v4976
    %5042 = vst.msk [vmem:[%s4 + $0xdc] sm:$0xf] %vm4986, %v4977
    %5043 = vst.msk [vmem:[%s4 + $0xe0] sm:$0xf] %vm4986, %v4978
    %5044 = vst.msk [vmem:[%s4 + $0xe4] sm:$0xf] %vm4986, %v4979
    %5045 = vst.msk [vmem:[%s4 + $0xe8] sm:$0xf] %vm4986, %v4980
    %5046 = vst.msk [vmem:[%s4 + $0xec] sm:$0xf] %vm4986, %v4981
    %5047 = vst.msk [vmem:[%s4 + $0xf0] sm:$0xf] %vm4986, %v4982
    %5048 = vst.msk [vmem:[%s4 + $0xf4] sm:$0xf] %vm4986, %v4983
    %5049 = vst.msk [vmem:[%s4 + $0xf8] sm:$0xf] %vm4986, %v4984
    %5050 = vst.msk [vmem:[%s4 + $0xfc] sm:$0xf] %vm4986, %v4985
    %v5051 = vmul.f32 %v4763, %v4763
    %v5052 = vmul.f32 %v4765, %v4765
    %v5053 = vmul.f32 %v4768, %v4768
    %v5054 = vmul.f32 %v4770, %v4770
    %v5055 = vmul.f32 %v4773, %v4773
    %v5056 = vmul.f32 %v4775, %v4775
    %v5057 = vmul.f32 %v4778, %v4778
    %v5058 = vmul.f32 %v4780, %v4780
    %v5059 = vmul.f32 %v4783, %v4783
    %v5060 = vmul.f32 %v4785, %v4785
    %v5061 = vmul.f32 %v4788, %v4788
    %v5062 = vmul.f32 %v4790, %v4790
    %v5063 = vmul.f32 %v4793, %v4793
    %v5064 = vmul.f32 %v4795, %v4795
    %v5065 = vmul.f32 %v4798, %v4798
    %v5066 = vmul.f32 %v4800, %v4800
    %v5067 = vmul.f32 %v4803, %v4803
    %v5068 = vmul.f32 %v4805, %v4805
    %v5069 = vmul.f32 %v4808, %v4808
    %v5070 = vmul.f32 %v4810, %v4810
    %v5071 = vmul.f32 %v4813, %v4813
    %v5072 = vmul.f32 %v4815, %v4815
    %v5073 = vmul.f32 %v4818, %v4818
    %v5074 = vmul.f32 %v4820, %v4820
    %v5075 = vmul.f32 %v4823, %v4823
    %v5076 = vmul.f32 %v4825, %v4825
    %v5077 = vmul.f32 %v4828, %v4828
    %v5078 = vmul.f32 %v4830, %v4830
    %v5079 = vmul.f32 %v4833, %v4833
    %v5080 = vmul.f32 %v4835, %v4835
    %v5081 = vmul.f32 %v4838, %v4838
    %v5082 = vmul.f32 %v4840, %v4840
    %v5083 = vmul.f32 %v4843, %v4843
    %v5084 = vmul.f32 %v4845, %v4845
    %v5085 = vmul.f32 %v4848, %v4848
    %v5086 = vmul.f32 %v4850, %v4850
    %v5087 = vmul.f32 %v4853, %v4853
    %v5088 = vmul.f32 %v4855, %v4855
    %v5089 = vmul.f32 %v4858, %v4858
    %v5090 = vmul.f32 %v4860, %v4860
    %v5091 = vmul.f32 %v4863, %v4863
    %v5092 = vmul.f32 %v4865, %v4865
    %v5093 = vmul.f32 %v4868, %v4868
    %v5094 = vmul.f32 %v4870, %v4870
    %v5095 = vmul.f32 %v4873, %v4873
    %v5096 = vmul.f32 %v4875, %v4875
    %v5097 = vmul.f32 %v4878, %v4878
    %v5098 = vmul.f32 %v4880, %v4880
    %v5099 = vmul.f32 %v4883, %v4883
    %v5100 = vmul.f32 %v4885, %v4885
    %v5101 = vmul.f32 %v4888, %v4888
    %v5102 = vmul.f32 %v4890, %v4890
    %v5103 = vmul.f32 %v4893, %v4893
    %v5104 = vmul.f32 %v4895, %v4895
    %v5105 = vmul.f32 %v4898, %v4898
    %v5106 = vmul.f32 %v4900, %v4900
    %v5107 = vmul.f32 %v4903, %v4903
    %v5108 = vmul.f32 %v4905, %v4905
    %v5109 = vmul.f32 %v4908, %v4908
    %v5110 = vmul.f32 %v4910, %v4910
    %v5111 = vmul.f32 %v4913, %v4913
    %v5112 = vmul.f32 %v4915, %v4915
    %v5113 = vmul.f32 %v4918, %v4918
    %v5114 = vmul.f32 %v4920, %v4920
    %v5115 = vsel %vm2692, %v5051, 0.0
    %5116 = vadd.xlane.f32.xlu0 %v5115
    %v5117 = vpop.xlane.xlu0 %5116
    %v5118 = vsel %vm2692, %v5052, 0.0
    %5119 = vadd.xlane.f32.xlu0 %v5118
    %v5120 = vpop.xlane.xlu0 %5119
    %v5121 = vsel %vm2692, %v5053, 0.0
    %5122 = vadd.xlane.f32.xlu0 %v5121
    %v5123 = vpop.xlane.xlu0 %5122
    %v5124 = vsel %vm2692, %v5054, 0.0
    %5125 = vadd.xlane.f32.xlu0 %v5124
    %v5126 = vpop.xlane.xlu0 %5125
    %v5127 = vsel %vm2692, %v5055, 0.0
    %5128 = vadd.xlane.f32.xlu0 %v5127
    %v5129 = vpop.xlane.xlu0 %5128
    %v5130 = vsel %vm2692, %v5056, 0.0
    %5131 = vadd.xlane.f32.xlu0 %v5130
    %v5132 = vpop.xlane.xlu0 %5131
    %v5133 = vsel %vm2692, %v5057, 0.0
    %5134 = vadd.xlane.f32.xlu0 %v5133
    %v5135 = vpop.xlane.xlu0 %5134
    %v5136 = vsel %vm2692, %v5058, 0.0
    %5137 = vadd.xlane.f32.xlu0 %v5136
    %v5138 = vpop.xlane.xlu0 %5137
    %v5139 = vsel %vm2692, %v5059, 0.0
    %5140 = vadd.xlane.f32.xlu0 %v5139
    %v5141 = vpop.xlane.xlu0 %5140
    %v5142 = vsel %vm2692, %v5060, 0.0
    %5143 = vadd.xlane.f32.xlu0 %v5142
    %v5144 = vpop.xlane.xlu0 %5143
    %v5145 = vsel %vm2692, %v5061, 0.0
    %5146 = vadd.xlane.f32.xlu0 %v5145
    %v5147 = vpop.xlane.xlu0 %5146
    %v5148 = vsel %vm2692, %v5062, 0.0
    %5149 = vadd.xlane.f32.xlu0 %v5148
    %v5150 = vpop.xlane.xlu0 %5149
    %v5151 = vsel %vm2692, %v5063, 0.0
    %5152 = vadd.xlane.f32.xlu0 %v5151
    %v5153 = vpop.xlane.xlu0 %5152
    %v5154 = vsel %vm2692, %v5064, 0.0
    %5155 = vadd.xlane.f32.xlu0 %v5154
    %v5156 = vpop.xlane.xlu0 %5155
    %v5157 = vsel %vm2692, %v5065, 0.0
    %5158 = vadd.xlane.f32.xlu0 %v5157
    %v5159 = vpop.xlane.xlu0 %5158
    %v5160 = vsel %vm2692, %v5066, 0.0
    %5161 = vadd.xlane.f32.xlu0 %v5160
    %v5162 = vpop.xlane.xlu0 %5161
    %v5163 = vsel %vm2692, %v5067, 0.0
    %5164 = vadd.xlane.f32.xlu0 %v5163
    %v5165 = vpop.xlane.xlu0 %5164
    %v5166 = vsel %vm2692, %v5068, 0.0
    %5167 = vadd.xlane.f32.xlu0 %v5166
    %v5168 = vpop.xlane.xlu0 %5167
    %v5169 = vsel %vm2692, %v5069, 0.0
    %5170 = vadd.xlane.f32.xlu0 %v5169
    %v5171 = vpop.xlane.xlu0 %5170
    %v5172 = vsel %vm2692, %v5070, 0.0
    %5173 = vadd.xlane.f32.xlu0 %v5172
    %v5174 = vpop.xlane.xlu0 %5173
    %v5175 = vsel %vm2692, %v5071, 0.0
    %5176 = vadd.xlane.f32.xlu0 %v5175
    %v5177 = vpop.xlane.xlu0 %5176
    %v5178 = vsel %vm2692, %v5072, 0.0
    %5179 = vadd.xlane.f32.xlu0 %v5178
    %v5180 = vpop.xlane.xlu0 %5179
    %v5181 = vsel %vm2692, %v5073, 0.0
    %5182 = vadd.xlane.f32.xlu0 %v5181
    %v5183 = vpop.xlane.xlu0 %5182
    %v5184 = vsel %vm2692, %v5074, 0.0
    %5185 = vadd.xlane.f32.xlu0 %v5184
    %v5186 = vpop.xlane.xlu0 %5185
    %v5187 = vsel %vm2692, %v5075, 0.0
    %5188 = vadd.xlane.f32.xlu0 %v5187
    %v5189 = vpop.xlane.xlu0 %5188
    %v5190 = vsel %vm2692, %v5076, 0.0
    %5191 = vadd.xlane.f32.xlu0 %v5190
    %v5192 = vpop.xlane.xlu0 %5191
    %v5193 = vsel %vm2692, %v5077, 0.0
    %5194 = vadd.xlane.f32.xlu0 %v5193
    %v5195 = vpop.xlane.xlu0 %5194
    %v5196 = vsel %vm2692, %v5078, 0.0
    %5197 = vadd.xlane.f32.xlu0 %v5196
    %v5198 = vpop.xlane.xlu0 %5197
    %v5199 = vsel %vm2692, %v5079, 0.0
    %5200 = vadd.xlane.f32.xlu0 %v5199
    %v5201 = vpop.xlane.xlu0 %5200
    %v5202 = vsel %vm2692, %v5080, 0.0
    %5203 = vadd.xlane.f32.xlu0 %v5202
    %v5204 = vpop.xlane.xlu0 %5203
    %v5205 = vsel %vm2692, %v5081, 0.0
    %5206 = vadd.xlane.f32.xlu0 %v5205
    %v5207 = vpop.xlane.xlu0 %5206
    %v5208 = vsel %vm2692, %v5082, 0.0
    %5209 = vadd.xlane.f32.xlu0 %v5208
    %v5210 = vpop.xlane.xlu0 %5209
    %v5211 = vsel %vm2692, %v5083, 0.0
    %5212 = vadd.xlane.f32.xlu0 %v5211
    %v5213 = vpop.xlane.xlu0 %5212
    %v5214 = vsel %vm2692, %v5084, 0.0
    %5215 = vadd.xlane.f32.xlu0 %v5214
    %v5216 = vpop.xlane.xlu0 %5215
    %v5217 = vsel %vm2692, %v5085, 0.0
    %5218 = vadd.xlane.f32.xlu0 %v5217
    %v5219 = vpop.xlane.xlu0 %5218
    %v5220 = vsel %vm2692, %v5086, 0.0
    %5221 = vadd.xlane.f32.xlu0 %v5220
    %v5222 = vpop.xlane.xlu0 %5221
    %v5223 = vsel %vm2692, %v5087, 0.0
    %5224 = vadd.xlane.f32.xlu0 %v5223
    %v5225 = vpop.xlane.xlu0 %5224
    %v5226 = vsel %vm2692, %v5088, 0.0
    %5227 = vadd.xlane.f32.xlu0 %v5226
    %v5228 = vpop.xlane.xlu0 %5227
    %v5229 = vsel %vm2692, %v5089, 0.0
    %5230 = vadd.xlane.f32.xlu0 %v5229
    %v5231 = vpop.xlane.xlu0 %5230
    %v5232 = vsel %vm2692, %v5090, 0.0
    %5233 = vadd.xlane.f32.xlu0 %v5232
    %v5234 = vpop.xlane.xlu0 %5233
    %v5235 = vsel %vm2692, %v5091, 0.0
    %5236 = vadd.xlane.f32.xlu0 %v5235
    %v5237 = vpop.xlane.xlu0 %5236
    %v5238 = vsel %vm2692, %v5092, 0.0
    %5239 = vadd.xlane.f32.xlu0 %v5238
    %v5240 = vpop.xlane.xlu0 %5239
    %v5241 = vsel %vm2692, %v5093, 0.0
    %5242 = vadd.xlane.f32.xlu0 %v5241
    %v5243 = vpop.xlane.xlu0 %5242
    %v5244 = vsel %vm2692, %v5094, 0.0
    %5245 = vadd.xlane.f32.xlu0 %v5244
    %v5246 = vpop.xlane.xlu0 %5245
    %v5247 = vsel %vm2692, %v5095, 0.0
    %5248 = vadd.xlane.f32.xlu0 %v5247
    %v5249 = vpop.xlane.xlu0 %5248
    %v5250 = vsel %vm2692, %v5096, 0.0
    %5251 = vadd.xlane.f32.xlu0 %v5250
    %v5252 = vpop.xlane.xlu0 %5251
    %v5253 = vsel %vm2692, %v5097, 0.0
    %5254 = vadd.xlane.f32.xlu0 %v5253
    %v5255 = vpop.xlane.xlu0 %5254
    %v5256 = vsel %vm2692, %v5098, 0.0
    %5257 = vadd.xlane.f32.xlu0 %v5256
    %v5258 = vpop.xlane.xlu0 %5257
    %v5259 = vsel %vm2692, %v5099, 0.0
    %5260 = vadd.xlane.f32.xlu0 %v5259
    %v5261 = vpop.xlane.xlu0 %5260
    %v5262 = vsel %vm2692, %v5100, 0.0
    %5263 = vadd.xlane.f32.xlu0 %v5262
    %v5264 = vpop.xlane.xlu0 %5263
    %v5265 = vsel %vm2692, %v5101, 0.0
    %5266 = vadd.xlane.f32.xlu0 %v5265
    %v5267 = vpop.xlane.xlu0 %5266
    %v5268 = vsel %vm2692, %v5102, 0.0
    %5269 = vadd.xlane.f32.xlu0 %v5268
    %v5270 = vpop.xlane.xlu0 %5269
    %v5271 = vsel %vm2692, %v5103, 0.0
    %5272 = vadd.xlane.f32.xlu0 %v5271
    %v5273 = vpop.xlane.xlu0 %5272
    %v5274 = vsel %vm2692, %v5104, 0.0
    %5275 = vadd.xlane.f32.xlu0 %v5274
    %v5276 = vpop.xlane.xlu0 %5275
    %v5277 = vsel %vm2692, %v5105, 0.0
    %5278 = vadd.xlane.f32.xlu0 %v5277
    %v5279 = vpop.xlane.xlu0 %5278
    %v5280 = vsel %vm2692, %v5106, 0.0
    %5281 = vadd.xlane.f32.xlu0 %v5280
    %v5282 = vpop.xlane.xlu0 %5281
    %v5283 = vsel %vm2692, %v5107, 0.0
    %5284 = vadd.xlane.f32.xlu0 %v5283
    %v5285 = vpop.xlane.xlu0 %5284
    %v5286 = vsel %vm2692, %v5108, 0.0
    %5287 = vadd.xlane.f32.xlu0 %v5286
    %v5288 = vpop.xlane.xlu0 %5287
    %v5289 = vsel %vm2692, %v5109, 0.0
    %5290 = vadd.xlane.f32.xlu0 %v5289
    %v5291 = vpop.xlane.xlu0 %5290
    %v5292 = vsel %vm2692, %v5110, 0.0
    %5293 = vadd.xlane.f32.xlu0 %v5292
    %v5294 = vpop.xlane.xlu0 %5293
    %v5295 = vsel %vm2692, %v5111, 0.0
    %5296 = vadd.xlane.f32.xlu0 %v5295
    %v5297 = vpop.xlane.xlu0 %5296
    %v5298 = vsel %vm2692, %v5112, 0.0
    %5299 = vadd.xlane.f32.xlu0 %v5298
    %v5300 = vpop.xlane.xlu0 %5299
    %v5301 = vsel %vm2692, %v5113, 0.0
    %5302 = vadd.xlane.f32.xlu0 %v5301
    %v5303 = vpop.xlane.xlu0 %5302
    %v5304 = vsel %vm2692, %v5114, 0.0
    %5305 = vadd.xlane.f32.xlu0 %v5304
    %v5306 = vpop.xlane.xlu0 %5305
    %5307 = vst.msk [vmem:[%s5] sm:$0xff] %vm1562, %v5117
    %5308 = vst.msk [vmem:[%s5 + $0x8] sm:$0xff] %vm1562, %v5120
    %5309 = vst.msk [vmem:[%s5 + $0x10] sm:$0xff] %vm1562, %v5123
    %5310 = vst.msk [vmem:[%s5 + $0x18] sm:$0xff] %vm1562, %v5126
    %5311 = vst.msk [vmem:[%s5 + $0x20] sm:$0xff] %vm1562, %v5129
    %5312 = vst.msk [vmem:[%s5 + $0x28] sm:$0xff] %vm1562, %v5132
    %5313 = vst.msk [vmem:[%s5 + $0x30] sm:$0xff] %vm1562, %v5135
    %5314 = vst.msk [vmem:[%s5 + $0x38] sm:$0xff] %vm1562, %v5138
    %5315 = vst.msk [vmem:[%s5 + $0x40] sm:$0xff] %vm1562, %v5141
    %5316 = vst.msk [vmem:[%s5 + $0x48] sm:$0xff] %vm1562, %v5144
    %5317 = vst.msk [vmem:[%s5 + $0x50] sm:$0xff] %vm1562, %v5147
    %5318 = vst.msk [vmem:[%s5 + $0x58] sm:$0xff] %vm1562, %v5150
    %5319 = vst.msk [vmem:[%s5 + $0x60] sm:$0xff] %vm1562, %v5153
    %5320 = vst.msk [vmem:[%s5 + $0x68] sm:$0xff] %vm1562, %v5156
    %5321 = vst.msk [vmem:[%s5 + $0x70] sm:$0xff] %vm1562, %v5159
    %5322 = vst.msk [vmem:[%s5 + $0x78] sm:$0xff] %vm1562, %v5162
    %5323 = vst.msk [vmem:[%s5 + $0x80] sm:$0xff] %vm1562, %v5165
    %5324 = vst.msk [vmem:[%s5 + $0x88] sm:$0xff] %vm1562, %v5168
    %5325 = vst.msk [vmem:[%s5 + $0x90] sm:$0xff] %vm1562, %v5171
    %5326 = vst.msk [vmem:[%s5 + $0x98] sm:$0xff] %vm1562, %v5174
    %5327 = vst.msk [vmem:[%s5 + $0xa0] sm:$0xff] %vm1562, %v5177
    %5328 = vst.msk [vmem:[%s5 + $0xa8] sm:$0xff] %vm1562, %v5180
    %5329 = vst.msk [vmem:[%s5 + $0xb0] sm:$0xff] %vm1562, %v5183
    %5330 = vst.msk [vmem:[%s5 + $0xb8] sm:$0xff] %vm1562, %v5186
    %5331 = vst.msk [vmem:[%s5 + $0xc0] sm:$0xff] %vm1562, %v5189
    %5332 = vst.msk [vmem:[%s5 + $0xc8] sm:$0xff] %vm1562, %v5192
    %5333 = vst.msk [vmem:[%s5 + $0xd0] sm:$0xff] %vm1562, %v5195
    %5334 = vst.msk [vmem:[%s5 + $0xd8] sm:$0xff] %vm1562, %v5198
    %5335 = vst.msk [vmem:[%s5 + $0xe0] sm:$0xff] %vm1562, %v5201
    %5336 = vst.msk [vmem:[%s5 + $0xe8] sm:$0xff] %vm1562, %v5204
    %5337 = vst.msk [vmem:[%s5 + $0xf0] sm:$0xff] %vm1562, %v5207
    %5338 = vst.msk [vmem:[%s5 + $0xf8] sm:$0xff] %vm1562, %v5210
    %5339 = vst.msk [vmem:[%s5 + $0x100] sm:$0xff] %vm1562, %v5213
    %5340 = vst.msk [vmem:[%s5 + $0x108] sm:$0xff] %vm1562, %v5216
    %5341 = vst.msk [vmem:[%s5 + $0x110] sm:$0xff] %vm1562, %v5219
    %5342 = vst.msk [vmem:[%s5 + $0x118] sm:$0xff] %vm1562, %v5222
    %5343 = vst.msk [vmem:[%s5 + $0x120] sm:$0xff] %vm1562, %v5225
    %5344 = vst.msk [vmem:[%s5 + $0x128] sm:$0xff] %vm1562, %v5228
    %5345 = vst.msk [vmem:[%s5 + $0x130] sm:$0xff] %vm1562, %v5231
    %5346 = vst.msk [vmem:[%s5 + $0x138] sm:$0xff] %vm1562, %v5234
    %5347 = vst.msk [vmem:[%s5 + $0x140] sm:$0xff] %vm1562, %v5237
    %5348 = vst.msk [vmem:[%s5 + $0x148] sm:$0xff] %vm1562, %v5240
    %5349 = vst.msk [vmem:[%s5 + $0x150] sm:$0xff] %vm1562, %v5243
    %5350 = vst.msk [vmem:[%s5 + $0x158] sm:$0xff] %vm1562, %v5246
    %5351 = vst.msk [vmem:[%s5 + $0x160] sm:$0xff] %vm1562, %v5249
    %5352 = vst.msk [vmem:[%s5 + $0x168] sm:$0xff] %vm1562, %v5252
    %5353 = vst.msk [vmem:[%s5 + $0x170] sm:$0xff] %vm1562, %v5255
    %5354 = vst.msk [vmem:[%s5 + $0x178] sm:$0xff] %vm1562, %v5258
    %5355 = vst.msk [vmem:[%s5 + $0x180] sm:$0xff] %vm1562, %v5261
    %5356 = vst.msk [vmem:[%s5 + $0x188] sm:$0xff] %vm1562, %v5264
    %5357 = vst.msk [vmem:[%s5 + $0x190] sm:$0xff] %vm1562, %v5267
    %5358 = vst.msk [vmem:[%s5 + $0x198] sm:$0xff] %vm1562, %v5270
    %5359 = vst.msk [vmem:[%s5 + $0x1a0] sm:$0xff] %vm1562, %v5273
    %5360 = vst.msk [vmem:[%s5 + $0x1a8] sm:$0xff] %vm1562, %v5276
    %5361 = vst.msk [vmem:[%s5 + $0x1b0] sm:$0xff] %vm1562, %v5279
    %5362 = vst.msk [vmem:[%s5 + $0x1b8] sm:$0xff] %vm1562, %v5282
    %5363 = vst.msk [vmem:[%s5 + $0x1c0] sm:$0xff] %vm1562, %v5285
    %5364 = vst.msk [vmem:[%s5 + $0x1c8] sm:$0xff] %vm1562, %v5288
    %5365 = vst.msk [vmem:[%s5 + $0x1d0] sm:$0xff] %vm1562, %v5291
    %5366 = vst.msk [vmem:[%s5 + $0x1d8] sm:$0xff] %vm1562, %v5294
    %5367 = vst.msk [vmem:[%s5 + $0x1e0] sm:$0xff] %vm1562, %v5297
    %5368 = vst.msk [vmem:[%s5 + $0x1e8] sm:$0xff] %vm1562, %v5300
    %5369 = vst.msk [vmem:[%s5 + $0x1f0] sm:$0xff] %vm1562, %v5303
    %5370 = vst.msk [vmem:[%s5 + $0x1f8] sm:$0xff] %vm1562, %v5306
  $region25: #{adaptor_forward.2} parent=0 // pred_fallthru
    _
  // Predicated region
  $region26: #{adaptor_forward.2} parent=0 // pred_check
    _
  $region27: #{adaptor_forward.2} parent=0 // pred_check_branch
    %5372 = sbr.rel (0) target = $region29
  $region28: #{adaptor_forward.2} parent=0 // pred_region
    _
  $region29: #{adaptor_forward.2} parent=0 // pred_fallthru
    _
  // Predicated region
  $region30: #{adaptor_forward.2} parent=0 // pred_check
    _
  $region31: #{adaptor_forward.2} parent=0 // pred_check_branch
    %5374 = sbr.rel (0) target = $region33
  $region32: #{adaptor_forward.2} parent=0 // pred_region
    _
  $region33: #{adaptor_forward.2} parent=0 // pred_fallthru
    _
  // Predicated region
  $region34: #{adaptor_forward.2} parent=0 // pred_check
    _
  $region35: #{adaptor_forward.2} parent=0 // pred_check_branch
    %5376 = sbr.rel (0) target = $region37
  $region36: #{adaptor_forward.2} parent=0 // pred_region
    _
  $region37: #{adaptor_forward.2} parent=0 // pred_fallthru
    _
  // Predicated region
  $region38: #{adaptor_forward.2} parent=0 // pred_check
    _
  $region39: #{adaptor_forward.2} parent=0 // pred_check_branch
    %5378 = sbr.rel (0) target = $region41
  $region40: #{adaptor_forward.2} parent=0 // pred_region
    _
  $region41: #{adaptor_forward.2} parent=0 // pred_fallthru
    _

</llo_original>
